<compile_context>
chip_gen: v5e
topology: v5e:2x2
jax: 0.10.0
libtpu: 0.0.40
codegen_flags: <defaults>
</compile_context>

<pallas_src>
import functools

import jax
import jax.numpy as jnp
from jax.experimental import pallas as pl
from jax.experimental.pallas import tpu as pltpu

# ----------------------------- hyper-parameters ------------------------------
INPUT_SIZE = 16          # "freq" (80 in the original)
CHANNELS = 16            # 512 in the original; must be divisible by scale=8, s=2
EMBD_DIM = 8             # 192 in the original
ATTN_DIM = 128           # hard-coded bottleneck of AttentiveStatsPool
SCALE = 8
WIDTH = CHANNELS // SCALE
CAT_CH = CHANNELS * 3
BATCH = 2
TIME = 16
BN_EPS = 1e-5

BB = 1                   # batch block per grid step (grid is "parallel" -> v7x 2 TCs)
MM_DTYPE = jnp.bfloat16  # MXU input dtype (accumulation stays float32)


def _round_up(x, m):
    return -(-x // m) * m


# Common lane width of the two parameter slabs (toy sizes: everything <= 128).
W_LANES = _round_up(max(CHANNELS, WIDTH, CHANNELS // 2, CAT_CH, ATTN_DIM, EMBD_DIM), 128)
V_LANES = _round_up(max(CHANNELS, WIDTH, CHANNELS // 2, CAT_CH, ATTN_DIM,
                        2 * CAT_CH, EMBD_DIM), 128)


# --------------------------- parameter slab packing --------------------------
class _Slab:
    """Packs 2-D parameter blocks into one (rows, lanes) array.

    Each entry is row-aligned (16 rows for bf16, 8 for f32) and right-padded to
    the slab lane width; returns a static (row_offset, rows, cols) descriptor.
    """

    def __init__(self, lanes, dtype, row_align):
        self.lanes, self.dtype, self.row_align = lanes, dtype, row_align
        self.chunks, self.nrows = [], 0

    def add(self, a):
        a = jnp.asarray(a, self.dtype)
        r, c = a.shape
        rp = _round_up(r, self.row_align)
        buf = jnp.zeros((rp, self.lanes), self.dtype).at[:r, :c].set(a)
        ent = (self.nrows, r, c)
        self.chunks.append(buf)
        self.nrows += rp
        return ent

    def build(self):
        return jnp.concatenate(self.chunks, axis=0)


def _bn_rows(key, c):
    # Inference-mode BN folded into (2, C): row0 = scale, row1 = shift.
    k1, k2, k3, k4 = jax.random.split(key, 4)
    gamma = 1.0 + 0.1 * jax.random.normal(k1, (c,), jnp.float32)
    beta = 0.1 * jax.random.normal(k2, (c,), jnp.float32)
    mean = 0.1 * jax.random.normal(k3, (c,), jnp.float32)
    var = 0.5 + jax.random.uniform(k4, (c,), jnp.float32)
    scale = gamma / jnp.sqrt(var + BN_EPS)
    shift = beta - mean * scale
    return jnp.stack([scale, shift], axis=0)


def make_params(key):
    keys = iter(jax.random.split(key, 200))
    nk = lambda: next(keys)

    ws = _Slab(W_LANES, MM_DTYPE, row_align=16)    # bf16 weight slab
    vs = _Slab(V_LANES, jnp.float32, row_align=8)  # f32 BN/bias slab

    def add_conv(cin, cout, k):
        # Pre-reshaped to final 2-D (K*Cin, Cout) form on the host.
        w = jax.random.normal(nk(), (k * cin, cout), jnp.float32) * (1.0 / (cin * k) ** 0.5)
        return ws.add(w)

    def add_bn(c):
        return vs.add(_bn_rows(nk(), c))

    def add_bias(c):
        return vs.add(0.1 * jax.random.normal(nk(), (1, c), jnp.float32))

    meta = {}
    # layer1: Conv1dReluBn(input_size, channels, kernel_size=5, padding=2), bias=False
    meta["layer1"] = {"w": add_conv(INPUT_SIZE, CHANNELS, 5), "bn": add_bn(CHANNELS)}
    # layer2/3/4: SE_Res2Block(channels, k=3, stride=1, padding=d, dilation=d, scale=8)
    for name in ("layer2", "layer3", "layer4"):
        bm = {}
        bm["c1_w"] = add_conv(CHANNELS, CHANNELS, 1)
        bm["c1_bn"] = add_bn(CHANNELS)
        bm["res2_w"] = [add_conv(WIDTH, WIDTH, 3) for _ in range(SCALE - 1)]
        bm["res2_bn"] = [add_bn(WIDTH) for _ in range(SCALE - 1)]
        bm["c2_w"] = add_conv(CHANNELS, CHANNELS, 1)
        bm["c2_bn"] = add_bn(CHANNELS)
        bm["se_w1"] = add_conv(CHANNELS, CHANNELS // 2, 1)
        bm["se_b1"] = add_bias(CHANNELS // 2)
        bm["se_w2"] = add_conv(CHANNELS // 2, CHANNELS, 1)
        bm["se_b2"] = add_bias(CHANNELS)
        meta[name] = bm
    # final 1x1 conv over concatenated features (nn.Conv1d default has bias)
    meta["conv_w"] = add_conv(CAT_CH, CAT_CH, 1)
    meta["conv_b"] = add_bias(CAT_CH)
    # AttentiveStatsPool attention (Conv1d k=1 == Linear over channels)
    meta["asp_w1"] = add_conv(CAT_CH, ATTN_DIM, 1)
    meta["asp_b1"] = add_bias(ATTN_DIM)
    meta["asp_w2"] = add_conv(ATTN_DIM, CAT_CH, 1)
    meta["asp_b2"] = add_bias(CAT_CH)
    meta["bn1"] = add_bn(2 * CAT_CH)
    meta["lin_w"] = add_conv(2 * CAT_CH, EMBD_DIM, 1)
    meta["lin_b"] = add_bias(EMBD_DIM)
    meta["bn2"] = add_bn(EMBD_DIM)

    return ws.build(), vs.build(), meta


# --------------------- shared forward math (kernel & reference) --------------
def _make_getters(w_src, v_src):
    # Works identically on slab Refs (in-kernel) and slab arrays (reference):
    # static slices, loaded at the use site.
    def getw(ent):
        off, r, c = ent
        return w_src[off:off + r, 0:c]

    def getv(ent):
        off, r, c = ent
        return v_src[off:off + r, 0:c]

    return getw, getv


def _mm(a, w):
    # MXU matmul: bf16 inputs (weights already bf16), float32 accumulation.
    return jnp.dot(a.astype(MM_DTYPE), w, preferred_element_type=jnp.float32)


def _conv1d(x, w2d, k, pad, dil):
    # x: (BB, T, Cin); w2d: (K*Cin, Cout) bf16; stride 1, 'same' output length.
    bb, t, cin = x.shape
    cout = w2d.shape[1]
    if k == 1:
        return _mm(x.reshape(bb * t, cin), w2d).reshape(bb, t, cout)
    # Shifted-window taps: pad the time axis once (bf16), then K dots reading
    # K shifted windows of the SAME buffer, accumulated in f32.
    xb = x.astype(MM_DTYPE)
    z = jnp.zeros((bb, pad, cin), MM_DTYPE)
    xp = jnp.concatenate([z, xb, z], axis=1)                  # (BB, T+2p, Cin)
    acc = jnp.zeros((bb * t, cout), jnp.float32)
    for kk in range(k):
        win = xp[:, kk * dil:kk * dil + t, :].reshape(bb * t, cin)
        acc = acc + jnp.dot(win, w2d[kk * cin:(kk + 1) * cin, :],
                            preferred_element_type=jnp.float32)
    return acc.reshape(bb, t, cout)


def _conv_relu_bn(x, w, bn, k, pad, dil, out_bf16):
    # bn(relu(conv(x))) with inference-mode BN folded into (scale, shift).
    y = jnp.maximum(_conv1d(x, w, k, pad, dil), 0.0)
    y = y * bn[0:1] + bn[1:2]
    return y.astype(MM_DTYPE) if out_bf16 else y


def _res2(x, w_ents, bn_ents, getw, getv, buf, pad, dil):
    # Res2Conv1dReluBn: channel split into SCALE chunks; the branch chain is
    # inherently serial (sp carries).  Branch outputs are written in place into
    # the (BB, T, C) bf16 VMEM scratch at static lane offsets (no lane concat).
    chunks = []
    sp = None
    for i in range(SCALE - 1):
        xi = x[:, :, i * WIDTH:(i + 1) * WIDTH]
        sp = xi if i == 0 else sp + xi
        sp = _conv1d(sp, getw(w_ents[i]), 3, pad, dil)        # f32 accum
        bn = getv(bn_ents[i])
        sp = (jnp.maximum(sp, 0.0) * bn[0:1] + bn[1:2]).astype(MM_DTYPE)
        if buf is None:
            chunks.append(sp)
        else:
            buf[:, :, i * WIDTH:(i + 1) * WIDTH] = sp
    last = x[:, :, (SCALE - 1) * WIDTH:]
    if buf is None:                                           # pure-jnp reference
        chunks.append(last)
        return jnp.concatenate(chunks, axis=-1)
    buf[:, :, (SCALE - 1) * WIDTH:] = last
    return buf[...]


def _se(x, w1, b1, w2, b2):
    # SE_Connect: mean over time, two linears, sigmoid gate.
    m = jnp.mean(x.astype(jnp.float32), axis=1)               # (BB, C) f32
    h = jnp.maximum(_mm(m, w1) + b1, 0.0)
    g = jax.nn.sigmoid(_mm(h, w2) + b2)                       # (BB, C) f32
    return x * g[:, None, :]                                  # f32 residual tensor


def _asp(x, w1, b1, w2, b2, inv_fn):
    # AttentiveStatsPool: softmax over time per channel, weighted mean/std.
    bb, t, c3 = x.shape
    xf = x.reshape(bb * t, c3)
    a = jnp.tanh(_mm(xf, w1) + b1)
    logit = (_mm(a, w2) + b2).reshape(bb, t, c3)
    logit = logit - jnp.max(logit, axis=1, keepdims=True)
    e = jnp.exp(logit)
    alpha = e * inv_fn(jnp.sum(e, axis=1, keepdims=True))     # EUP reciprocal in-kernel
    mean = jnp.sum(alpha * x, axis=1)                         # (BB, 3C), f32 stats path
    var = jnp.sum(alpha * x * x, axis=1) - mean * mean
    std = jnp.sqrt(jnp.maximum(var, 1e-9))
    return jnp.concatenate([mean, std], axis=-1)              # (BB, 6C)


def _forward_tile(x, getw, getv, meta, res2_buf, inv_fn):
    # x: (BB, T, F) f32 -- already the transpose(2,1)'d layout of the PyTorch input.
    out1 = _conv_relu_bn(x, getw(meta["layer1"]["w"]), getv(meta["layer1"]["bn"]),
                         k=5, pad=2, dil=1, out_bf16=False)   # f32 residual

    def block(xin, bm, pad, dil):
        y = _conv_relu_bn(xin, getw(bm["c1_w"]), getv(bm["c1_bn"]), 1, 0, 1, True)
        y = _res2(y, bm["res2_w"], bm["res2_bn"], getw, getv, res2_buf, pad, dil)
        y = _conv_relu_bn(y, getw(bm["c2_w"]), getv(bm["c2_bn"]), 1, 0, 1, True)
        return _se(y, getw(bm["se_w1"]), getv(bm["se_b1"]),
                   getw(bm["se_w2"]), getv(bm["se_b2"]))

    out2 = block(out1, meta["layer2"], 2, 2) + out1
    x23 = out1 + out2
    out3 = block(x23, meta["layer3"], 3, 3) + x23
    x234 = x23 + out3
    out4 = block(x234, meta["layer4"], 4, 4) + x234

    cat = jnp.concatenate([out2, out3, out4], axis=-1)        # (BB, T, 3C) f32
    out = jnp.maximum(_conv1d(cat, getw(meta["conv_w"]), 1, 0, 1)
                      + getv(meta["conv_b"]), 0.0)
    pooled = _asp(out, getw(meta["asp_w1"]), getv(meta["asp_b1"]),
                  getw(meta["asp_w2"]), getv(meta["asp_b2"]), inv_fn)
    bn1 = getv(meta["bn1"])
    pooled = pooled * bn1[0:1] + bn1[1:2]
    emb = _mm(pooled, getw(meta["lin_w"])) + getv(meta["lin_b"])
    bn2 = getv(meta["bn2"])
    return emb * bn2[0:1] + bn2[1:2]                          # (BB, E)


# --------------------------------- Pallas kernel ------------------------------
def _ecapa_kernel(meta, x_ref, w_ref, v_ref, out_ref, res2_buf):
    getw, getv = _make_getters(w_ref, v_ref)                  # per-use slab loads
    emb = _forward_tile(x_ref[...], getw, getv, meta, res2_buf,
                        lambda s: pl.reciprocal(s, approx=True))
    out_ref[...] = emb.reshape(out_ref.shape).astype(out_ref.dtype)


def ecapa_tdnn_forward(x, packed):
    # x: (N, T, F) float32, same as the PyTorch input (N, time, freq).
    w_slab, v_slab, meta = packed
    n, t, f = x.shape
    assert n % BB == 0
    nb = n // BB
    kernel = functools.partial(_ecapa_kernel, meta)
    out = pl.pallas_call(
        kernel,
        # Output kept 3-D (nb, BB, E) so the block's last two dims equal the
        # array's last two dims; reshaped to (N, E) in the wrapper.
        out_shape=jax.ShapeDtypeStruct((nb, BB, EMBD_DIM), jnp.float32),
        grid_spec=pltpu.PrefetchScalarGridSpec(
            num_scalar_prefetch=0,
            grid=(nb,),
            in_specs=[
                pl.BlockSpec((BB, t, f), lambda b: (b, 0, 0)),
                # Constant index maps: slabs stay VMEM-resident across steps.
                pl.BlockSpec(w_slab.shape, lambda b: (0, 0)),
                pl.BlockSpec(v_slab.shape, lambda b: (0, 0)),
            ],
            out_specs=pl.BlockSpec((1, BB, EMBD_DIM), lambda b: (b, 0, 0)),
            scratch_shapes=[pltpu.VMEM((BB, t, CHANNELS), MM_DTYPE)],  # Res2 buffer
        ),
        compiler_params=pltpu.CompilerParams(
            dimension_semantics=("parallel",),      # v7x: shard samples over 2 TCs
            vmem_limit_bytes=48 * 1024 * 1024),     # raise at production sizes (v6e)
    )(x, w_slab, v_slab)
    return out.reshape(n, EMBD_DIM)


def ecapa_reference(x, packed):
    # Pure-JAX (XLA) reference: identical math/dtypes, whole batch at once,
    # exact reciprocal instead of the EUP approximation.
    w_slab, v_slab, meta = packed
    getw, getv = _make_getters(w_slab, v_slab)
    return _forward_tile(x, getw, getv, meta, None, lambda s: 1.0 / s)


# ------------------------------------ main ------------------------------------
if __name__ == "__main__":
    key = jax.random.PRNGKey(0)
    kx, kp = jax.random.split(key)
    x = jax.random.normal(kx, (BATCH, TIME, INPUT_SIZE), jnp.float32)
    packed = make_params(kp)

    out = jax.block_until_ready(ecapa_tdnn_forward(x, packed))
    ref = ecapa_reference(x, packed)

    assert out.shape == (BATCH, EMBD_DIM)
    assert bool(jnp.all(jnp.isfinite(out)))
    # Only expected kernel/reference delta: approx reciprocal in ASP softmax.
    assert bool(jnp.allclose(out, ref, atol=2e-2, rtol=2e-2))
    print("KERNEL_OK")
</pallas_src>

<mosaic_0001>
module attributes {stable_mosaic.version = 11 : i64} {
  func.func @_ecapa_kernel(%arg0: i32, %arg1: memref<1x16x16xf32, #tpu.memory_space<vmem>>, %arg2: memref<928x128xbf16, #tpu.memory_space<vmem>>, %arg3: memref<320x128xf32, #tpu.memory_space<vmem>>, %arg4: memref<1x1x8xf32, #tpu.memory_space<vmem>>, %arg5: memref<1x16x16xbf16, #tpu.memory_space<vmem>>) attributes {dimension_semantics = [#tpu.dimension_semantics<parallel>], iteration_bounds = array<i64: 2>, scalar_prefetch = 0 : i64, scratch_operands = 1 : i64, tpu.core_type = #tpu.core_type<tc>, window_params = [{transform_indices = @transform_0, window_bounds = array<i64: 1, 16, 16>}, {pipeline_mode = #tpu.pipeline_mode<synchronous>, transform_indices = @transform_1, window_bounds = array<i64: 928, 128>}, {pipeline_mode = #tpu.pipeline_mode<synchronous>, transform_indices = @transform_2, window_bounds = array<i64: 320, 128>}, {transform_indices = @transform_3, window_bounds = array<i64: 1, 1, 8>}]} {
    %c0 = arith.constant 0 : index
    %c0_0 = arith.constant 0 : index
    %c0_1 = arith.constant 0 : index
    %0 = vector.load %arg1[%c0, %c0_0, %c0_1] : memref<1x16x16xf32, #tpu.memory_space<vmem>>, vector<1x16x16xf32>
    %c0_2 = arith.constant 0 : index
    %c0_3 = arith.constant 0 : index
    %1 = vector.load %arg2[%c0_2, %c0_3] : memref<928x128xbf16, #tpu.memory_space<vmem>>, vector<80x16xbf16>
    %c0_4 = arith.constant 0 : index
    %c0_5 = arith.constant 0 : index
    %2 = vector.load %arg3[%c0_4, %c0_5] : memref<320x128xf32, #tpu.memory_space<vmem>>, vector<2x16xf32>
    %3 = arith.truncf %0 : vector<1x16x16xf32> to vector<1x16x16xbf16>
    %cst = arith.constant 0.000000e+00 : bf16
    %4 = vector.broadcast %cst : bf16 to vector<1x2x16xbf16>
    %5 = tpu.concatenate %4, %3, %4 in 1 : vector<1x2x16xbf16>, vector<1x16x16xbf16>, vector<1x2x16xbf16> -> vector<1x20x16xbf16>
    %cst_6 = arith.constant 0.000000e+00 : f32
    %6 = vector.broadcast %cst_6 : f32 to vector<16x16xf32>
    %7 = vector.extract_strided_slice %5 {offsets = [0, 0, 0], sizes = [1, 16, 16], strides = [1, 1, 1]} : vector<1x20x16xbf16> to vector<1x16x16xbf16>
    %8 = vector.shape_cast %7 : vector<1x16x16xbf16> to vector<16x16xbf16>
    %9 = vector.extract_strided_slice %1 {offsets = [0, 0], sizes = [16, 16], strides = [1, 1]} : vector<80x16xbf16> to vector<16x16xbf16>
    %cst_7 = arith.constant dense<0.000000e+00> : vector<16x16xf32>
    %10 = tpu.matmul %8, %9, %cst_7 {dimension_numbers = #tpu.dot_dimension_numbers<[1], [0], [0], [1], [0, 0, 1, 1], [], []>} : vector<16x16xbf16>, vector<16x16xbf16>, vector<16x16xf32> -> vector<16x16xf32>
    %11 = arith.addf %6, %10 : vector<16x16xf32>
    %12 = vector.extract_strided_slice %5 {offsets = [0, 1, 0], sizes = [1, 16, 16], strides = [1, 1, 1]} : vector<1x20x16xbf16> to vector<1x16x16xbf16>
    %13 = vector.shape_cast %12 : vector<1x16x16xbf16> to vector<16x16xbf16>
    %14 = vector.extract_strided_slice %1 {offsets = [16, 0], sizes = [16, 16], strides = [1, 1]} : vector<80x16xbf16> to vector<16x16xbf16>
    %cst_8 = arith.constant dense<0.000000e+00> : vector<16x16xf32>
    %15 = tpu.matmul %13, %14, %cst_8 {dimension_numbers = #tpu.dot_dimension_numbers<[1], [0], [0], [1], [0, 0, 1, 1], [], []>} : vector<16x16xbf16>, vector<16x16xbf16>, vector<16x16xf32> -> vector<16x16xf32>
    %16 = arith.addf %11, %15 : vector<16x16xf32>
    %17 = vector.extract_strided_slice %5 {offsets = [0, 2, 0], sizes = [1, 16, 16], strides = [1, 1, 1]} : vector<1x20x16xbf16> to vector<1x16x16xbf16>
    %18 = vector.shape_cast %17 : vector<1x16x16xbf16> to vector<16x16xbf16>
    %19 = vector.extract_strided_slice %1 {offsets = [32, 0], sizes = [16, 16], strides = [1, 1]} : vector<80x16xbf16> to vector<16x16xbf16>
    %cst_9 = arith.constant dense<0.000000e+00> : vector<16x16xf32>
    %20 = tpu.matmul %18, %19, %cst_9 {dimension_numbers = #tpu.dot_dimension_numbers<[1], [0], [0], [1], [0, 0, 1, 1], [], []>} : vector<16x16xbf16>, vector<16x16xbf16>, vector<16x16xf32> -> vector<16x16xf32>
    %21 = arith.addf %16, %20 : vector<16x16xf32>
    %22 = vector.extract_strided_slice %5 {offsets = [0, 3, 0], sizes = [1, 16, 16], strides = [1, 1, 1]} : vector<1x20x16xbf16> to vector<1x16x16xbf16>
    %23 = vector.shape_cast %22 : vector<1x16x16xbf16> to vector<16x16xbf16>
    %24 = vector.extract_strided_slice %1 {offsets = [48, 0], sizes = [16, 16], strides = [1, 1]} : vector<80x16xbf16> to vector<16x16xbf16>
    %cst_10 = arith.constant dense<0.000000e+00> : vector<16x16xf32>
    %25 = tpu.matmul %23, %24, %cst_10 {dimension_numbers = #tpu.dot_dimension_numbers<[1], [0], [0], [1], [0, 0, 1, 1], [], []>} : vector<16x16xbf16>, vector<16x16xbf16>, vector<16x16xf32> -> vector<16x16xf32>
    %26 = arith.addf %21, %25 : vector<16x16xf32>
    %27 = vector.extract_strided_slice %5 {offsets = [0, 4, 0], sizes = [1, 16, 16], strides = [1, 1, 1]} : vector<1x20x16xbf16> to vector<1x16x16xbf16>
    %28 = vector.shape_cast %27 : vector<1x16x16xbf16> to vector<16x16xbf16>
    %29 = vector.extract_strided_slice %1 {offsets = [64, 0], sizes = [16, 16], strides = [1, 1]} : vector<80x16xbf16> to vector<16x16xbf16>
    %cst_11 = arith.constant dense<0.000000e+00> : vector<16x16xf32>
    %30 = tpu.matmul %28, %29, %cst_11 {dimension_numbers = #tpu.dot_dimension_numbers<[1], [0], [0], [1], [0, 0, 1, 1], [], []>} : vector<16x16xbf16>, vector<16x16xbf16>, vector<16x16xf32> -> vector<16x16xf32>
    %31 = arith.addf %26, %30 : vector<16x16xf32>
    %32 = vector.shape_cast %31 : vector<16x16xf32> to vector<1x16x16xf32>
    %cst_12 = arith.constant 0.000000e+00 : f32
    %33 = vector.broadcast %cst_12 : f32 to vector<1x16x16xf32>
    %34 = arith.maximumf %32, %33 : vector<1x16x16xf32>
    %35 = vector.extract_strided_slice %2 {offsets = [0, 0], sizes = [1, 16], strides = [1, 1]} : vector<2x16xf32> to vector<1x16xf32>
    %36 = vector.shape_cast %35 : vector<1x16xf32> to vector<1x1x16xf32>
    %37 = vector.broadcast %36 : vector<1x1x16xf32> to vector<1x16x16xf32>
    %38 = arith.mulf %34, %37 : vector<1x16x16xf32>
    %39 = vector.extract_strided_slice %2 {offsets = [1, 0], sizes = [1, 16], strides = [1, 1]} : vector<2x16xf32> to vector<1x16xf32>
    %40 = vector.shape_cast %39 : vector<1x16xf32> to vector<1x1x16xf32>
    %41 = vector.broadcast %40 : vector<1x1x16xf32> to vector<1x16x16xf32>
    %42 = arith.addf %38, %41 : vector<1x16x16xf32>
    %c80 = arith.constant 80 : index
    %c0_13 = arith.constant 0 : index
    %43 = vector.load %arg2[%c80, %c0_13] : memref<928x128xbf16, #tpu.memory_space<vmem>>, vector<16x16xbf16>
    %c8 = arith.constant 8 : index
    %c0_14 = arith.constant 0 : index
    %44 = vector.load %arg3[%c8, %c0_14] : memref<320x128xf32, #tpu.memory_space<vmem>>, vector<2x16xf32>
    %45 = vector.shape_cast %42 : vector<1x16x16xf32> to vector<16x16xf32>
    %46 = arith.truncf %45 : vector<16x16xf32> to vector<16x16xbf16>
    %cst_15 = arith.constant dense<0.000000e+00> : vector<16x16xf32>
    %47 = tpu.matmul %46, %43, %cst_15 {dimension_numbers = #tpu.dot_dimension_numbers<[1], [0], [0], [1], [0, 0, 1, 1], [], []>} : vector<16x16xbf16>, vector<16x16xbf16>, vector<16x16xf32> -> vector<16x16xf32>
    %48 = vector.shape_cast %47 : vector<16x16xf32> to vector<1x16x16xf32>
    %cst_16 = arith.constant 0.000000e+00 : f32
    %49 = vector.broadcast %cst_16 : f32 to vector<1x16x16xf32>
    %50 = arith.maximumf %48, %49 : vector<1x16x16xf32>
    %51 = vector.extract_strided_slice %44 {offsets = [0, 0], sizes = [1, 16], strides = [1, 1]} : vector<2x16xf32> to vector<1x16xf32>
    %52 = vector.shape_cast %51 : vector<1x16xf32> to vector<1x1x16xf32>
    %53 = vector.broadcast %52 : vector<1x1x16xf32> to vector<1x16x16xf32>
    %54 = arith.mulf %50, %53 : vector<1x16x16xf32>
    %55 = vector.extract_strided_slice %44 {offsets = [1, 0], sizes = [1, 16], strides = [1, 1]} : vector<2x16xf32> to vector<1x16xf32>
    %56 = vector.shape_cast %55 : vector<1x16xf32> to vector<1x1x16xf32>
    %57 = vector.broadcast %56 : vector<1x1x16xf32> to vector<1x16x16xf32>
    %58 = arith.addf %54, %57 : vector<1x16x16xf32>
    %59 = arith.truncf %58 : vector<1x16x16xf32> to vector<1x16x16xbf16>
    %60 = vector.extract_strided_slice %59 {offsets = [0, 0, 0], sizes = [1, 16, 2], strides = [1, 1, 1]} : vector<1x16x16xbf16> to vector<1x16x2xbf16>
    %c96 = arith.constant 96 : index
    %c0_17 = arith.constant 0 : index
    %61 = vector.load %arg2[%c96, %c0_17] : memref<928x128xbf16, #tpu.memory_space<vmem>>, vector<6x2xbf16>
    %cst_18 = arith.constant 0.000000e+00 : bf16
    %62 = vector.broadcast %cst_18 : bf16 to vector<1x2x2xbf16>
    %63 = tpu.concatenate %62, %60, %62 in 1 : vector<1x2x2xbf16>, vector<1x16x2xbf16>, vector<1x2x2xbf16> -> vector<1x20x2xbf16>
    %cst_19 = arith.constant 0.000000e+00 : f32
    %64 = vector.broadcast %cst_19 : f32 to vector<16x2xf32>
    %65 = vector.extract_strided_slice %63 {offsets = [0, 0, 0], sizes = [1, 16, 2], strides = [1, 1, 1]} : vector<1x20x2xbf16> to vector<1x16x2xbf16>
    %66 = vector.shape_cast %65 : vector<1x16x2xbf16> to vector<16x2xbf16>
    %67 = vector.extract_strided_slice %61 {offsets = [0, 0], sizes = [2, 2], strides = [1, 1]} : vector<6x2xbf16> to vector<2x2xbf16>
    %cst_20 = arith.constant dense<0.000000e+00> : vector<16x2xf32>
    %68 = tpu.matmul %66, %67, %cst_20 {dimension_numbers = #tpu.dot_dimension_numbers<[1], [0], [0], [1], [0, 0, 1, 1], [], []>} : vector<16x2xbf16>, vector<2x2xbf16>, vector<16x2xf32> -> vector<16x2xf32>
    %69 = arith.addf %64, %68 : vector<16x2xf32>
    %70 = vector.extract_strided_slice %63 {offsets = [0, 2, 0], sizes = [1, 16, 2], strides = [1, 1, 1]} : vector<1x20x2xbf16> to vector<1x16x2xbf16>
    %71 = vector.shape_cast %70 : vector<1x16x2xbf16> to vector<16x2xbf16>
    %72 = vector.extract_strided_slice %61 {offsets = [2, 0], sizes = [2, 2], strides = [1, 1]} : vector<6x2xbf16> to vector<2x2xbf16>
    %cst_21 = arith.constant dense<0.000000e+00> : vector<16x2xf32>
    %73 = tpu.matmul %71, %72, %cst_21 {dimension_numbers = #tpu.dot_dimension_numbers<[1], [0], [0], [1], [0, 0, 1, 1], [], []>} : vector<16x2xbf16>, vector<2x2xbf16>, vector<16x2xf32> -> vector<16x2xf32>
    %74 = arith.addf %69, %73 : vector<16x2xf32>
    %75 = vector.extract_strided_slice %63 {offsets = [0, 4, 0], sizes = [1, 16, 2], strides = [1, 1, 1]} : vector<1x20x2xbf16> to vector<1x16x2xbf16>
    %76 = vector.shape_cast %75 : vector<1x16x2xbf16> to vector<16x2xbf16>
    %77 = vector.extract_strided_slice %61 {offsets = [4, 0], sizes = [2, 2], strides = [1, 1]} : vector<6x2xbf16> to vector<2x2xbf16>
    %cst_22 = arith.constant dense<0.000000e+00> : vector<16x2xf32>
    %78 = tpu.matmul %76, %77, %cst_22 {dimension_numbers = #tpu.dot_dimension_numbers<[1], [0], [0], [1], [0, 0, 1, 1], [], []>} : vector<16x2xbf16>, vector<2x2xbf16>, vector<16x2xf32> -> vector<16x2xf32>
    %79 = arith.addf %74, %78 : vector<16x2xf32>
    %80 = vector.shape_cast %79 : vector<16x2xf32> to vector<1x16x2xf32>
    %c16 = arith.constant 16 : index
    %c0_23 = arith.constant 0 : index
    %81 = vector.load %arg3[%c16, %c0_23] : memref<320x128xf32, #tpu.memory_space<vmem>>, vector<2x2xf32>
    %cst_24 = arith.constant 0.000000e+00 : f32
    %82 = vector.broadcast %cst_24 : f32 to vector<1x16x2xf32>
    %83 = arith.maximumf %80, %82 : vector<1x16x2xf32>
    %84 = vector.extract_strided_slice %81 {offsets = [0, 0], sizes = [1, 2], strides = [1, 1]} : vector<2x2xf32> to vector<1x2xf32>
    %85 = vector.shape_cast %84 : vector<1x2xf32> to vector<1x1x2xf32>
    %86 = vector.broadcast %85 : vector<1x1x2xf32> to vector<1x16x2xf32>
    %87 = arith.mulf %83, %86 : vector<1x16x2xf32>
    %88 = vector.extract_strided_slice %81 {offsets = [1, 0], sizes = [1, 2], strides = [1, 1]} : vector<2x2xf32> to vector<1x2xf32>
    %89 = vector.shape_cast %88 : vector<1x2xf32> to vector<1x1x2xf32>
    %90 = vector.broadcast %89 : vector<1x1x2xf32> to vector<1x16x2xf32>
    %91 = arith.addf %87, %90 : vector<1x16x2xf32>
    %92 = arith.truncf %91 : vector<1x16x2xf32> to vector<1x16x2xbf16>
    %c0_25 = arith.constant 0 : index
    %c0_26 = arith.constant 0 : index
    %c0_27 = arith.constant 0 : index
    %93 = vector.load %arg5[%c0_25, %c0_26, %c0_27] : memref<1x16x16xbf16, #tpu.memory_space<vmem>>, vector<1x16x2xbf16>
    tpu.vector_store %arg5[%c0_25, %c0_26, %c0_27], %92 {strides = array<i32>} : memref<1x16x16xbf16, #tpu.memory_space<vmem>>, vector<1x16x2xbf16>,
    %94 = vector.extract_strided_slice %59 {offsets = [0, 0, 2], sizes = [1, 16, 2], strides = [1, 1, 1]} : vector<1x16x16xbf16> to vector<1x16x2xbf16>
    %95 = arith.addf %92, %94 : vector<1x16x2xbf16>
    %c112 = arith.constant 112 : index
    %c0_28 = arith.constant 0 : index
    %96 = vector.load %arg2[%c112, %c0_28] : memref<928x128xbf16, #tpu.memory_space<vmem>>, vector<6x2xbf16>
    %cst_29 = arith.constant 0.000000e+00 : bf16
    %97 = vector.broadcast %cst_29 : bf16 to vector<1x2x2xbf16>
    %98 = tpu.concatenate %97, %95, %97 in 1 : vector<1x2x2xbf16>, vector<1x16x2xbf16>, vector<1x2x2xbf16> -> vector<1x20x2xbf16>
    %cst_30 = arith.constant 0.000000e+00 : f32
    %99 = vector.broadcast %cst_30 : f32 to vector<16x2xf32>
    %100 = vector.extract_strided_slice %98 {offsets = [0, 0, 0], sizes = [1, 16, 2], strides = [1, 1, 1]} : vector<1x20x2xbf16> to vector<1x16x2xbf16>
    %101 = vector.shape_cast %100 : vector<1x16x2xbf16> to vector<16x2xbf16>
    %102 = vector.extract_strided_slice %96 {offsets = [0, 0], sizes = [2, 2], strides = [1, 1]} : vector<6x2xbf16> to vector<2x2xbf16>
    %cst_31 = arith.constant dense<0.000000e+00> : vector<16x2xf32>
    %103 = tpu.matmul %101, %102, %cst_31 {dimension_numbers = #tpu.dot_dimension_numbers<[1], [0], [0], [1], [0, 0, 1, 1], [], []>} : vector<16x2xbf16>, vector<2x2xbf16>, vector<16x2xf32> -> vector<16x2xf32>
    %104 = arith.addf %99, %103 : vector<16x2xf32>
    %105 = vector.extract_strided_slice %98 {offsets = [0, 2, 0], sizes = [1, 16, 2], strides = [1, 1, 1]} : vector<1x20x2xbf16> to vector<1x16x2xbf16>
    %106 = vector.shape_cast %105 : vector<1x16x2xbf16> to vector<16x2xbf16>
    %107 = vector.extract_strided_slice %96 {offsets = [2, 0], sizes = [2, 2], strides = [1, 1]} : vector<6x2xbf16> to vector<2x2xbf16>
    %cst_32 = arith.constant dense<0.000000e+00> : vector<16x2xf32>
    %108 = tpu.matmul %106, %107, %cst_32 {dimension_numbers = #tpu.dot_dimension_numbers<[1], [0], [0], [1], [0, 0, 1, 1], [], []>} : vector<16x2xbf16>, vector<2x2xbf16>, vector<16x2xf32> -> vector<16x2xf32>
    %109 = arith.addf %104, %108 : vector<16x2xf32>
    %110 = vector.extract_strided_slice %98 {offsets = [0, 4, 0], sizes = [1, 16, 2], strides = [1, 1, 1]} : vector<1x20x2xbf16> to vector<1x16x2xbf16>
    %111 = vector.shape_cast %110 : vector<1x16x2xbf16> to vector<16x2xbf16>
    %112 = vector.extract_strided_slice %96 {offsets = [4, 0], sizes = [2, 2], strides = [1, 1]} : vector<6x2xbf16> to vector<2x2xbf16>
    %cst_33 = arith.constant dense<0.000000e+00> : vector<16x2xf32>
    %113 = tpu.matmul %111, %112, %cst_33 {dimension_numbers = #tpu.dot_dimension_numbers<[1], [0], [0], [1], [0, 0, 1, 1], [], []>} : vector<16x2xbf16>, vector<2x2xbf16>, vector<16x2xf32> -> vector<16x2xf32>
    %114 = arith.addf %109, %113 : vector<16x2xf32>
    %115 = vector.shape_cast %114 : vector<16x2xf32> to vector<1x16x2xf32>
    %c24 = arith.constant 24 : index
    %c0_34 = arith.constant 0 : index
    %116 = vector.load %arg3[%c24, %c0_34] : memref<320x128xf32, #tpu.memory_space<vmem>>, vector<2x2xf32>
    %cst_35 = arith.constant 0.000000e+00 : f32
    %117 = vector.broadcast %cst_35 : f32 to vector<1x16x2xf32>
    %118 = arith.maximumf %115, %117 : vector<1x16x2xf32>
    %119 = vector.extract_strided_slice %116 {offsets = [0, 0], sizes = [1, 2], strides = [1, 1]} : vector<2x2xf32> to vector<1x2xf32>
    %120 = vector.shape_cast %119 : vector<1x2xf32> to vector<1x1x2xf32>
    %121 = vector.broadcast %120 : vector<1x1x2xf32> to vector<1x16x2xf32>
    %122 = arith.mulf %118, %121 : vector<1x16x2xf32>
    %123 = vector.extract_strided_slice %116 {offsets = [1, 0], sizes = [1, 2], strides = [1, 1]} : vector<2x2xf32> to vector<1x2xf32>
    %124 = vector.shape_cast %123 : vector<1x2xf32> to vector<1x1x2xf32>
    %125 = vector.broadcast %124 : vector<1x1x2xf32> to vector<1x16x2xf32>
    %126 = arith.addf %122, %125 : vector<1x16x2xf32>
    %127 = arith.truncf %126 : vector<1x16x2xf32> to vector<1x16x2xbf16>
    %c0_36 = arith.constant 0 : index
    %c0_37 = arith.constant 0 : index
    %c2 = arith.constant 2 : index
    %128 = vector.load %arg5[%c0_36, %c0_37, %c2] : memref<1x16x16xbf16, #tpu.memory_space<vmem>>, vector<1x16x2xbf16>
    tpu.vector_store %arg5[%c0_36, %c0_37, %c2], %127 {strides = array<i32>} : memref<1x16x16xbf16, #tpu.memory_space<vmem>>, vector<1x16x2xbf16>,
    %129 = vector.extract_strided_slice %59 {offsets = [0, 0, 4], sizes = [1, 16, 2], strides = [1, 1, 1]} : vector<1x16x16xbf16> to vector<1x16x2xbf16>
    %130 = arith.addf %127, %129 : vector<1x16x2xbf16>
    %c128 = arith.constant 128 : index
    %c0_38 = arith.constant 0 : index
    %131 = vector.load %arg2[%c128, %c0_38] : memref<928x128xbf16, #tpu.memory_space<vmem>>, vector<6x2xbf16>
    %cst_39 = arith.constant 0.000000e+00 : bf16
    %132 = vector.broadcast %cst_39 : bf16 to vector<1x2x2xbf16>
    %133 = tpu.concatenate %132, %130, %132 in 1 : vector<1x2x2xbf16>, vector<1x16x2xbf16>, vector<1x2x2xbf16> -> vector<1x20x2xbf16>
    %cst_40 = arith.constant 0.000000e+00 : f32
    %134 = vector.broadcast %cst_40 : f32 to vector<16x2xf32>
    %135 = vector.extract_strided_slice %133 {offsets = [0, 0, 0], sizes = [1, 16, 2], strides = [1, 1, 1]} : vector<1x20x2xbf16> to vector<1x16x2xbf16>
    %136 = vector.shape_cast %135 : vector<1x16x2xbf16> to vector<16x2xbf16>
    %137 = vector.extract_strided_slice %131 {offsets = [0, 0], sizes = [2, 2], strides = [1, 1]} : vector<6x2xbf16> to vector<2x2xbf16>
    %cst_41 = arith.constant dense<0.000000e+00> : vector<16x2xf32>
    %138 = tpu.matmul %136, %137, %cst_41 {dimension_numbers = #tpu.dot_dimension_numbers<[1], [0], [0], [1], [0, 0, 1, 1], [], []>} : vector<16x2xbf16>, vector<2x2xbf16>, vector<16x2xf32> -> vector<16x2xf32>
    %139 = arith.addf %134, %138 : vector<16x2xf32>
    %140 = vector.extract_strided_slice %133 {offsets = [0, 2, 0], sizes = [1, 16, 2], strides = [1, 1, 1]} : vector<1x20x2xbf16> to vector<1x16x2xbf16>
    %141 = vector.shape_cast %140 : vector<1x16x2xbf16> to vector<16x2xbf16>
    %142 = vector.extract_strided_slice %131 {offsets = [2, 0], sizes = [2, 2], strides = [1, 1]} : vector<6x2xbf16> to vector<2x2xbf16>
    %cst_42 = arith.constant dense<0.000000e+00> : vector<16x2xf32>
    %143 = tpu.matmul %141, %142, %cst_42 {dimension_numbers = #tpu.dot_dimension_numbers<[1], [0], [0], [1], [0, 0, 1, 1], [], []>} : vector<16x2xbf16>, vector<2x2xbf16>, vector<16x2xf32> -> vector<16x2xf32>
    %144 = arith.addf %139, %143 : vector<16x2xf32>
    %145 = vector.extract_strided_slice %133 {offsets = [0, 4, 0], sizes = [1, 16, 2], strides = [1, 1, 1]} : vector<1x20x2xbf16> to vector<1x16x2xbf16>
    %146 = vector.shape_cast %145 : vector<1x16x2xbf16> to vector<16x2xbf16>
    %147 = vector.extract_strided_slice %131 {offsets = [4, 0], sizes = [2, 2], strides = [1, 1]} : vector<6x2xbf16> to vector<2x2xbf16>
    %cst_43 = arith.constant dense<0.000000e+00> : vector<16x2xf32>
    %148 = tpu.matmul %146, %147, %cst_43 {dimension_numbers = #tpu.dot_dimension_numbers<[1], [0], [0], [1], [0, 0, 1, 1], [], []>} : vector<16x2xbf16>, vector<2x2xbf16>, vector<16x2xf32> -> vector<16x2xf32>
    %149 = arith.addf %144, %148 : vector<16x2xf32>
    %150 = vector.shape_cast %149 : vector<16x2xf32> to vector<1x16x2xf32>
    %c32 = arith.constant 32 : index
    %c0_44 = arith.constant 0 : index
    %151 = vector.load %arg3[%c32, %c0_44] : memref<320x128xf32, #tpu.memory_space<vmem>>, vector<2x2xf32>
    %cst_45 = arith.constant 0.000000e+00 : f32
    %152 = vector.broadcast %cst_45 : f32 to vector<1x16x2xf32>
    %153 = arith.maximumf %150, %152 : vector<1x16x2xf32>
    %154 = vector.extract_strided_slice %151 {offsets = [0, 0], sizes = [1, 2], strides = [1, 1]} : vector<2x2xf32> to vector<1x2xf32>
    %155 = vector.shape_cast %154 : vector<1x2xf32> to vector<1x1x2xf32>
    %156 = vector.broadcast %155 : vector<1x1x2xf32> to vector<1x16x2xf32>
    %157 = arith.mulf %153, %156 : vector<1x16x2xf32>
    %158 = vector.extract_strided_slice %151 {offsets = [1, 0], sizes = [1, 2], strides = [1, 1]} : vector<2x2xf32> to vector<1x2xf32>
    %159 = vector.shape_cast %158 : vector<1x2xf32> to vector<1x1x2xf32>
    %160 = vector.broadcast %159 : vector<1x1x2xf32> to vector<1x16x2xf32>
    %161 = arith.addf %157, %160 : vector<1x16x2xf32>
    %162 = arith.truncf %161 : vector<1x16x2xf32> to vector<1x16x2xbf16>
    %c0_46 = arith.constant 0 : index
    %c0_47 = arith.constant 0 : index
    %c4 = arith.constant 4 : index
    %163 = vector.load %arg5[%c0_46, %c0_47, %c4] : memref<1x16x16xbf16, #tpu.memory_space<vmem>>, vector<1x16x2xbf16>
    tpu.vector_store %arg5[%c0_46, %c0_47, %c4], %162 {strides = array<i32>} : memref<1x16x16xbf16, #tpu.memory_space<vmem>>, vector<1x16x2xbf16>,
    %164 = vector.extract_strided_slice %59 {offsets = [0, 0, 6], sizes = [1, 16, 2], strides = [1, 1, 1]} : vector<1x16x16xbf16> to vector<1x16x2xbf16>
    %165 = arith.addf %162, %164 : vector<1x16x2xbf16>
    %c144 = arith.constant 144 : index
    %c0_48 = arith.constant 0 : index
    %166 = vector.load %arg2[%c144, %c0_48] : memref<928x128xbf16, #tpu.memory_space<vmem>>, vector<6x2xbf16>
    %cst_49 = arith.constant 0.000000e+00 : bf16
    %167 = vector.broadcast %cst_49 : bf16 to vector<1x2x2xbf16>
    %168 = tpu.concatenate %167, %165, %167 in 1 : vector<1x2x2xbf16>, vector<1x16x2xbf16>, vector<1x2x2xbf16> -> vector<1x20x2xbf16>
    %cst_50 = arith.constant 0.000000e+00 : f32
    %169 = vector.broadcast %cst_50 : f32 to vector<16x2xf32>
    %170 = vector.extract_strided_slice %168 {offsets = [0, 0, 0], sizes = [1, 16, 2], strides = [1, 1, 1]} : vector<1x20x2xbf16> to vector<1x16x2xbf16>
    %171 = vector.shape_cast %170 : vector<1x16x2xbf16> to vector<16x2xbf16>
    %172 = vector.extract_strided_slice %166 {offsets = [0, 0], sizes = [2, 2], strides = [1, 1]} : vector<6x2xbf16> to vector<2x2xbf16>
    %cst_51 = arith.constant dense<0.000000e+00> : vector<16x2xf32>
    %173 = tpu.matmul %171, %172, %cst_51 {dimension_numbers = #tpu.dot_dimension_numbers<[1], [0], [0], [1], [0, 0, 1, 1], [], []>} : vector<16x2xbf16>, vector<2x2xbf16>, vector<16x2xf32> -> vector<16x2xf32>
    %174 = arith.addf %169, %173 : vector<16x2xf32>
    %175 = vector.extract_strided_slice %168 {offsets = [0, 2, 0], sizes = [1, 16, 2], strides = [1, 1, 1]} : vector<1x20x2xbf16> to vector<1x16x2xbf16>
    %176 = vector.shape_cast %175 : vector<1x16x2xbf16> to vector<16x2xbf16>
    %177 = vector.extract_strided_slice %166 {offsets = [2, 0], sizes = [2, 2], strides = [1, 1]} : vector<6x2xbf16> to vector<2x2xbf16>
    %cst_52 = arith.constant dense<0.000000e+00> : vector<16x2xf32>
    %178 = tpu.matmul %176, %177, %cst_52 {dimension_numbers = #tpu.dot_dimension_numbers<[1], [0], [0], [1], [0, 0, 1, 1], [], []>} : vector<16x2xbf16>, vector<2x2xbf16>, vector<16x2xf32> -> vector<16x2xf32>
    %179 = arith.addf %174, %178 : vector<16x2xf32>
    %180 = vector.extract_strided_slice %168 {offsets = [0, 4, 0], sizes = [1, 16, 2], strides = [1, 1, 1]} : vector<1x20x2xbf16> to vector<1x16x2xbf16>
    %181 = vector.shape_cast %180 : vector<1x16x2xbf16> to vector<16x2xbf16>
    %182 = vector.extract_strided_slice %166 {offsets = [4, 0], sizes = [2, 2], strides = [1, 1]} : vector<6x2xbf16> to vector<2x2xbf16>
    %cst_53 = arith.constant dense<0.000000e+00> : vector<16x2xf32>
    %183 = tpu.matmul %181, %182, %cst_53 {dimension_numbers = #tpu.dot_dimension_numbers<[1], [0], [0], [1], [0, 0, 1, 1], [], []>} : vector<16x2xbf16>, vector<2x2xbf16>, vector<16x2xf32> -> vector<16x2xf32>
    %184 = arith.addf %179, %183 : vector<16x2xf32>
    %185 = vector.shape_cast %184 : vector<16x2xf32> to vector<1x16x2xf32>
    %c40 = arith.constant 40 : index
    %c0_54 = arith.constant 0 : index
    %186 = vector.load %arg3[%c40, %c0_54] : memref<320x128xf32, #tpu.memory_space<vmem>>, vector<2x2xf32>
    %cst_55 = arith.constant 0.000000e+00 : f32
    %187 = vector.broadcast %cst_55 : f32 to vector<1x16x2xf32>
    %188 = arith.maximumf %185, %187 : vector<1x16x2xf32>
    %189 = vector.extract_strided_slice %186 {offsets = [0, 0], sizes = [1, 2], strides = [1, 1]} : vector<2x2xf32> to vector<1x2xf32>
    %190 = vector.shape_cast %189 : vector<1x2xf32> to vector<1x1x2xf32>
    %191 = vector.broadcast %190 : vector<1x1x2xf32> to vector<1x16x2xf32>
    %192 = arith.mulf %188, %191 : vector<1x16x2xf32>
    %193 = vector.extract_strided_slice %186 {offsets = [1, 0], sizes = [1, 2], strides = [1, 1]} : vector<2x2xf32> to vector<1x2xf32>
    %194 = vector.shape_cast %193 : vector<1x2xf32> to vector<1x1x2xf32>
    %195 = vector.broadcast %194 : vector<1x1x2xf32> to vector<1x16x2xf32>
    %196 = arith.addf %192, %195 : vector<1x16x2xf32>
    %197 = arith.truncf %196 : vector<1x16x2xf32> to vector<1x16x2xbf16>
    %c0_56 = arith.constant 0 : index
    %c0_57 = arith.constant 0 : index
    %c6 = arith.constant 6 : index
    %198 = vector.load %arg5[%c0_56, %c0_57, %c6] : memref<1x16x16xbf16, #tpu.memory_space<vmem>>, vector<1x16x2xbf16>
    tpu.vector_store %arg5[%c0_56, %c0_57, %c6], %197 {strides = array<i32>} : memref<1x16x16xbf16, #tpu.memory_space<vmem>>, vector<1x16x2xbf16>,
    %199 = vector.extract_strided_slice %59 {offsets = [0, 0, 8], sizes = [1, 16, 2], strides = [1, 1, 1]} : vector<1x16x16xbf16> to vector<1x16x2xbf16>
    %200 = arith.addf %197, %199 : vector<1x16x2xbf16>
    %c160 = arith.constant 160 : index
    %c0_58 = arith.constant 0 : index
    %201 = vector.load %arg2[%c160, %c0_58] : memref<928x128xbf16, #tpu.memory_space<vmem>>, vector<6x2xbf16>
    %cst_59 = arith.constant 0.000000e+00 : bf16
    %202 = vector.broadcast %cst_59 : bf16 to vector<1x2x2xbf16>
    %203 = tpu.concatenate %202, %200, %202 in 1 : vector<1x2x2xbf16>, vector<1x16x2xbf16>, vector<1x2x2xbf16> -> vector<1x20x2xbf16>
    %cst_60 = arith.constant 0.000000e+00 : f32
    %204 = vector.broadcast %cst_60 : f32 to vector<16x2xf32>
    %205 = vector.extract_strided_slice %203 {offsets = [0, 0, 0], sizes = [1, 16, 2], strides = [1, 1, 1]} : vector<1x20x2xbf16> to vector<1x16x2xbf16>
    %206 = vector.shape_cast %205 : vector<1x16x2xbf16> to vector<16x2xbf16>
    %207 = vector.extract_strided_slice %201 {offsets = [0, 0], sizes = [2, 2], strides = [1, 1]} : vector<6x2xbf16> to vector<2x2xbf16>
    %cst_61 = arith.constant dense<0.000000e+00> : vector<16x2xf32>
    %208 = tpu.matmul %206, %207, %cst_61 {dimension_numbers = #tpu.dot_dimension_numbers<[1], [0], [0], [1], [0, 0, 1, 1], [], []>} : vector<16x2xbf16>, vector<2x2xbf16>, vector<16x2xf32> -> vector<16x2xf32>
    %209 = arith.addf %204, %208 : vector<16x2xf32>
    %210 = vector.extract_strided_slice %203 {offsets = [0, 2, 0], sizes = [1, 16, 2], strides = [1, 1, 1]} : vector<1x20x2xbf16> to vector<1x16x2xbf16>
    %211 = vector.shape_cast %210 : vector<1x16x2xbf16> to vector<16x2xbf16>
    %212 = vector.extract_strided_slice %201 {offsets = [2, 0], sizes = [2, 2], strides = [1, 1]} : vector<6x2xbf16> to vector<2x2xbf16>
    %cst_62 = arith.constant dense<0.000000e+00> : vector<16x2xf32>
    %213 = tpu.matmul %211, %212, %cst_62 {dimension_numbers = #tpu.dot_dimension_numbers<[1], [0], [0], [1], [0, 0, 1, 1], [], []>} : vector<16x2xbf16>, vector<2x2xbf16>, vector<16x2xf32> -> vector<16x2xf32>
    %214 = arith.addf %209, %213 : vector<16x2xf32>
    %215 = vector.extract_strided_slice %203 {offsets = [0, 4, 0], sizes = [1, 16, 2], strides = [1, 1, 1]} : vector<1x20x2xbf16> to vector<1x16x2xbf16>
    %216 = vector.shape_cast %215 : vector<1x16x2xbf16> to vector<16x2xbf16>
    %217 = vector.extract_strided_slice %201 {offsets = [4, 0], sizes = [2, 2], strides = [1, 1]} : vector<6x2xbf16> to vector<2x2xbf16>
    %cst_63 = arith.constant dense<0.000000e+00> : vector<16x2xf32>
    %218 = tpu.matmul %216, %217, %cst_63 {dimension_numbers = #tpu.dot_dimension_numbers<[1], [0], [0], [1], [0, 0, 1, 1], [], []>} : vector<16x2xbf16>, vector<2x2xbf16>, vector<16x2xf32> -> vector<16x2xf32>
    %219 = arith.addf %214, %218 : vector<16x2xf32>
    %220 = vector.shape_cast %219 : vector<16x2xf32> to vector<1x16x2xf32>
    %c48 = arith.constant 48 : index
    %c0_64 = arith.constant 0 : index
    %221 = vector.load %arg3[%c48, %c0_64] : memref<320x128xf32, #tpu.memory_space<vmem>>, vector<2x2xf32>
    %cst_65 = arith.constant 0.000000e+00 : f32
    %222 = vector.broadcast %cst_65 : f32 to vector<1x16x2xf32>
    %223 = arith.maximumf %220, %222 : vector<1x16x2xf32>
    %224 = vector.extract_strided_slice %221 {offsets = [0, 0], sizes = [1, 2], strides = [1, 1]} : vector<2x2xf32> to vector<1x2xf32>
    %225 = vector.shape_cast %224 : vector<1x2xf32> to vector<1x1x2xf32>
    %226 = vector.broadcast %225 : vector<1x1x2xf32> to vector<1x16x2xf32>
    %227 = arith.mulf %223, %226 : vector<1x16x2xf32>
    %228 = vector.extract_strided_slice %221 {offsets = [1, 0], sizes = [1, 2], strides = [1, 1]} : vector<2x2xf32> to vector<1x2xf32>
    %229 = vector.shape_cast %228 : vector<1x2xf32> to vector<1x1x2xf32>
    %230 = vector.broadcast %229 : vector<1x1x2xf32> to vector<1x16x2xf32>
    %231 = arith.addf %227, %230 : vector<1x16x2xf32>
    %232 = arith.truncf %231 : vector<1x16x2xf32> to vector<1x16x2xbf16>
    %c0_66 = arith.constant 0 : index
    %c0_67 = arith.constant 0 : index
    %c8_68 = arith.constant 8 : index
    %233 = vector.load %arg5[%c0_66, %c0_67, %c8_68] : memref<1x16x16xbf16, #tpu.memory_space<vmem>>, vector<1x16x2xbf16>
    tpu.vector_store %arg5[%c0_66, %c0_67, %c8_68], %232 {strides = array<i32>} : memref<1x16x16xbf16, #tpu.memory_space<vmem>>, vector<1x16x2xbf16>,
    %234 = vector.extract_strided_slice %59 {offsets = [0, 0, 10], sizes = [1, 16, 2], strides = [1, 1, 1]} : vector<1x16x16xbf16> to vector<1x16x2xbf16>
    %235 = arith.addf %232, %234 : vector<1x16x2xbf16>
    %c176 = arith.constant 176 : index
    %c0_69 = arith.constant 0 : index
    %236 = vector.load %arg2[%c176, %c0_69] : memref<928x128xbf16, #tpu.memory_space<vmem>>, vector<6x2xbf16>
    %cst_70 = arith.constant 0.000000e+00 : bf16
    %237 = vector.broadcast %cst_70 : bf16 to vector<1x2x2xbf16>
    %238 = tpu.concatenate %237, %235, %237 in 1 : vector<1x2x2xbf16>, vector<1x16x2xbf16>, vector<1x2x2xbf16> -> vector<1x20x2xbf16>
    %cst_71 = arith.constant 0.000000e+00 : f32
    %239 = vector.broadcast %cst_71 : f32 to vector<16x2xf32>
    %240 = vector.extract_strided_slice %238 {offsets = [0, 0, 0], sizes = [1, 16, 2], strides = [1, 1, 1]} : vector<1x20x2xbf16> to vector<1x16x2xbf16>
    %241 = vector.shape_cast %240 : vector<1x16x2xbf16> to vector<16x2xbf16>
    %242 = vector.extract_strided_slice %236 {offsets = [0, 0], sizes = [2, 2], strides = [1, 1]} : vector<6x2xbf16> to vector<2x2xbf16>
    %cst_72 = arith.constant dense<0.000000e+00> : vector<16x2xf32>
    %243 = tpu.matmul %241, %242, %cst_72 {dimension_numbers = #tpu.dot_dimension_numbers<[1], [0], [0], [1], [0, 0, 1, 1], [], []>} : vector<16x2xbf16>, vector<2x2xbf16>, vector<16x2xf32> -> vector<16x2xf32>
    %244 = arith.addf %239, %243 : vector<16x2xf32>
    %245 = vector.extract_strided_slice %238 {offsets = [0, 2, 0], sizes = [1, 16, 2], strides = [1, 1, 1]} : vector<1x20x2xbf16> to vector<1x16x2xbf16>
    %246 = vector.shape_cast %245 : vector<1x16x2xbf16> to vector<16x2xbf16>
    %247 = vector.extract_strided_slice %236 {offsets = [2, 0], sizes = [2, 2], strides = [1, 1]} : vector<6x2xbf16> to vector<2x2xbf16>
    %cst_73 = arith.constant dense<0.000000e+00> : vector<16x2xf32>
    %248 = tpu.matmul %246, %247, %cst_73 {dimension_numbers = #tpu.dot_dimension_numbers<[1], [0], [0], [1], [0, 0, 1, 1], [], []>} : vector<16x2xbf16>, vector<2x2xbf16>, vector<16x2xf32> -> vector<16x2xf32>
    %249 = arith.addf %244, %248 : vector<16x2xf32>
    %250 = vector.extract_strided_slice %238 {offsets = [0, 4, 0], sizes = [1, 16, 2], strides = [1, 1, 1]} : vector<1x20x2xbf16> to vector<1x16x2xbf16>
    %251 = vector.shape_cast %250 : vector<1x16x2xbf16> to vector<16x2xbf16>
    %252 = vector.extract_strided_slice %236 {offsets = [4, 0], sizes = [2, 2], strides = [1, 1]} : vector<6x2xbf16> to vector<2x2xbf16>
    %cst_74 = arith.constant dense<0.000000e+00> : vector<16x2xf32>
    %253 = tpu.matmul %251, %252, %cst_74 {dimension_numbers = #tpu.dot_dimension_numbers<[1], [0], [0], [1], [0, 0, 1, 1], [], []>} : vector<16x2xbf16>, vector<2x2xbf16>, vector<16x2xf32> -> vector<16x2xf32>
    %254 = arith.addf %249, %253 : vector<16x2xf32>
    %255 = vector.shape_cast %254 : vector<16x2xf32> to vector<1x16x2xf32>
    %c56 = arith.constant 56 : index
    %c0_75 = arith.constant 0 : index
    %256 = vector.load %arg3[%c56, %c0_75] : memref<320x128xf32, #tpu.memory_space<vmem>>, vector<2x2xf32>
    %cst_76 = arith.constant 0.000000e+00 : f32
    %257 = vector.broadcast %cst_76 : f32 to vector<1x16x2xf32>
    %258 = arith.maximumf %255, %257 : vector<1x16x2xf32>
    %259 = vector.extract_strided_slice %256 {offsets = [0, 0], sizes = [1, 2], strides = [1, 1]} : vector<2x2xf32> to vector<1x2xf32>
    %260 = vector.shape_cast %259 : vector<1x2xf32> to vector<1x1x2xf32>
    %261 = vector.broadcast %260 : vector<1x1x2xf32> to vector<1x16x2xf32>
    %262 = arith.mulf %258, %261 : vector<1x16x2xf32>
    %263 = vector.extract_strided_slice %256 {offsets = [1, 0], sizes = [1, 2], strides = [1, 1]} : vector<2x2xf32> to vector<1x2xf32>
    %264 = vector.shape_cast %263 : vector<1x2xf32> to vector<1x1x2xf32>
    %265 = vector.broadcast %264 : vector<1x1x2xf32> to vector<1x16x2xf32>
    %266 = arith.addf %262, %265 : vector<1x16x2xf32>
    %267 = arith.truncf %266 : vector<1x16x2xf32> to vector<1x16x2xbf16>
    %c0_77 = arith.constant 0 : index
    %c0_78 = arith.constant 0 : index
    %c10 = arith.constant 10 : index
    %268 = vector.load %arg5[%c0_77, %c0_78, %c10] : memref<1x16x16xbf16, #tpu.memory_space<vmem>>, vector<1x16x2xbf16>
    tpu.vector_store %arg5[%c0_77, %c0_78, %c10], %267 {strides = array<i32>} : memref<1x16x16xbf16, #tpu.memory_space<vmem>>, vector<1x16x2xbf16>,
    %269 = vector.extract_strided_slice %59 {offsets = [0, 0, 12], sizes = [1, 16, 2], strides = [1, 1, 1]} : vector<1x16x16xbf16> to vector<1x16x2xbf16>
    %270 = arith.addf %267, %269 : vector<1x16x2xbf16>
    %c192 = arith.constant 192 : index
    %c0_79 = arith.constant 0 : index
    %271 = vector.load %arg2[%c192, %c0_79] : memref<928x128xbf16, #tpu.memory_space<vmem>>, vector<6x2xbf16>
    %cst_80 = arith.constant 0.000000e+00 : bf16
    %272 = vector.broadcast %cst_80 : bf16 to vector<1x2x2xbf16>
    %273 = tpu.concatenate %272, %270, %272 in 1 : vector<1x2x2xbf16>, vector<1x16x2xbf16>, vector<1x2x2xbf16> -> vector<1x20x2xbf16>
    %cst_81 = arith.constant 0.000000e+00 : f32
    %274 = vector.broadcast %cst_81 : f32 to vector<16x2xf32>
    %275 = vector.extract_strided_slice %273 {offsets = [0, 0, 0], sizes = [1, 16, 2], strides = [1, 1, 1]} : vector<1x20x2xbf16> to vector<1x16x2xbf16>
    %276 = vector.shape_cast %275 : vector<1x16x2xbf16> to vector<16x2xbf16>
    %277 = vector.extract_strided_slice %271 {offsets = [0, 0], sizes = [2, 2], strides = [1, 1]} : vector<6x2xbf16> to vector<2x2xbf16>
    %cst_82 = arith.constant dense<0.000000e+00> : vector<16x2xf32>
    %278 = tpu.matmul %276, %277, %cst_82 {dimension_numbers = #tpu.dot_dimension_numbers<[1], [0], [0], [1], [0, 0, 1, 1], [], []>} : vector<16x2xbf16>, vector<2x2xbf16>, vector<16x2xf32> -> vector<16x2xf32>
    %279 = arith.addf %274, %278 : vector<16x2xf32>
    %280 = vector.extract_strided_slice %273 {offsets = [0, 2, 0], sizes = [1, 16, 2], strides = [1, 1, 1]} : vector<1x20x2xbf16> to vector<1x16x2xbf16>
    %281 = vector.shape_cast %280 : vector<1x16x2xbf16> to vector<16x2xbf16>
    %282 = vector.extract_strided_slice %271 {offsets = [2, 0], sizes = [2, 2], strides = [1, 1]} : vector<6x2xbf16> to vector<2x2xbf16>
    %cst_83 = arith.constant dense<0.000000e+00> : vector<16x2xf32>
    %283 = tpu.matmul %281, %282, %cst_83 {dimension_numbers = #tpu.dot_dimension_numbers<[1], [0], [0], [1], [0, 0, 1, 1], [], []>} : vector<16x2xbf16>, vector<2x2xbf16>, vector<16x2xf32> -> vector<16x2xf32>
    %284 = arith.addf %279, %283 : vector<16x2xf32>
    %285 = vector.extract_strided_slice %273 {offsets = [0, 4, 0], sizes = [1, 16, 2], strides = [1, 1, 1]} : vector<1x20x2xbf16> to vector<1x16x2xbf16>
    %286 = vector.shape_cast %285 : vector<1x16x2xbf16> to vector<16x2xbf16>
    %287 = vector.extract_strided_slice %271 {offsets = [4, 0], sizes = [2, 2], strides = [1, 1]} : vector<6x2xbf16> to vector<2x2xbf16>
    %cst_84 = arith.constant dense<0.000000e+00> : vector<16x2xf32>
    %288 = tpu.matmul %286, %287, %cst_84 {dimension_numbers = #tpu.dot_dimension_numbers<[1], [0], [0], [1], [0, 0, 1, 1], [], []>} : vector<16x2xbf16>, vector<2x2xbf16>, vector<16x2xf32> -> vector<16x2xf32>
    %289 = arith.addf %284, %288 : vector<16x2xf32>
    %290 = vector.shape_cast %289 : vector<16x2xf32> to vector<1x16x2xf32>
    %c64 = arith.constant 64 : index
    %c0_85 = arith.constant 0 : index
    %291 = vector.load %arg3[%c64, %c0_85] : memref<320x128xf32, #tpu.memory_space<vmem>>, vector<2x2xf32>
    %cst_86 = arith.constant 0.000000e+00 : f32
    %292 = vector.broadcast %cst_86 : f32 to vector<1x16x2xf32>
    %293 = arith.maximumf %290, %292 : vector<1x16x2xf32>
    %294 = vector.extract_strided_slice %291 {offsets = [0, 0], sizes = [1, 2], strides = [1, 1]} : vector<2x2xf32> to vector<1x2xf32>
    %295 = vector.shape_cast %294 : vector<1x2xf32> to vector<1x1x2xf32>
    %296 = vector.broadcast %295 : vector<1x1x2xf32> to vector<1x16x2xf32>
    %297 = arith.mulf %293, %296 : vector<1x16x2xf32>
    %298 = vector.extract_strided_slice %291 {offsets = [1, 0], sizes = [1, 2], strides = [1, 1]} : vector<2x2xf32> to vector<1x2xf32>
    %299 = vector.shape_cast %298 : vector<1x2xf32> to vector<1x1x2xf32>
    %300 = vector.broadcast %299 : vector<1x1x2xf32> to vector<1x16x2xf32>
    %301 = arith.addf %297, %300 : vector<1x16x2xf32>
    %302 = arith.truncf %301 : vector<1x16x2xf32> to vector<1x16x2xbf16>
    %c0_87 = arith.constant 0 : index
    %c0_88 = arith.constant 0 : index
    %c12 = arith.constant 12 : index
    %303 = vector.load %arg5[%c0_87, %c0_88, %c12] : memref<1x16x16xbf16, #tpu.memory_space<vmem>>, vector<1x16x2xbf16>
    tpu.vector_store %arg5[%c0_87, %c0_88, %c12], %302 {strides = array<i32>} : memref<1x16x16xbf16, #tpu.memory_space<vmem>>, vector<1x16x2xbf16>,
    %304 = vector.extract_strided_slice %59 {offsets = [0, 0, 14], sizes = [1, 16, 2], strides = [1, 1, 1]} : vector<1x16x16xbf16> to vector<1x16x2xbf16>
    %c0_89 = arith.constant 0 : index
    %c0_90 = arith.constant 0 : index
    %c14 = arith.constant 14 : index
    %305 = vector.load %arg5[%c0_89, %c0_90, %c14] : memref<1x16x16xbf16, #tpu.memory_space<vmem>>, vector<1x16x2xbf16>
    tpu.vector_store %arg5[%c0_89, %c0_90, %c14], %304 {strides = array<i32>} : memref<1x16x16xbf16, #tpu.memory_space<vmem>>, vector<1x16x2xbf16>,
    %c0_91 = arith.constant 0 : index
    %c0_92 = arith.constant 0 : index
    %c0_93 = arith.constant 0 : index
    %306 = vector.load %arg5[%c0_91, %c0_92, %c0_93] : memref<1x16x16xbf16, #tpu.memory_space<vmem>>, vector<1x16x16xbf16>
    %c208 = arith.constant 208 : index
    %c0_94 = arith.constant 0 : index
    %307 = vector.load %arg2[%c208, %c0_94] : memref<928x128xbf16, #tpu.memory_space<vmem>>, vector<16x16xbf16>
    %c72 = arith.constant 72 : index
    %c0_95 = arith.constant 0 : index
    %308 = vector.load %arg3[%c72, %c0_95] : memref<320x128xf32, #tpu.memory_space<vmem>>, vector<2x16xf32>
    %309 = vector.shape_cast %306 : vector<1x16x16xbf16> to vector<16x16xbf16>
    %cst_96 = arith.constant dense<0.000000e+00> : vector<16x16xf32>
    %310 = tpu.matmul %309, %307, %cst_96 {dimension_numbers = #tpu.dot_dimension_numbers<[1], [0], [0], [1], [0, 0, 1, 1], [], []>} : vector<16x16xbf16>, vector<16x16xbf16>, vector<16x16xf32> -> vector<16x16xf32>
    %311 = vector.shape_cast %310 : vector<16x16xf32> to vector<1x16x16xf32>
    %cst_97 = arith.constant 0.000000e+00 : f32
    %312 = vector.broadcast %cst_97 : f32 to vector<1x16x16xf32>
    %313 = arith.maximumf %311, %312 : vector<1x16x16xf32>
    %314 = vector.extract_strided_slice %308 {offsets = [0, 0], sizes = [1, 16], strides = [1, 1]} : vector<2x16xf32> to vector<1x16xf32>
    %315 = vector.shape_cast %314 : vector<1x16xf32> to vector<1x1x16xf32>
    %316 = vector.broadcast %315 : vector<1x1x16xf32> to vector<1x16x16xf32>
    %317 = arith.mulf %313, %316 : vector<1x16x16xf32>
    %318 = vector.extract_strided_slice %308 {offsets = [1, 0], sizes = [1, 16], strides = [1, 1]} : vector<2x16xf32> to vector<1x16xf32>
    %319 = vector.shape_cast %318 : vector<1x16xf32> to vector<1x1x16xf32>
    %320 = vector.broadcast %319 : vector<1x1x16xf32> to vector<1x16x16xf32>
    %321 = arith.addf %317, %320 : vector<1x16x16xf32>
    %322 = arith.truncf %321 : vector<1x16x16xf32> to vector<1x16x16xbf16>
    %c224 = arith.constant 224 : index
    %c0_98 = arith.constant 0 : index
    %323 = vector.load %arg2[%c224, %c0_98] : memref<928x128xbf16, #tpu.memory_space<vmem>>, vector<16x8xbf16>
    %c80_99 = arith.constant 80 : index
    %c0_100 = arith.constant 0 : index
    %324 = vector.load %arg3[%c80_99, %c0_100] : memref<320x128xf32, #tpu.memory_space<vmem>>, vector<1x8xf32>
    %c240 = arith.constant 240 : index
    %c0_101 = arith.constant 0 : index
    %325 = vector.load %arg2[%c240, %c0_101] : memref<928x128xbf16, #tpu.memory_space<vmem>>, vector<8x16xbf16>
    %c88 = arith.constant 88 : index
    %c0_102 = arith.constant 0 : index
    %326 = vector.load %arg3[%c88, %c0_102] : memref<320x128xf32, #tpu.memory_space<vmem>>, vector<1x16xf32>
    %327 = arith.extf %322 : vector<1x16x16xbf16> to vector<1x16x16xf32>
    %cst_103 = arith.constant dense<0.000000e+00> : vector<1x16xf32>
    %328 = vector.multi_reduction <add>, %327, %cst_103 [1] : vector<1x16x16xf32> to vector<1x16xf32>
    %cst_104 = arith.constant 1.600000e+01 : f32
    %329 = vector.broadcast %cst_104 : f32 to vector<1x16xf32>
    %330 = arith.divf %328, %329 : vector<1x16xf32>
    %331 = arith.truncf %330 : vector<1x16xf32> to vector<1x16xbf16>
    %cst_105 = arith.constant dense<0.000000e+00> : vector<1x8xf32>
    %332 = tpu.matmul %331, %323, %cst_105 {dimension_numbers = #tpu.dot_dimension_numbers<[1], [0], [0], [1], [0, 0, 1, 1], [], []>} : vector<1x16xbf16>, vector<16x8xbf16>, vector<1x8xf32> -> vector<1x8xf32>
    %333 = arith.addf %332, %324 : vector<1x8xf32>
    %cst_106 = arith.constant 0.000000e+00 : f32
    %334 = vector.broadcast %cst_106 : f32 to vector<1x8xf32>
    %335 = arith.maximumf %333, %334 : vector<1x8xf32>
    %336 = arith.truncf %335 : vector<1x8xf32> to vector<1x8xbf16>
    %cst_107 = arith.constant dense<0.000000e+00> : vector<1x16xf32>
    %337 = tpu.matmul %336, %325, %cst_107 {dimension_numbers = #tpu.dot_dimension_numbers<[1], [0], [0], [1], [0, 0, 1, 1], [], []>} : vector<1x8xbf16>, vector<8x16xbf16>, vector<1x16xf32> -> vector<1x16xf32>
    %338 = arith.addf %337, %326 : vector<1x16xf32>
    %339 = arith.negf %338 : vector<1x16xf32>
    %340 = math.exp %339 : vector<1x16xf32>
    %cst_108 = arith.constant 1.000000e+00 : f32
    %341 = vector.broadcast %cst_108 : f32 to vector<1x16xf32>
    %342 = arith.addf %341, %340 : vector<1x16xf32>
    %343 = arith.divf %341, %342 : vector<1x16xf32>
    %344 = vector.shape_cast %343 : vector<1x16xf32> to vector<1x1x16xf32>
    %345 = arith.extf %322 : vector<1x16x16xbf16> to vector<1x16x16xf32>
    %346 = vector.broadcast %344 : vector<1x1x16xf32> to vector<1x16x16xf32>
    %347 = arith.mulf %345, %346 : vector<1x16x16xf32>
    %348 = arith.addf %347, %42 : vector<1x16x16xf32>
    %349 = arith.addf %42, %348 : vector<1x16x16xf32>
    %c256 = arith.constant 256 : index
    %c0_109 = arith.constant 0 : index
    %350 = vector.load %arg2[%c256, %c0_109] : memref<928x128xbf16, #tpu.memory_space<vmem>>, vector<16x16xbf16>
    %c96_110 = arith.constant 96 : index
    %c0_111 = arith.constant 0 : index
    %351 = vector.load %arg3[%c96_110, %c0_111] : memref<320x128xf32, #tpu.memory_space<vmem>>, vector<2x16xf32>
    %352 = vector.shape_cast %349 : vector<1x16x16xf32> to vector<16x16xf32>
    %353 = arith.truncf %352 : vector<16x16xf32> to vector<16x16xbf16>
    %cst_112 = arith.constant dense<0.000000e+00> : vector<16x16xf32>
    %354 = tpu.matmul %353, %350, %cst_112 {dimension_numbers = #tpu.dot_dimension_numbers<[1], [0], [0], [1], [0, 0, 1, 1], [], []>} : vector<16x16xbf16>, vector<16x16xbf16>, vector<16x16xf32> -> vector<16x16xf32>
    %355 = vector.shape_cast %354 : vector<16x16xf32> to vector<1x16x16xf32>
    %cst_113 = arith.constant 0.000000e+00 : f32
    %356 = vector.broadcast %cst_113 : f32 to vector<1x16x16xf32>
    %357 = arith.maximumf %355, %356 : vector<1x16x16xf32>
    %358 = vector.extract_strided_slice %351 {offsets = [0, 0], sizes = [1, 16], strides = [1, 1]} : vector<2x16xf32> to vector<1x16xf32>
    %359 = vector.shape_cast %358 : vector<1x16xf32> to vector<1x1x16xf32>
    %360 = vector.broadcast %359 : vector<1x1x16xf32> to vector<1x16x16xf32>
    %361 = arith.mulf %357, %360 : vector<1x16x16xf32>
    %362 = vector.extract_strided_slice %351 {offsets = [1, 0], sizes = [1, 16], strides = [1, 1]} : vector<2x16xf32> to vector<1x16xf32>
    %363 = vector.shape_cast %362 : vector<1x16xf32> to vector<1x1x16xf32>
    %364 = vector.broadcast %363 : vector<1x1x16xf32> to vector<1x16x16xf32>
    %365 = arith.addf %361, %364 : vector<1x16x16xf32>
    %366 = arith.truncf %365 : vector<1x16x16xf32> to vector<1x16x16xbf16>
    %367 = vector.extract_strided_slice %366 {offsets = [0, 0, 0], sizes = [1, 16, 2], strides = [1, 1, 1]} : vector<1x16x16xbf16> to vector<1x16x2xbf16>
    %c272 = arith.constant 272 : index
    %c0_114 = arith.constant 0 : index
    %368 = vector.load %arg2[%c272, %c0_114] : memref<928x128xbf16, #tpu.memory_space<vmem>>, vector<6x2xbf16>
    %cst_115 = arith.constant 0.000000e+00 : bf16
    %369 = vector.broadcast %cst_115 : bf16 to vector<1x3x2xbf16>
    %370 = tpu.concatenate %369, %367, %369 in 1 : vector<1x3x2xbf16>, vector<1x16x2xbf16>, vector<1x3x2xbf16> -> vector<1x22x2xbf16>
    %cst_116 = arith.constant 0.000000e+00 : f32
    %371 = vector.broadcast %cst_116 : f32 to vector<16x2xf32>
    %372 = vector.extract_strided_slice %370 {offsets = [0, 0, 0], sizes = [1, 16, 2], strides = [1, 1, 1]} : vector<1x22x2xbf16> to vector<1x16x2xbf16>
    %373 = vector.shape_cast %372 : vector<1x16x2xbf16> to vector<16x2xbf16>
    %374 = vector.extract_strided_slice %368 {offsets = [0, 0], sizes = [2, 2], strides = [1, 1]} : vector<6x2xbf16> to vector<2x2xbf16>
    %cst_117 = arith.constant dense<0.000000e+00> : vector<16x2xf32>
    %375 = tpu.matmul %373, %374, %cst_117 {dimension_numbers = #tpu.dot_dimension_numbers<[1], [0], [0], [1], [0, 0, 1, 1], [], []>} : vector<16x2xbf16>, vector<2x2xbf16>, vector<16x2xf32> -> vector<16x2xf32>
    %376 = arith.addf %371, %375 : vector<16x2xf32>
    %377 = vector.extract_strided_slice %370 {offsets = [0, 3, 0], sizes = [1, 16, 2], strides = [1, 1, 1]} : vector<1x22x2xbf16> to vector<1x16x2xbf16>
    %378 = vector.shape_cast %377 : vector<1x16x2xbf16> to vector<16x2xbf16>
    %379 = vector.extract_strided_slice %368 {offsets = [2, 0], sizes = [2, 2], strides = [1, 1]} : vector<6x2xbf16> to vector<2x2xbf16>
    %cst_118 = arith.constant dense<0.000000e+00> : vector<16x2xf32>
    %380 = tpu.matmul %378, %379, %cst_118 {dimension_numbers = #tpu.dot_dimension_numbers<[1], [0], [0], [1], [0, 0, 1, 1], [], []>} : vector<16x2xbf16>, vector<2x2xbf16>, vector<16x2xf32> -> vector<16x2xf32>
    %381 = arith.addf %376, %380 : vector<16x2xf32>
    %382 = vector.extract_strided_slice %370 {offsets = [0, 6, 0], sizes = [1, 16, 2], strides = [1, 1, 1]} : vector<1x22x2xbf16> to vector<1x16x2xbf16>
    %383 = vector.shape_cast %382 : vector<1x16x2xbf16> to vector<16x2xbf16>
    %384 = vector.extract_strided_slice %368 {offsets = [4, 0], sizes = [2, 2], strides = [1, 1]} : vector<6x2xbf16> to vector<2x2xbf16>
    %cst_119 = arith.constant dense<0.000000e+00> : vector<16x2xf32>
    %385 = tpu.matmul %383, %384, %cst_119 {dimension_numbers = #tpu.dot_dimension_numbers<[1], [0], [0], [1], [0, 0, 1, 1], [], []>} : vector<16x2xbf16>, vector<2x2xbf16>, vector<16x2xf32> -> vector<16x2xf32>
    %386 = arith.addf %381, %385 : vector<16x2xf32>
    %387 = vector.shape_cast %386 : vector<16x2xf32> to vector<1x16x2xf32>
    %c104 = arith.constant 104 : index
    %c0_120 = arith.constant 0 : index
    %388 = vector.load %arg3[%c104, %c0_120] : memref<320x128xf32, #tpu.memory_space<vmem>>, vector<2x2xf32>
    %cst_121 = arith.constant 0.000000e+00 : f32
    %389 = vector.broadcast %cst_121 : f32 to vector<1x16x2xf32>
    %390 = arith.maximumf %387, %389 : vector<1x16x2xf32>
    %391 = vector.extract_strided_slice %388 {offsets = [0, 0], sizes = [1, 2], strides = [1, 1]} : vector<2x2xf32> to vector<1x2xf32>
    %392 = vector.shape_cast %391 : vector<1x2xf32> to vector<1x1x2xf32>
    %393 = vector.broadcast %392 : vector<1x1x2xf32> to vector<1x16x2xf32>
    %394 = arith.mulf %390, %393 : vector<1x16x2xf32>
    %395 = vector.extract_strided_slice %388 {offsets = [1, 0], sizes = [1, 2], strides = [1, 1]} : vector<2x2xf32> to vector<1x2xf32>
    %396 = vector.shape_cast %395 : vector<1x2xf32> to vector<1x1x2xf32>
    %397 = vector.broadcast %396 : vector<1x1x2xf32> to vector<1x16x2xf32>
    %398 = arith.addf %394, %397 : vector<1x16x2xf32>
    %399 = arith.truncf %398 : vector<1x16x2xf32> to vector<1x16x2xbf16>
    %c0_122 = arith.constant 0 : index
    %c0_123 = arith.constant 0 : index
    %c0_124 = arith.constant 0 : index
    %400 = vector.load %arg5[%c0_122, %c0_123, %c0_124] : memref<1x16x16xbf16, #tpu.memory_space<vmem>>, vector<1x16x2xbf16>
    tpu.vector_store %arg5[%c0_122, %c0_123, %c0_124], %399 {strides = array<i32>} : memref<1x16x16xbf16, #tpu.memory_space<vmem>>, vector<1x16x2xbf16>,
    %401 = vector.extract_strided_slice %366 {offsets = [0, 0, 2], sizes = [1, 16, 2], strides = [1, 1, 1]} : vector<1x16x16xbf16> to vector<1x16x2xbf16>
    %402 = arith.addf %399, %401 : vector<1x16x2xbf16>
    %c288 = arith.constant 288 : index
    %c0_125 = arith.constant 0 : index
    %403 = vector.load %arg2[%c288, %c0_125] : memref<928x128xbf16, #tpu.memory_space<vmem>>, vector<6x2xbf16>
    %cst_126 = arith.constant 0.000000e+00 : bf16
    %404 = vector.broadcast %cst_126 : bf16 to vector<1x3x2xbf16>
    %405 = tpu.concatenate %404, %402, %404 in 1 : vector<1x3x2xbf16>, vector<1x16x2xbf16>, vector<1x3x2xbf16> -> vector<1x22x2xbf16>
    %cst_127 = arith.constant 0.000000e+00 : f32
    %406 = vector.broadcast %cst_127 : f32 to vector<16x2xf32>
    %407 = vector.extract_strided_slice %405 {offsets = [0, 0, 0], sizes = [1, 16, 2], strides = [1, 1, 1]} : vector<1x22x2xbf16> to vector<1x16x2xbf16>
    %408 = vector.shape_cast %407 : vector<1x16x2xbf16> to vector<16x2xbf16>
    %409 = vector.extract_strided_slice %403 {offsets = [0, 0], sizes = [2, 2], strides = [1, 1]} : vector<6x2xbf16> to vector<2x2xbf16>
    %cst_128 = arith.constant dense<0.000000e+00> : vector<16x2xf32>
    %410 = tpu.matmul %408, %409, %cst_128 {dimension_numbers = #tpu.dot_dimension_numbers<[1], [0], [0], [1], [0, 0, 1, 1], [], []>} : vector<16x2xbf16>, vector<2x2xbf16>, vector<16x2xf32> -> vector<16x2xf32>
    %411 = arith.addf %406, %410 : vector<16x2xf32>
    %412 = vector.extract_strided_slice %405 {offsets = [0, 3, 0], sizes = [1, 16, 2], strides = [1, 1, 1]} : vector<1x22x2xbf16> to vector<1x16x2xbf16>
    %413 = vector.shape_cast %412 : vector<1x16x2xbf16> to vector<16x2xbf16>
    %414 = vector.extract_strided_slice %403 {offsets = [2, 0], sizes = [2, 2], strides = [1, 1]} : vector<6x2xbf16> to vector<2x2xbf16>
    %cst_129 = arith.constant dense<0.000000e+00> : vector<16x2xf32>
    %415 = tpu.matmul %413, %414, %cst_129 {dimension_numbers = #tpu.dot_dimension_numbers<[1], [0], [0], [1], [0, 0, 1, 1], [], []>} : vector<16x2xbf16>, vector<2x2xbf16>, vector<16x2xf32> -> vector<16x2xf32>
    %416 = arith.addf %411, %415 : vector<16x2xf32>
    %417 = vector.extract_strided_slice %405 {offsets = [0, 6, 0], sizes = [1, 16, 2], strides = [1, 1, 1]} : vector<1x22x2xbf16> to vector<1x16x2xbf16>
    %418 = vector.shape_cast %417 : vector<1x16x2xbf16> to vector<16x2xbf16>
    %419 = vector.extract_strided_slice %403 {offsets = [4, 0], sizes = [2, 2], strides = [1, 1]} : vector<6x2xbf16> to vector<2x2xbf16>
    %cst_130 = arith.constant dense<0.000000e+00> : vector<16x2xf32>
    %420 = tpu.matmul %418, %419, %cst_130 {dimension_numbers = #tpu.dot_dimension_numbers<[1], [0], [0], [1], [0, 0, 1, 1], [], []>} : vector<16x2xbf16>, vector<2x2xbf16>, vector<16x2xf32> -> vector<16x2xf32>
    %421 = arith.addf %416, %420 : vector<16x2xf32>
    %422 = vector.shape_cast %421 : vector<16x2xf32> to vector<1x16x2xf32>
    %c112_131 = arith.constant 112 : index
    %c0_132 = arith.constant 0 : index
    %423 = vector.load %arg3[%c112_131, %c0_132] : memref<320x128xf32, #tpu.memory_space<vmem>>, vector<2x2xf32>
    %cst_133 = arith.constant 0.000000e+00 : f32
    %424 = vector.broadcast %cst_133 : f32 to vector<1x16x2xf32>
    %425 = arith.maximumf %422, %424 : vector<1x16x2xf32>
    %426 = vector.extract_strided_slice %423 {offsets = [0, 0], sizes = [1, 2], strides = [1, 1]} : vector<2x2xf32> to vector<1x2xf32>
    %427 = vector.shape_cast %426 : vector<1x2xf32> to vector<1x1x2xf32>
    %428 = vector.broadcast %427 : vector<1x1x2xf32> to vector<1x16x2xf32>
    %429 = arith.mulf %425, %428 : vector<1x16x2xf32>
    %430 = vector.extract_strided_slice %423 {offsets = [1, 0], sizes = [1, 2], strides = [1, 1]} : vector<2x2xf32> to vector<1x2xf32>
    %431 = vector.shape_cast %430 : vector<1x2xf32> to vector<1x1x2xf32>
    %432 = vector.broadcast %431 : vector<1x1x2xf32> to vector<1x16x2xf32>
    %433 = arith.addf %429, %432 : vector<1x16x2xf32>
    %434 = arith.truncf %433 : vector<1x16x2xf32> to vector<1x16x2xbf16>
    %c0_134 = arith.constant 0 : index
    %c0_135 = arith.constant 0 : index
    %c2_136 = arith.constant 2 : index
    %435 = vector.load %arg5[%c0_134, %c0_135, %c2_136] : memref<1x16x16xbf16, #tpu.memory_space<vmem>>, vector<1x16x2xbf16>
    tpu.vector_store %arg5[%c0_134, %c0_135, %c2_136], %434 {strides = array<i32>} : memref<1x16x16xbf16, #tpu.memory_space<vmem>>, vector<1x16x2xbf16>,
    %436 = vector.extract_strided_slice %366 {offsets = [0, 0, 4], sizes = [1, 16, 2], strides = [1, 1, 1]} : vector<1x16x16xbf16> to vector<1x16x2xbf16>
    %437 = arith.addf %434, %436 : vector<1x16x2xbf16>
    %c304 = arith.constant 304 : index
    %c0_137 = arith.constant 0 : index
    %438 = vector.load %arg2[%c304, %c0_137] : memref<928x128xbf16, #tpu.memory_space<vmem>>, vector<6x2xbf16>
    %cst_138 = arith.constant 0.000000e+00 : bf16
    %439 = vector.broadcast %cst_138 : bf16 to vector<1x3x2xbf16>
    %440 = tpu.concatenate %439, %437, %439 in 1 : vector<1x3x2xbf16>, vector<1x16x2xbf16>, vector<1x3x2xbf16> -> vector<1x22x2xbf16>
    %cst_139 = arith.constant 0.000000e+00 : f32
    %441 = vector.broadcast %cst_139 : f32 to vector<16x2xf32>
    %442 = vector.extract_strided_slice %440 {offsets = [0, 0, 0], sizes = [1, 16, 2], strides = [1, 1, 1]} : vector<1x22x2xbf16> to vector<1x16x2xbf16>
    %443 = vector.shape_cast %442 : vector<1x16x2xbf16> to vector<16x2xbf16>
    %444 = vector.extract_strided_slice %438 {offsets = [0, 0], sizes = [2, 2], strides = [1, 1]} : vector<6x2xbf16> to vector<2x2xbf16>
    %cst_140 = arith.constant dense<0.000000e+00> : vector<16x2xf32>
    %445 = tpu.matmul %443, %444, %cst_140 {dimension_numbers = #tpu.dot_dimension_numbers<[1], [0], [0], [1], [0, 0, 1, 1], [], []>} : vector<16x2xbf16>, vector<2x2xbf16>, vector<16x2xf32> -> vector<16x2xf32>
    %446 = arith.addf %441, %445 : vector<16x2xf32>
    %447 = vector.extract_strided_slice %440 {offsets = [0, 3, 0], sizes = [1, 16, 2], strides = [1, 1, 1]} : vector<1x22x2xbf16> to vector<1x16x2xbf16>
    %448 = vector.shape_cast %447 : vector<1x16x2xbf16> to vector<16x2xbf16>
    %449 = vector.extract_strided_slice %438 {offsets = [2, 0], sizes = [2, 2], strides = [1, 1]} : vector<6x2xbf16> to vector<2x2xbf16>
    %cst_141 = arith.constant dense<0.000000e+00> : vector<16x2xf32>
    %450 = tpu.matmul %448, %449, %cst_141 {dimension_numbers = #tpu.dot_dimension_numbers<[1], [0], [0], [1], [0, 0, 1, 1], [], []>} : vector<16x2xbf16>, vector<2x2xbf16>, vector<16x2xf32> -> vector<16x2xf32>
    %451 = arith.addf %446, %450 : vector<16x2xf32>
    %452 = vector.extract_strided_slice %440 {offsets = [0, 6, 0], sizes = [1, 16, 2], strides = [1, 1, 1]} : vector<1x22x2xbf16> to vector<1x16x2xbf16>
    %453 = vector.shape_cast %452 : vector<1x16x2xbf16> to vector<16x2xbf16>
    %454 = vector.extract_strided_slice %438 {offsets = [4, 0], sizes = [2, 2], strides = [1, 1]} : vector<6x2xbf16> to vector<2x2xbf16>
    %cst_142 = arith.constant dense<0.000000e+00> : vector<16x2xf32>
    %455 = tpu.matmul %453, %454, %cst_142 {dimension_numbers = #tpu.dot_dimension_numbers<[1], [0], [0], [1], [0, 0, 1, 1], [], []>} : vector<16x2xbf16>, vector<2x2xbf16>, vector<16x2xf32> -> vector<16x2xf32>
    %456 = arith.addf %451, %455 : vector<16x2xf32>
    %457 = vector.shape_cast %456 : vector<16x2xf32> to vector<1x16x2xf32>
    %c120 = arith.constant 120 : index
    %c0_143 = arith.constant 0 : index
    %458 = vector.load %arg3[%c120, %c0_143] : memref<320x128xf32, #tpu.memory_space<vmem>>, vector<2x2xf32>
    %cst_144 = arith.constant 0.000000e+00 : f32
    %459 = vector.broadcast %cst_144 : f32 to vector<1x16x2xf32>
    %460 = arith.maximumf %457, %459 : vector<1x16x2xf32>
    %461 = vector.extract_strided_slice %458 {offsets = [0, 0], sizes = [1, 2], strides = [1, 1]} : vector<2x2xf32> to vector<1x2xf32>
    %462 = vector.shape_cast %461 : vector<1x2xf32> to vector<1x1x2xf32>
    %463 = vector.broadcast %462 : vector<1x1x2xf32> to vector<1x16x2xf32>
    %464 = arith.mulf %460, %463 : vector<1x16x2xf32>
    %465 = vector.extract_strided_slice %458 {offsets = [1, 0], sizes = [1, 2], strides = [1, 1]} : vector<2x2xf32> to vector<1x2xf32>
    %466 = vector.shape_cast %465 : vector<1x2xf32> to vector<1x1x2xf32>
    %467 = vector.broadcast %466 : vector<1x1x2xf32> to vector<1x16x2xf32>
    %468 = arith.addf %464, %467 : vector<1x16x2xf32>
    %469 = arith.truncf %468 : vector<1x16x2xf32> to vector<1x16x2xbf16>
    %c0_145 = arith.constant 0 : index
    %c0_146 = arith.constant 0 : index
    %c4_147 = arith.constant 4 : index
    %470 = vector.load %arg5[%c0_145, %c0_146, %c4_147] : memref<1x16x16xbf16, #tpu.memory_space<vmem>>, vector<1x16x2xbf16>
    tpu.vector_store %arg5[%c0_145, %c0_146, %c4_147], %469 {strides = array<i32>} : memref<1x16x16xbf16, #tpu.memory_space<vmem>>, vector<1x16x2xbf16>,
    %471 = vector.extract_strided_slice %366 {offsets = [0, 0, 6], sizes = [1, 16, 2], strides = [1, 1, 1]} : vector<1x16x16xbf16> to vector<1x16x2xbf16>
    %472 = arith.addf %469, %471 : vector<1x16x2xbf16>
    %c320 = arith.constant 320 : index
    %c0_148 = arith.constant 0 : index
    %473 = vector.load %arg2[%c320, %c0_148] : memref<928x128xbf16, #tpu.memory_space<vmem>>, vector<6x2xbf16>
    %cst_149 = arith.constant 0.000000e+00 : bf16
    %474 = vector.broadcast %cst_149 : bf16 to vector<1x3x2xbf16>
    %475 = tpu.concatenate %474, %472, %474 in 1 : vector<1x3x2xbf16>, vector<1x16x2xbf16>, vector<1x3x2xbf16> -> vector<1x22x2xbf16>
    %cst_150 = arith.constant 0.000000e+00 : f32
    %476 = vector.broadcast %cst_150 : f32 to vector<16x2xf32>
    %477 = vector.extract_strided_slice %475 {offsets = [0, 0, 0], sizes = [1, 16, 2], strides = [1, 1, 1]} : vector<1x22x2xbf16> to vector<1x16x2xbf16>
    %478 = vector.shape_cast %477 : vector<1x16x2xbf16> to vector<16x2xbf16>
    %479 = vector.extract_strided_slice %473 {offsets = [0, 0], sizes = [2, 2], strides = [1, 1]} : vector<6x2xbf16> to vector<2x2xbf16>
    %cst_151 = arith.constant dense<0.000000e+00> : vector<16x2xf32>
    %480 = tpu.matmul %478, %479, %cst_151 {dimension_numbers = #tpu.dot_dimension_numbers<[1], [0], [0], [1], [0, 0, 1, 1], [], []>} : vector<16x2xbf16>, vector<2x2xbf16>, vector<16x2xf32> -> vector<16x2xf32>
    %481 = arith.addf %476, %480 : vector<16x2xf32>
    %482 = vector.extract_strided_slice %475 {offsets = [0, 3, 0], sizes = [1, 16, 2], strides = [1, 1, 1]} : vector<1x22x2xbf16> to vector<1x16x2xbf16>
    %483 = vector.shape_cast %482 : vector<1x16x2xbf16> to vector<16x2xbf16>
    %484 = vector.extract_strided_slice %473 {offsets = [2, 0], sizes = [2, 2], strides = [1, 1]} : vector<6x2xbf16> to vector<2x2xbf16>
    %cst_152 = arith.constant dense<0.000000e+00> : vector<16x2xf32>
    %485 = tpu.matmul %483, %484, %cst_152 {dimension_numbers = #tpu.dot_dimension_numbers<[1], [0], [0], [1], [0, 0, 1, 1], [], []>} : vector<16x2xbf16>, vector<2x2xbf16>, vector<16x2xf32> -> vector<16x2xf32>
    %486 = arith.addf %481, %485 : vector<16x2xf32>
    %487 = vector.extract_strided_slice %475 {offsets = [0, 6, 0], sizes = [1, 16, 2], strides = [1, 1, 1]} : vector<1x22x2xbf16> to vector<1x16x2xbf16>
    %488 = vector.shape_cast %487 : vector<1x16x2xbf16> to vector<16x2xbf16>
    %489 = vector.extract_strided_slice %473 {offsets = [4, 0], sizes = [2, 2], strides = [1, 1]} : vector<6x2xbf16> to vector<2x2xbf16>
    %cst_153 = arith.constant dense<0.000000e+00> : vector<16x2xf32>
    %490 = tpu.matmul %488, %489, %cst_153 {dimension_numbers = #tpu.dot_dimension_numbers<[1], [0], [0], [1], [0, 0, 1, 1], [], []>} : vector<16x2xbf16>, vector<2x2xbf16>, vector<16x2xf32> -> vector<16x2xf32>
    %491 = arith.addf %486, %490 : vector<16x2xf32>
    %492 = vector.shape_cast %491 : vector<16x2xf32> to vector<1x16x2xf32>
    %c128_154 = arith.constant 128 : index
    %c0_155 = arith.constant 0 : index
    %493 = vector.load %arg3[%c128_154, %c0_155] : memref<320x128xf32, #tpu.memory_space<vmem>>, vector<2x2xf32>
    %cst_156 = arith.constant 0.000000e+00 : f32
    %494 = vector.broadcast %cst_156 : f32 to vector<1x16x2xf32>
    %495 = arith.maximumf %492, %494 : vector<1x16x2xf32>
    %496 = vector.extract_strided_slice %493 {offsets = [0, 0], sizes = [1, 2], strides = [1, 1]} : vector<2x2xf32> to vector<1x2xf32>
    %497 = vector.shape_cast %496 : vector<1x2xf32> to vector<1x1x2xf32>
    %498 = vector.broadcast %497 : vector<1x1x2xf32> to vector<1x16x2xf32>
    %499 = arith.mulf %495, %498 : vector<1x16x2xf32>
    %500 = vector.extract_strided_slice %493 {offsets = [1, 0], sizes = [1, 2], strides = [1, 1]} : vector<2x2xf32> to vector<1x2xf32>
    %501 = vector.shape_cast %500 : vector<1x2xf32> to vector<1x1x2xf32>
    %502 = vector.broadcast %501 : vector<1x1x2xf32> to vector<1x16x2xf32>
    %503 = arith.addf %499, %502 : vector<1x16x2xf32>
    %504 = arith.truncf %503 : vector<1x16x2xf32> to vector<1x16x2xbf16>
    %c0_157 = arith.constant 0 : index
    %c0_158 = arith.constant 0 : index
    %c6_159 = arith.constant 6 : index
    %505 = vector.load %arg5[%c0_157, %c0_158, %c6_159] : memref<1x16x16xbf16, #tpu.memory_space<vmem>>, vector<1x16x2xbf16>
    tpu.vector_store %arg5[%c0_157, %c0_158, %c6_159], %504 {strides = array<i32>} : memref<1x16x16xbf16, #tpu.memory_space<vmem>>, vector<1x16x2xbf16>,
    %506 = vector.extract_strided_slice %366 {offsets = [0, 0, 8], sizes = [1, 16, 2], strides = [1, 1, 1]} : vector<1x16x16xbf16> to vector<1x16x2xbf16>
    %507 = arith.addf %504, %506 : vector<1x16x2xbf16>
    %c336 = arith.constant 336 : index
    %c0_160 = arith.constant 0 : index
    %508 = vector.load %arg2[%c336, %c0_160] : memref<928x128xbf16, #tpu.memory_space<vmem>>, vector<6x2xbf16>
    %cst_161 = arith.constant 0.000000e+00 : bf16
    %509 = vector.broadcast %cst_161 : bf16 to vector<1x3x2xbf16>
    %510 = tpu.concatenate %509, %507, %509 in 1 : vector<1x3x2xbf16>, vector<1x16x2xbf16>, vector<1x3x2xbf16> -> vector<1x22x2xbf16>
    %cst_162 = arith.constant 0.000000e+00 : f32
    %511 = vector.broadcast %cst_162 : f32 to vector<16x2xf32>
    %512 = vector.extract_strided_slice %510 {offsets = [0, 0, 0], sizes = [1, 16, 2], strides = [1, 1, 1]} : vector<1x22x2xbf16> to vector<1x16x2xbf16>
    %513 = vector.shape_cast %512 : vector<1x16x2xbf16> to vector<16x2xbf16>
    %514 = vector.extract_strided_slice %508 {offsets = [0, 0], sizes = [2, 2], strides = [1, 1]} : vector<6x2xbf16> to vector<2x2xbf16>
    %cst_163 = arith.constant dense<0.000000e+00> : vector<16x2xf32>
    %515 = tpu.matmul %513, %514, %cst_163 {dimension_numbers = #tpu.dot_dimension_numbers<[1], [0], [0], [1], [0, 0, 1, 1], [], []>} : vector<16x2xbf16>, vector<2x2xbf16>, vector<16x2xf32> -> vector<16x2xf32>
    %516 = arith.addf %511, %515 : vector<16x2xf32>
    %517 = vector.extract_strided_slice %510 {offsets = [0, 3, 0], sizes = [1, 16, 2], strides = [1, 1, 1]} : vector<1x22x2xbf16> to vector<1x16x2xbf16>
    %518 = vector.shape_cast %517 : vector<1x16x2xbf16> to vector<16x2xbf16>
    %519 = vector.extract_strided_slice %508 {offsets = [2, 0], sizes = [2, 2], strides = [1, 1]} : vector<6x2xbf16> to vector<2x2xbf16>
    %cst_164 = arith.constant dense<0.000000e+00> : vector<16x2xf32>
    %520 = tpu.matmul %518, %519, %cst_164 {dimension_numbers = #tpu.dot_dimension_numbers<[1], [0], [0], [1], [0, 0, 1, 1], [], []>} : vector<16x2xbf16>, vector<2x2xbf16>, vector<16x2xf32> -> vector<16x2xf32>
    %521 = arith.addf %516, %520 : vector<16x2xf32>
    %522 = vector.extract_strided_slice %510 {offsets = [0, 6, 0], sizes = [1, 16, 2], strides = [1, 1, 1]} : vector<1x22x2xbf16> to vector<1x16x2xbf16>
    %523 = vector.shape_cast %522 : vector<1x16x2xbf16> to vector<16x2xbf16>
    %524 = vector.extract_strided_slice %508 {offsets = [4, 0], sizes = [2, 2], strides = [1, 1]} : vector<6x2xbf16> to vector<2x2xbf16>
    %cst_165 = arith.constant dense<0.000000e+00> : vector<16x2xf32>
    %525 = tpu.matmul %523, %524, %cst_165 {dimension_numbers = #tpu.dot_dimension_numbers<[1], [0], [0], [1], [0, 0, 1, 1], [], []>} : vector<16x2xbf16>, vector<2x2xbf16>, vector<16x2xf32> -> vector<16x2xf32>
    %526 = arith.addf %521, %525 : vector<16x2xf32>
    %527 = vector.shape_cast %526 : vector<16x2xf32> to vector<1x16x2xf32>
    %c136 = arith.constant 136 : index
    %c0_166 = arith.constant 0 : index
    %528 = vector.load %arg3[%c136, %c0_166] : memref<320x128xf32, #tpu.memory_space<vmem>>, vector<2x2xf32>
    %cst_167 = arith.constant 0.000000e+00 : f32
    %529 = vector.broadcast %cst_167 : f32 to vector<1x16x2xf32>
    %530 = arith.maximumf %527, %529 : vector<1x16x2xf32>
    %531 = vector.extract_strided_slice %528 {offsets = [0, 0], sizes = [1, 2], strides = [1, 1]} : vector<2x2xf32> to vector<1x2xf32>
    %532 = vector.shape_cast %531 : vector<1x2xf32> to vector<1x1x2xf32>
    %533 = vector.broadcast %532 : vector<1x1x2xf32> to vector<1x16x2xf32>
    %534 = arith.mulf %530, %533 : vector<1x16x2xf32>
    %535 = vector.extract_strided_slice %528 {offsets = [1, 0], sizes = [1, 2], strides = [1, 1]} : vector<2x2xf32> to vector<1x2xf32>
    %536 = vector.shape_cast %535 : vector<1x2xf32> to vector<1x1x2xf32>
    %537 = vector.broadcast %536 : vector<1x1x2xf32> to vector<1x16x2xf32>
    %538 = arith.addf %534, %537 : vector<1x16x2xf32>
    %539 = arith.truncf %538 : vector<1x16x2xf32> to vector<1x16x2xbf16>
    %c0_168 = arith.constant 0 : index
    %c0_169 = arith.constant 0 : index
    %c8_170 = arith.constant 8 : index
    %540 = vector.load %arg5[%c0_168, %c0_169, %c8_170] : memref<1x16x16xbf16, #tpu.memory_space<vmem>>, vector<1x16x2xbf16>
    tpu.vector_store %arg5[%c0_168, %c0_169, %c8_170], %539 {strides = array<i32>} : memref<1x16x16xbf16, #tpu.memory_space<vmem>>, vector<1x16x2xbf16>,
    %541 = vector.extract_strided_slice %366 {offsets = [0, 0, 10], sizes = [1, 16, 2], strides = [1, 1, 1]} : vector<1x16x16xbf16> to vector<1x16x2xbf16>
    %542 = arith.addf %539, %541 : vector<1x16x2xbf16>
    %c352 = arith.constant 352 : index
    %c0_171 = arith.constant 0 : index
    %543 = vector.load %arg2[%c352, %c0_171] : memref<928x128xbf16, #tpu.memory_space<vmem>>, vector<6x2xbf16>
    %cst_172 = arith.constant 0.000000e+00 : bf16
    %544 = vector.broadcast %cst_172 : bf16 to vector<1x3x2xbf16>
    %545 = tpu.concatenate %544, %542, %544 in 1 : vector<1x3x2xbf16>, vector<1x16x2xbf16>, vector<1x3x2xbf16> -> vector<1x22x2xbf16>
    %cst_173 = arith.constant 0.000000e+00 : f32
    %546 = vector.broadcast %cst_173 : f32 to vector<16x2xf32>
    %547 = vector.extract_strided_slice %545 {offsets = [0, 0, 0], sizes = [1, 16, 2], strides = [1, 1, 1]} : vector<1x22x2xbf16> to vector<1x16x2xbf16>
    %548 = vector.shape_cast %547 : vector<1x16x2xbf16> to vector<16x2xbf16>
    %549 = vector.extract_strided_slice %543 {offsets = [0, 0], sizes = [2, 2], strides = [1, 1]} : vector<6x2xbf16> to vector<2x2xbf16>
    %cst_174 = arith.constant dense<0.000000e+00> : vector<16x2xf32>
    %550 = tpu.matmul %548, %549, %cst_174 {dimension_numbers = #tpu.dot_dimension_numbers<[1], [0], [0], [1], [0, 0, 1, 1], [], []>} : vector<16x2xbf16>, vector<2x2xbf16>, vector<16x2xf32> -> vector<16x2xf32>
    %551 = arith.addf %546, %550 : vector<16x2xf32>
    %552 = vector.extract_strided_slice %545 {offsets = [0, 3, 0], sizes = [1, 16, 2], strides = [1, 1, 1]} : vector<1x22x2xbf16> to vector<1x16x2xbf16>
    %553 = vector.shape_cast %552 : vector<1x16x2xbf16> to vector<16x2xbf16>
    %554 = vector.extract_strided_slice %543 {offsets = [2, 0], sizes = [2, 2], strides = [1, 1]} : vector<6x2xbf16> to vector<2x2xbf16>
    %cst_175 = arith.constant dense<0.000000e+00> : vector<16x2xf32>
    %555 = tpu.matmul %553, %554, %cst_175 {dimension_numbers = #tpu.dot_dimension_numbers<[1], [0], [0], [1], [0, 0, 1, 1], [], []>} : vector<16x2xbf16>, vector<2x2xbf16>, vector<16x2xf32> -> vector<16x2xf32>
    %556 = arith.addf %551, %555 : vector<16x2xf32>
    %557 = vector.extract_strided_slice %545 {offsets = [0, 6, 0], sizes = [1, 16, 2], strides = [1, 1, 1]} : vector<1x22x2xbf16> to vector<1x16x2xbf16>
    %558 = vector.shape_cast %557 : vector<1x16x2xbf16> to vector<16x2xbf16>
    %559 = vector.extract_strided_slice %543 {offsets = [4, 0], sizes = [2, 2], strides = [1, 1]} : vector<6x2xbf16> to vector<2x2xbf16>
    %cst_176 = arith.constant dense<0.000000e+00> : vector<16x2xf32>
    %560 = tpu.matmul %558, %559, %cst_176 {dimension_numbers = #tpu.dot_dimension_numbers<[1], [0], [0], [1], [0, 0, 1, 1], [], []>} : vector<16x2xbf16>, vector<2x2xbf16>, vector<16x2xf32> -> vector<16x2xf32>
    %561 = arith.addf %556, %560 : vector<16x2xf32>
    %562 = vector.shape_cast %561 : vector<16x2xf32> to vector<1x16x2xf32>
    %c144_177 = arith.constant 144 : index
    %c0_178 = arith.constant 0 : index
    %563 = vector.load %arg3[%c144_177, %c0_178] : memref<320x128xf32, #tpu.memory_space<vmem>>, vector<2x2xf32>
    %cst_179 = arith.constant 0.000000e+00 : f32
    %564 = vector.broadcast %cst_179 : f32 to vector<1x16x2xf32>
    %565 = arith.maximumf %562, %564 : vector<1x16x2xf32>
    %566 = vector.extract_strided_slice %563 {offsets = [0, 0], sizes = [1, 2], strides = [1, 1]} : vector<2x2xf32> to vector<1x2xf32>
    %567 = vector.shape_cast %566 : vector<1x2xf32> to vector<1x1x2xf32>
    %568 = vector.broadcast %567 : vector<1x1x2xf32> to vector<1x16x2xf32>
    %569 = arith.mulf %565, %568 : vector<1x16x2xf32>
    %570 = vector.extract_strided_slice %563 {offsets = [1, 0], sizes = [1, 2], strides = [1, 1]} : vector<2x2xf32> to vector<1x2xf32>
    %571 = vector.shape_cast %570 : vector<1x2xf32> to vector<1x1x2xf32>
    %572 = vector.broadcast %571 : vector<1x1x2xf32> to vector<1x16x2xf32>
    %573 = arith.addf %569, %572 : vector<1x16x2xf32>
    %574 = arith.truncf %573 : vector<1x16x2xf32> to vector<1x16x2xbf16>
    %c0_180 = arith.constant 0 : index
    %c0_181 = arith.constant 0 : index
    %c10_182 = arith.constant 10 : index
    %575 = vector.load %arg5[%c0_180, %c0_181, %c10_182] : memref<1x16x16xbf16, #tpu.memory_space<vmem>>, vector<1x16x2xbf16>
    tpu.vector_store %arg5[%c0_180, %c0_181, %c10_182], %574 {strides = array<i32>} : memref<1x16x16xbf16, #tpu.memory_space<vmem>>, vector<1x16x2xbf16>,
    %576 = vector.extract_strided_slice %366 {offsets = [0, 0, 12], sizes = [1, 16, 2], strides = [1, 1, 1]} : vector<1x16x16xbf16> to vector<1x16x2xbf16>
    %577 = arith.addf %574, %576 : vector<1x16x2xbf16>
    %c368 = arith.constant 368 : index
    %c0_183 = arith.constant 0 : index
    %578 = vector.load %arg2[%c368, %c0_183] : memref<928x128xbf16, #tpu.memory_space<vmem>>, vector<6x2xbf16>
    %cst_184 = arith.constant 0.000000e+00 : bf16
    %579 = vector.broadcast %cst_184 : bf16 to vector<1x3x2xbf16>
    %580 = tpu.concatenate %579, %577, %579 in 1 : vector<1x3x2xbf16>, vector<1x16x2xbf16>, vector<1x3x2xbf16> -> vector<1x22x2xbf16>
    %cst_185 = arith.constant 0.000000e+00 : f32
    %581 = vector.broadcast %cst_185 : f32 to vector<16x2xf32>
    %582 = vector.extract_strided_slice %580 {offsets = [0, 0, 0], sizes = [1, 16, 2], strides = [1, 1, 1]} : vector<1x22x2xbf16> to vector<1x16x2xbf16>
    %583 = vector.shape_cast %582 : vector<1x16x2xbf16> to vector<16x2xbf16>
    %584 = vector.extract_strided_slice %578 {offsets = [0, 0], sizes = [2, 2], strides = [1, 1]} : vector<6x2xbf16> to vector<2x2xbf16>
    %cst_186 = arith.constant dense<0.000000e+00> : vector<16x2xf32>
    %585 = tpu.matmul %583, %584, %cst_186 {dimension_numbers = #tpu.dot_dimension_numbers<[1], [0], [0], [1], [0, 0, 1, 1], [], []>} : vector<16x2xbf16>, vector<2x2xbf16>, vector<16x2xf32> -> vector<16x2xf32>
    %586 = arith.addf %581, %585 : vector<16x2xf32>
    %587 = vector.extract_strided_slice %580 {offsets = [0, 3, 0], sizes = [1, 16, 2], strides = [1, 1, 1]} : vector<1x22x2xbf16> to vector<1x16x2xbf16>
    %588 = vector.shape_cast %587 : vector<1x16x2xbf16> to vector<16x2xbf16>
    %589 = vector.extract_strided_slice %578 {offsets = [2, 0], sizes = [2, 2], strides = [1, 1]} : vector<6x2xbf16> to vector<2x2xbf16>
    %cst_187 = arith.constant dense<0.000000e+00> : vector<16x2xf32>
    %590 = tpu.matmul %588, %589, %cst_187 {dimension_numbers = #tpu.dot_dimension_numbers<[1], [0], [0], [1], [0, 0, 1, 1], [], []>} : vector<16x2xbf16>, vector<2x2xbf16>, vector<16x2xf32> -> vector<16x2xf32>
    %591 = arith.addf %586, %590 : vector<16x2xf32>
    %592 = vector.extract_strided_slice %580 {offsets = [0, 6, 0], sizes = [1, 16, 2], strides = [1, 1, 1]} : vector<1x22x2xbf16> to vector<1x16x2xbf16>
    %593 = vector.shape_cast %592 : vector<1x16x2xbf16> to vector<16x2xbf16>
    %594 = vector.extract_strided_slice %578 {offsets = [4, 0], sizes = [2, 2], strides = [1, 1]} : vector<6x2xbf16> to vector<2x2xbf16>
    %cst_188 = arith.constant dense<0.000000e+00> : vector<16x2xf32>
    %595 = tpu.matmul %593, %594, %cst_188 {dimension_numbers = #tpu.dot_dimension_numbers<[1], [0], [0], [1], [0, 0, 1, 1], [], []>} : vector<16x2xbf16>, vector<2x2xbf16>, vector<16x2xf32> -> vector<16x2xf32>
    %596 = arith.addf %591, %595 : vector<16x2xf32>
    %597 = vector.shape_cast %596 : vector<16x2xf32> to vector<1x16x2xf32>
    %c152 = arith.constant 152 : index
    %c0_189 = arith.constant 0 : index
    %598 = vector.load %arg3[%c152, %c0_189] : memref<320x128xf32, #tpu.memory_space<vmem>>, vector<2x2xf32>
    %cst_190 = arith.constant 0.000000e+00 : f32
    %599 = vector.broadcast %cst_190 : f32 to vector<1x16x2xf32>
    %600 = arith.maximumf %597, %599 : vector<1x16x2xf32>
    %601 = vector.extract_strided_slice %598 {offsets = [0, 0], sizes = [1, 2], strides = [1, 1]} : vector<2x2xf32> to vector<1x2xf32>
    %602 = vector.shape_cast %601 : vector<1x2xf32> to vector<1x1x2xf32>
    %603 = vector.broadcast %602 : vector<1x1x2xf32> to vector<1x16x2xf32>
    %604 = arith.mulf %600, %603 : vector<1x16x2xf32>
    %605 = vector.extract_strided_slice %598 {offsets = [1, 0], sizes = [1, 2], strides = [1, 1]} : vector<2x2xf32> to vector<1x2xf32>
    %606 = vector.shape_cast %605 : vector<1x2xf32> to vector<1x1x2xf32>
    %607 = vector.broadcast %606 : vector<1x1x2xf32> to vector<1x16x2xf32>
    %608 = arith.addf %604, %607 : vector<1x16x2xf32>
    %609 = arith.truncf %608 : vector<1x16x2xf32> to vector<1x16x2xbf16>
    %c0_191 = arith.constant 0 : index
    %c0_192 = arith.constant 0 : index
    %c12_193 = arith.constant 12 : index
    %610 = vector.load %arg5[%c0_191, %c0_192, %c12_193] : memref<1x16x16xbf16, #tpu.memory_space<vmem>>, vector<1x16x2xbf16>
    tpu.vector_store %arg5[%c0_191, %c0_192, %c12_193], %609 {strides = array<i32>} : memref<1x16x16xbf16, #tpu.memory_space<vmem>>, vector<1x16x2xbf16>,
    %611 = vector.extract_strided_slice %366 {offsets = [0, 0, 14], sizes = [1, 16, 2], strides = [1, 1, 1]} : vector<1x16x16xbf16> to vector<1x16x2xbf16>
    %c0_194 = arith.constant 0 : index
    %c0_195 = arith.constant 0 : index
    %c14_196 = arith.constant 14 : index
    %612 = vector.load %arg5[%c0_194, %c0_195, %c14_196] : memref<1x16x16xbf16, #tpu.memory_space<vmem>>, vector<1x16x2xbf16>
    tpu.vector_store %arg5[%c0_194, %c0_195, %c14_196], %611 {strides = array<i32>} : memref<1x16x16xbf16, #tpu.memory_space<vmem>>, vector<1x16x2xbf16>,
    %c0_197 = arith.constant 0 : index
    %c0_198 = arith.constant 0 : index
    %c0_199 = arith.constant 0 : index
    %613 = vector.load %arg5[%c0_197, %c0_198, %c0_199] : memref<1x16x16xbf16, #tpu.memory_space<vmem>>, vector<1x16x16xbf16>
    %c384 = arith.constant 384 : index
    %c0_200 = arith.constant 0 : index
    %614 = vector.load %arg2[%c384, %c0_200] : memref<928x128xbf16, #tpu.memory_space<vmem>>, vector<16x16xbf16>
    %c160_201 = arith.constant 160 : index
    %c0_202 = arith.constant 0 : index
    %615 = vector.load %arg3[%c160_201, %c0_202] : memref<320x128xf32, #tpu.memory_space<vmem>>, vector<2x16xf32>
    %616 = vector.shape_cast %613 : vector<1x16x16xbf16> to vector<16x16xbf16>
    %cst_203 = arith.constant dense<0.000000e+00> : vector<16x16xf32>
    %617 = tpu.matmul %616, %614, %cst_203 {dimension_numbers = #tpu.dot_dimension_numbers<[1], [0], [0], [1], [0, 0, 1, 1], [], []>} : vector<16x16xbf16>, vector<16x16xbf16>, vector<16x16xf32> -> vector<16x16xf32>
    %618 = vector.shape_cast %617 : vector<16x16xf32> to vector<1x16x16xf32>
    %cst_204 = arith.constant 0.000000e+00 : f32
    %619 = vector.broadcast %cst_204 : f32 to vector<1x16x16xf32>
    %620 = arith.maximumf %618, %619 : vector<1x16x16xf32>
    %621 = vector.extract_strided_slice %615 {offsets = [0, 0], sizes = [1, 16], strides = [1, 1]} : vector<2x16xf32> to vector<1x16xf32>
    %622 = vector.shape_cast %621 : vector<1x16xf32> to vector<1x1x16xf32>
    %623 = vector.broadcast %622 : vector<1x1x16xf32> to vector<1x16x16xf32>
    %624 = arith.mulf %620, %623 : vector<1x16x16xf32>
    %625 = vector.extract_strided_slice %615 {offsets = [1, 0], sizes = [1, 16], strides = [1, 1]} : vector<2x16xf32> to vector<1x16xf32>
    %626 = vector.shape_cast %625 : vector<1x16xf32> to vector<1x1x16xf32>
    %627 = vector.broadcast %626 : vector<1x1x16xf32> to vector<1x16x16xf32>
    %628 = arith.addf %624, %627 : vector<1x16x16xf32>
    %629 = arith.truncf %628 : vector<1x16x16xf32> to vector<1x16x16xbf16>
    %c400 = arith.constant 400 : index
    %c0_205 = arith.constant 0 : index
    %630 = vector.load %arg2[%c400, %c0_205] : memref<928x128xbf16, #tpu.memory_space<vmem>>, vector<16x8xbf16>
    %c168 = arith.constant 168 : index
    %c0_206 = arith.constant 0 : index
    %631 = vector.load %arg3[%c168, %c0_206] : memref<320x128xf32, #tpu.memory_space<vmem>>, vector<1x8xf32>
    %c416 = arith.constant 416 : index
    %c0_207 = arith.constant 0 : index
    %632 = vector.load %arg2[%c416, %c0_207] : memref<928x128xbf16, #tpu.memory_space<vmem>>, vector<8x16xbf16>
    %c176_208 = arith.constant 176 : index
    %c0_209 = arith.constant 0 : index
    %633 = vector.load %arg3[%c176_208, %c0_209] : memref<320x128xf32, #tpu.memory_space<vmem>>, vector<1x16xf32>
    %634 = arith.extf %629 : vector<1x16x16xbf16> to vector<1x16x16xf32>
    %cst_210 = arith.constant dense<0.000000e+00> : vector<1x16xf32>
    %635 = vector.multi_reduction <add>, %634, %cst_210 [1] : vector<1x16x16xf32> to vector<1x16xf32>
    %cst_211 = arith.constant 1.600000e+01 : f32
    %636 = vector.broadcast %cst_211 : f32 to vector<1x16xf32>
    %637 = arith.divf %635, %636 : vector<1x16xf32>
    %638 = arith.truncf %637 : vector<1x16xf32> to vector<1x16xbf16>
    %cst_212 = arith.constant dense<0.000000e+00> : vector<1x8xf32>
    %639 = tpu.matmul %638, %630, %cst_212 {dimension_numbers = #tpu.dot_dimension_numbers<[1], [0], [0], [1], [0, 0, 1, 1], [], []>} : vector<1x16xbf16>, vector<16x8xbf16>, vector<1x8xf32> -> vector<1x8xf32>
    %640 = arith.addf %639, %631 : vector<1x8xf32>
    %cst_213 = arith.constant 0.000000e+00 : f32
    %641 = vector.broadcast %cst_213 : f32 to vector<1x8xf32>
    %642 = arith.maximumf %640, %641 : vector<1x8xf32>
    %643 = arith.truncf %642 : vector<1x8xf32> to vector<1x8xbf16>
    %cst_214 = arith.constant dense<0.000000e+00> : vector<1x16xf32>
    %644 = tpu.matmul %643, %632, %cst_214 {dimension_numbers = #tpu.dot_dimension_numbers<[1], [0], [0], [1], [0, 0, 1, 1], [], []>} : vector<1x8xbf16>, vector<8x16xbf16>, vector<1x16xf32> -> vector<1x16xf32>
    %645 = arith.addf %644, %633 : vector<1x16xf32>
    %646 = arith.negf %645 : vector<1x16xf32>
    %647 = math.exp %646 : vector<1x16xf32>
    %cst_215 = arith.constant 1.000000e+00 : f32
    %648 = vector.broadcast %cst_215 : f32 to vector<1x16xf32>
    %649 = arith.addf %648, %647 : vector<1x16xf32>
    %650 = arith.divf %648, %649 : vector<1x16xf32>
    %651 = vector.shape_cast %650 : vector<1x16xf32> to vector<1x1x16xf32>
    %652 = arith.extf %629 : vector<1x16x16xbf16> to vector<1x16x16xf32>
    %653 = vector.broadcast %651 : vector<1x1x16xf32> to vector<1x16x16xf32>
    %654 = arith.mulf %652, %653 : vector<1x16x16xf32>
    %655 = arith.addf %654, %349 : vector<1x16x16xf32>
    %656 = arith.addf %349, %655 : vector<1x16x16xf32>
    %c432 = arith.constant 432 : index
    %c0_216 = arith.constant 0 : index
    %657 = vector.load %arg2[%c432, %c0_216] : memref<928x128xbf16, #tpu.memory_space<vmem>>, vector<16x16xbf16>
    %c184 = arith.constant 184 : index
    %c0_217 = arith.constant 0 : index
    %658 = vector.load %arg3[%c184, %c0_217] : memref<320x128xf32, #tpu.memory_space<vmem>>, vector<2x16xf32>
    %659 = vector.shape_cast %656 : vector<1x16x16xf32> to vector<16x16xf32>
    %660 = arith.truncf %659 : vector<16x16xf32> to vector<16x16xbf16>
    %cst_218 = arith.constant dense<0.000000e+00> : vector<16x16xf32>
    %661 = tpu.matmul %660, %657, %cst_218 {dimension_numbers = #tpu.dot_dimension_numbers<[1], [0], [0], [1], [0, 0, 1, 1], [], []>} : vector<16x16xbf16>, vector<16x16xbf16>, vector<16x16xf32> -> vector<16x16xf32>
    %662 = vector.shape_cast %661 : vector<16x16xf32> to vector<1x16x16xf32>
    %cst_219 = arith.constant 0.000000e+00 : f32
    %663 = vector.broadcast %cst_219 : f32 to vector<1x16x16xf32>
    %664 = arith.maximumf %662, %663 : vector<1x16x16xf32>
    %665 = vector.extract_strided_slice %658 {offsets = [0, 0], sizes = [1, 16], strides = [1, 1]} : vector<2x16xf32> to vector<1x16xf32>
    %666 = vector.shape_cast %665 : vector<1x16xf32> to vector<1x1x16xf32>
    %667 = vector.broadcast %666 : vector<1x1x16xf32> to vector<1x16x16xf32>
    %668 = arith.mulf %664, %667 : vector<1x16x16xf32>
    %669 = vector.extract_strided_slice %658 {offsets = [1, 0], sizes = [1, 16], strides = [1, 1]} : vector<2x16xf32> to vector<1x16xf32>
    %670 = vector.shape_cast %669 : vector<1x16xf32> to vector<1x1x16xf32>
    %671 = vector.broadcast %670 : vector<1x1x16xf32> to vector<1x16x16xf32>
    %672 = arith.addf %668, %671 : vector<1x16x16xf32>
    %673 = arith.truncf %672 : vector<1x16x16xf32> to vector<1x16x16xbf16>
    %674 = vector.extract_strided_slice %673 {offsets = [0, 0, 0], sizes = [1, 16, 2], strides = [1, 1, 1]} : vector<1x16x16xbf16> to vector<1x16x2xbf16>
    %c448 = arith.constant 448 : index
    %c0_220 = arith.constant 0 : index
    %675 = vector.load %arg2[%c448, %c0_220] : memref<928x128xbf16, #tpu.memory_space<vmem>>, vector<6x2xbf16>
    %cst_221 = arith.constant 0.000000e+00 : bf16
    %676 = vector.broadcast %cst_221 : bf16 to vector<1x4x2xbf16>
    %677 = tpu.concatenate %676, %674, %676 in 1 : vector<1x4x2xbf16>, vector<1x16x2xbf16>, vector<1x4x2xbf16> -> vector<1x24x2xbf16>
    %cst_222 = arith.constant 0.000000e+00 : f32
    %678 = vector.broadcast %cst_222 : f32 to vector<16x2xf32>
    %679 = vector.extract_strided_slice %677 {offsets = [0, 0, 0], sizes = [1, 16, 2], strides = [1, 1, 1]} : vector<1x24x2xbf16> to vector<1x16x2xbf16>
    %680 = vector.shape_cast %679 : vector<1x16x2xbf16> to vector<16x2xbf16>
    %681 = vector.extract_strided_slice %675 {offsets = [0, 0], sizes = [2, 2], strides = [1, 1]} : vector<6x2xbf16> to vector<2x2xbf16>
    %cst_223 = arith.constant dense<0.000000e+00> : vector<16x2xf32>
    %682 = tpu.matmul %680, %681, %cst_223 {dimension_numbers = #tpu.dot_dimension_numbers<[1], [0], [0], [1], [0, 0, 1, 1], [], []>} : vector<16x2xbf16>, vector<2x2xbf16>, vector<16x2xf32> -> vector<16x2xf32>
    %683 = arith.addf %678, %682 : vector<16x2xf32>
    %684 = vector.extract_strided_slice %677 {offsets = [0, 4, 0], sizes = [1, 16, 2], strides = [1, 1, 1]} : vector<1x24x2xbf16> to vector<1x16x2xbf16>
    %685 = vector.shape_cast %684 : vector<1x16x2xbf16> to vector<16x2xbf16>
    %686 = vector.extract_strided_slice %675 {offsets = [2, 0], sizes = [2, 2], strides = [1, 1]} : vector<6x2xbf16> to vector<2x2xbf16>
    %cst_224 = arith.constant dense<0.000000e+00> : vector<16x2xf32>
    %687 = tpu.matmul %685, %686, %cst_224 {dimension_numbers = #tpu.dot_dimension_numbers<[1], [0], [0], [1], [0, 0, 1, 1], [], []>} : vector<16x2xbf16>, vector<2x2xbf16>, vector<16x2xf32> -> vector<16x2xf32>
    %688 = arith.addf %683, %687 : vector<16x2xf32>
    %689 = vector.extract_strided_slice %677 {offsets = [0, 8, 0], sizes = [1, 16, 2], strides = [1, 1, 1]} : vector<1x24x2xbf16> to vector<1x16x2xbf16>
    %690 = vector.shape_cast %689 : vector<1x16x2xbf16> to vector<16x2xbf16>
    %691 = vector.extract_strided_slice %675 {offsets = [4, 0], sizes = [2, 2], strides = [1, 1]} : vector<6x2xbf16> to vector<2x2xbf16>
    %cst_225 = arith.constant dense<0.000000e+00> : vector<16x2xf32>
    %692 = tpu.matmul %690, %691, %cst_225 {dimension_numbers = #tpu.dot_dimension_numbers<[1], [0], [0], [1], [0, 0, 1, 1], [], []>} : vector<16x2xbf16>, vector<2x2xbf16>, vector<16x2xf32> -> vector<16x2xf32>
    %693 = arith.addf %688, %692 : vector<16x2xf32>
    %694 = vector.shape_cast %693 : vector<16x2xf32> to vector<1x16x2xf32>
    %c192_226 = arith.constant 192 : index
    %c0_227 = arith.constant 0 : index
    %695 = vector.load %arg3[%c192_226, %c0_227] : memref<320x128xf32, #tpu.memory_space<vmem>>, vector<2x2xf32>
    %cst_228 = arith.constant 0.000000e+00 : f32
    %696 = vector.broadcast %cst_228 : f32 to vector<1x16x2xf32>
    %697 = arith.maximumf %694, %696 : vector<1x16x2xf32>
    %698 = vector.extract_strided_slice %695 {offsets = [0, 0], sizes = [1, 2], strides = [1, 1]} : vector<2x2xf32> to vector<1x2xf32>
    %699 = vector.shape_cast %698 : vector<1x2xf32> to vector<1x1x2xf32>
    %700 = vector.broadcast %699 : vector<1x1x2xf32> to vector<1x16x2xf32>
    %701 = arith.mulf %697, %700 : vector<1x16x2xf32>
    %702 = vector.extract_strided_slice %695 {offsets = [1, 0], sizes = [1, 2], strides = [1, 1]} : vector<2x2xf32> to vector<1x2xf32>
    %703 = vector.shape_cast %702 : vector<1x2xf32> to vector<1x1x2xf32>
    %704 = vector.broadcast %703 : vector<1x1x2xf32> to vector<1x16x2xf32>
    %705 = arith.addf %701, %704 : vector<1x16x2xf32>
    %706 = arith.truncf %705 : vector<1x16x2xf32> to vector<1x16x2xbf16>
    %c0_229 = arith.constant 0 : index
    %c0_230 = arith.constant 0 : index
    %c0_231 = arith.constant 0 : index
    %707 = vector.load %arg5[%c0_229, %c0_230, %c0_231] : memref<1x16x16xbf16, #tpu.memory_space<vmem>>, vector<1x16x2xbf16>
    tpu.vector_store %arg5[%c0_229, %c0_230, %c0_231], %706 {strides = array<i32>} : memref<1x16x16xbf16, #tpu.memory_space<vmem>>, vector<1x16x2xbf16>,
    %708 = vector.extract_strided_slice %673 {offsets = [0, 0, 2], sizes = [1, 16, 2], strides = [1, 1, 1]} : vector<1x16x16xbf16> to vector<1x16x2xbf16>
    %709 = arith.addf %706, %708 : vector<1x16x2xbf16>
    %c464 = arith.constant 464 : index
    %c0_232 = arith.constant 0 : index
    %710 = vector.load %arg2[%c464, %c0_232] : memref<928x128xbf16, #tpu.memory_space<vmem>>, vector<6x2xbf16>
    %cst_233 = arith.constant 0.000000e+00 : bf16
    %711 = vector.broadcast %cst_233 : bf16 to vector<1x4x2xbf16>
    %712 = tpu.concatenate %711, %709, %711 in 1 : vector<1x4x2xbf16>, vector<1x16x2xbf16>, vector<1x4x2xbf16> -> vector<1x24x2xbf16>
    %cst_234 = arith.constant 0.000000e+00 : f32
    %713 = vector.broadcast %cst_234 : f32 to vector<16x2xf32>
    %714 = vector.extract_strided_slice %712 {offsets = [0, 0, 0], sizes = [1, 16, 2], strides = [1, 1, 1]} : vector<1x24x2xbf16> to vector<1x16x2xbf16>
    %715 = vector.shape_cast %714 : vector<1x16x2xbf16> to vector<16x2xbf16>
    %716 = vector.extract_strided_slice %710 {offsets = [0, 0], sizes = [2, 2], strides = [1, 1]} : vector<6x2xbf16> to vector<2x2xbf16>
    %cst_235 = arith.constant dense<0.000000e+00> : vector<16x2xf32>
    %717 = tpu.matmul %715, %716, %cst_235 {dimension_numbers = #tpu.dot_dimension_numbers<[1], [0], [0], [1], [0, 0, 1, 1], [], []>} : vector<16x2xbf16>, vector<2x2xbf16>, vector<16x2xf32> -> vector<16x2xf32>
    %718 = arith.addf %713, %717 : vector<16x2xf32>
    %719 = vector.extract_strided_slice %712 {offsets = [0, 4, 0], sizes = [1, 16, 2], strides = [1, 1, 1]} : vector<1x24x2xbf16> to vector<1x16x2xbf16>
    %720 = vector.shape_cast %719 : vector<1x16x2xbf16> to vector<16x2xbf16>
    %721 = vector.extract_strided_slice %710 {offsets = [2, 0], sizes = [2, 2], strides = [1, 1]} : vector<6x2xbf16> to vector<2x2xbf16>
    %cst_236 = arith.constant dense<0.000000e+00> : vector<16x2xf32>
    %722 = tpu.matmul %720, %721, %cst_236 {dimension_numbers = #tpu.dot_dimension_numbers<[1], [0], [0], [1], [0, 0, 1, 1], [], []>} : vector<16x2xbf16>, vector<2x2xbf16>, vector<16x2xf32> -> vector<16x2xf32>
    %723 = arith.addf %718, %722 : vector<16x2xf32>
    %724 = vector.extract_strided_slice %712 {offsets = [0, 8, 0], sizes = [1, 16, 2], strides = [1, 1, 1]} : vector<1x24x2xbf16> to vector<1x16x2xbf16>
    %725 = vector.shape_cast %724 : vector<1x16x2xbf16> to vector<16x2xbf16>
    %726 = vector.extract_strided_slice %710 {offsets = [4, 0], sizes = [2, 2], strides = [1, 1]} : vector<6x2xbf16> to vector<2x2xbf16>
    %cst_237 = arith.constant dense<0.000000e+00> : vector<16x2xf32>
    %727 = tpu.matmul %725, %726, %cst_237 {dimension_numbers = #tpu.dot_dimension_numbers<[1], [0], [0], [1], [0, 0, 1, 1], [], []>} : vector<16x2xbf16>, vector<2x2xbf16>, vector<16x2xf32> -> vector<16x2xf32>
    %728 = arith.addf %723, %727 : vector<16x2xf32>
    %729 = vector.shape_cast %728 : vector<16x2xf32> to vector<1x16x2xf32>
    %c200 = arith.constant 200 : index
    %c0_238 = arith.constant 0 : index
    %730 = vector.load %arg3[%c200, %c0_238] : memref<320x128xf32, #tpu.memory_space<vmem>>, vector<2x2xf32>
    %cst_239 = arith.constant 0.000000e+00 : f32
    %731 = vector.broadcast %cst_239 : f32 to vector<1x16x2xf32>
    %732 = arith.maximumf %729, %731 : vector<1x16x2xf32>
    %733 = vector.extract_strided_slice %730 {offsets = [0, 0], sizes = [1, 2], strides = [1, 1]} : vector<2x2xf32> to vector<1x2xf32>
    %734 = vector.shape_cast %733 : vector<1x2xf32> to vector<1x1x2xf32>
    %735 = vector.broadcast %734 : vector<1x1x2xf32> to vector<1x16x2xf32>
    %736 = arith.mulf %732, %735 : vector<1x16x2xf32>
    %737 = vector.extract_strided_slice %730 {offsets = [1, 0], sizes = [1, 2], strides = [1, 1]} : vector<2x2xf32> to vector<1x2xf32>
    %738 = vector.shape_cast %737 : vector<1x2xf32> to vector<1x1x2xf32>
    %739 = vector.broadcast %738 : vector<1x1x2xf32> to vector<1x16x2xf32>
    %740 = arith.addf %736, %739 : vector<1x16x2xf32>
    %741 = arith.truncf %740 : vector<1x16x2xf32> to vector<1x16x2xbf16>
    %c0_240 = arith.constant 0 : index
    %c0_241 = arith.constant 0 : index
    %c2_242 = arith.constant 2 : index
    %742 = vector.load %arg5[%c0_240, %c0_241, %c2_242] : memref<1x16x16xbf16, #tpu.memory_space<vmem>>, vector<1x16x2xbf16>
    tpu.vector_store %arg5[%c0_240, %c0_241, %c2_242], %741 {strides = array<i32>} : memref<1x16x16xbf16, #tpu.memory_space<vmem>>, vector<1x16x2xbf16>,
    %743 = vector.extract_strided_slice %673 {offsets = [0, 0, 4], sizes = [1, 16, 2], strides = [1, 1, 1]} : vector<1x16x16xbf16> to vector<1x16x2xbf16>
    %744 = arith.addf %741, %743 : vector<1x16x2xbf16>
    %c480 = arith.constant 480 : index
    %c0_243 = arith.constant 0 : index
    %745 = vector.load %arg2[%c480, %c0_243] : memref<928x128xbf16, #tpu.memory_space<vmem>>, vector<6x2xbf16>
    %cst_244 = arith.constant 0.000000e+00 : bf16
    %746 = vector.broadcast %cst_244 : bf16 to vector<1x4x2xbf16>
    %747 = tpu.concatenate %746, %744, %746 in 1 : vector<1x4x2xbf16>, vector<1x16x2xbf16>, vector<1x4x2xbf16> -> vector<1x24x2xbf16>
    %cst_245 = arith.constant 0.000000e+00 : f32
    %748 = vector.broadcast %cst_245 : f32 to vector<16x2xf32>
    %749 = vector.extract_strided_slice %747 {offsets = [0, 0, 0], sizes = [1, 16, 2], strides = [1, 1, 1]} : vector<1x24x2xbf16> to vector<1x16x2xbf16>
    %750 = vector.shape_cast %749 : vector<1x16x2xbf16> to vector<16x2xbf16>
    %751 = vector.extract_strided_slice %745 {offsets = [0, 0], sizes = [2, 2], strides = [1, 1]} : vector<6x2xbf16> to vector<2x2xbf16>
    %cst_246 = arith.constant dense<0.000000e+00> : vector<16x2xf32>
    %752 = tpu.matmul %750, %751, %cst_246 {dimension_numbers = #tpu.dot_dimension_numbers<[1], [0], [0], [1], [0, 0, 1, 1], [], []>} : vector<16x2xbf16>, vector<2x2xbf16>, vector<16x2xf32> -> vector<16x2xf32>
    %753 = arith.addf %748, %752 : vector<16x2xf32>
    %754 = vector.extract_strided_slice %747 {offsets = [0, 4, 0], sizes = [1, 16, 2], strides = [1, 1, 1]} : vector<1x24x2xbf16> to vector<1x16x2xbf16>
    %755 = vector.shape_cast %754 : vector<1x16x2xbf16> to vector<16x2xbf16>
    %756 = vector.extract_strided_slice %745 {offsets = [2, 0], sizes = [2, 2], strides = [1, 1]} : vector<6x2xbf16> to vector<2x2xbf16>
    %cst_247 = arith.constant dense<0.000000e+00> : vector<16x2xf32>
    %757 = tpu.matmul %755, %756, %cst_247 {dimension_numbers = #tpu.dot_dimension_numbers<[1], [0], [0], [1], [0, 0, 1, 1], [], []>} : vector<16x2xbf16>, vector<2x2xbf16>, vector<16x2xf32> -> vector<16x2xf32>
    %758 = arith.addf %753, %757 : vector<16x2xf32>
    %759 = vector.extract_strided_slice %747 {offsets = [0, 8, 0], sizes = [1, 16, 2], strides = [1, 1, 1]} : vector<1x24x2xbf16> to vector<1x16x2xbf16>
    %760 = vector.shape_cast %759 : vector<1x16x2xbf16> to vector<16x2xbf16>
    %761 = vector.extract_strided_slice %745 {offsets = [4, 0], sizes = [2, 2], strides = [1, 1]} : vector<6x2xbf16> to vector<2x2xbf16>
    %cst_248 = arith.constant dense<0.000000e+00> : vector<16x2xf32>
    %762 = tpu.matmul %760, %761, %cst_248 {dimension_numbers = #tpu.dot_dimension_numbers<[1], [0], [0], [1], [0, 0, 1, 1], [], []>} : vector<16x2xbf16>, vector<2x2xbf16>, vector<16x2xf32> -> vector<16x2xf32>
    %763 = arith.addf %758, %762 : vector<16x2xf32>
    %764 = vector.shape_cast %763 : vector<16x2xf32> to vector<1x16x2xf32>
    %c208_249 = arith.constant 208 : index
    %c0_250 = arith.constant 0 : index
    %765 = vector.load %arg3[%c208_249, %c0_250] : memref<320x128xf32, #tpu.memory_space<vmem>>, vector<2x2xf32>
    %cst_251 = arith.constant 0.000000e+00 : f32
    %766 = vector.broadcast %cst_251 : f32 to vector<1x16x2xf32>
    %767 = arith.maximumf %764, %766 : vector<1x16x2xf32>
    %768 = vector.extract_strided_slice %765 {offsets = [0, 0], sizes = [1, 2], strides = [1, 1]} : vector<2x2xf32> to vector<1x2xf32>
    %769 = vector.shape_cast %768 : vector<1x2xf32> to vector<1x1x2xf32>
    %770 = vector.broadcast %769 : vector<1x1x2xf32> to vector<1x16x2xf32>
    %771 = arith.mulf %767, %770 : vector<1x16x2xf32>
    %772 = vector.extract_strided_slice %765 {offsets = [1, 0], sizes = [1, 2], strides = [1, 1]} : vector<2x2xf32> to vector<1x2xf32>
    %773 = vector.shape_cast %772 : vector<1x2xf32> to vector<1x1x2xf32>
    %774 = vector.broadcast %773 : vector<1x1x2xf32> to vector<1x16x2xf32>
    %775 = arith.addf %771, %774 : vector<1x16x2xf32>
    %776 = arith.truncf %775 : vector<1x16x2xf32> to vector<1x16x2xbf16>
    %c0_252 = arith.constant 0 : index
    %c0_253 = arith.constant 0 : index
    %c4_254 = arith.constant 4 : index
    %777 = vector.load %arg5[%c0_252, %c0_253, %c4_254] : memref<1x16x16xbf16, #tpu.memory_space<vmem>>, vector<1x16x2xbf16>
    tpu.vector_store %arg5[%c0_252, %c0_253, %c4_254], %776 {strides = array<i32>} : memref<1x16x16xbf16, #tpu.memory_space<vmem>>, vector<1x16x2xbf16>,
    %778 = vector.extract_strided_slice %673 {offsets = [0, 0, 6], sizes = [1, 16, 2], strides = [1, 1, 1]} : vector<1x16x16xbf16> to vector<1x16x2xbf16>
    %779 = arith.addf %776, %778 : vector<1x16x2xbf16>
    %c496 = arith.constant 496 : index
    %c0_255 = arith.constant 0 : index
    %780 = vector.load %arg2[%c496, %c0_255] : memref<928x128xbf16, #tpu.memory_space<vmem>>, vector<6x2xbf16>
    %cst_256 = arith.constant 0.000000e+00 : bf16
    %781 = vector.broadcast %cst_256 : bf16 to vector<1x4x2xbf16>
    %782 = tpu.concatenate %781, %779, %781 in 1 : vector<1x4x2xbf16>, vector<1x16x2xbf16>, vector<1x4x2xbf16> -> vector<1x24x2xbf16>
    %cst_257 = arith.constant 0.000000e+00 : f32
    %783 = vector.broadcast %cst_257 : f32 to vector<16x2xf32>
    %784 = vector.extract_strided_slice %782 {offsets = [0, 0, 0], sizes = [1, 16, 2], strides = [1, 1, 1]} : vector<1x24x2xbf16> to vector<1x16x2xbf16>
    %785 = vector.shape_cast %784 : vector<1x16x2xbf16> to vector<16x2xbf16>
    %786 = vector.extract_strided_slice %780 {offsets = [0, 0], sizes = [2, 2], strides = [1, 1]} : vector<6x2xbf16> to vector<2x2xbf16>
    %cst_258 = arith.constant dense<0.000000e+00> : vector<16x2xf32>
    %787 = tpu.matmul %785, %786, %cst_258 {dimension_numbers = #tpu.dot_dimension_numbers<[1], [0], [0], [1], [0, 0, 1, 1], [], []>} : vector<16x2xbf16>, vector<2x2xbf16>, vector<16x2xf32> -> vector<16x2xf32>
    %788 = arith.addf %783, %787 : vector<16x2xf32>
    %789 = vector.extract_strided_slice %782 {offsets = [0, 4, 0], sizes = [1, 16, 2], strides = [1, 1, 1]} : vector<1x24x2xbf16> to vector<1x16x2xbf16>
    %790 = vector.shape_cast %789 : vector<1x16x2xbf16> to vector<16x2xbf16>
    %791 = vector.extract_strided_slice %780 {offsets = [2, 0], sizes = [2, 2], strides = [1, 1]} : vector<6x2xbf16> to vector<2x2xbf16>
    %cst_259 = arith.constant dense<0.000000e+00> : vector<16x2xf32>
    %792 = tpu.matmul %790, %791, %cst_259 {dimension_numbers = #tpu.dot_dimension_numbers<[1], [0], [0], [1], [0, 0, 1, 1], [], []>} : vector<16x2xbf16>, vector<2x2xbf16>, vector<16x2xf32> -> vector<16x2xf32>
    %793 = arith.addf %788, %792 : vector<16x2xf32>
    %794 = vector.extract_strided_slice %782 {offsets = [0, 8, 0], sizes = [1, 16, 2], strides = [1, 1, 1]} : vector<1x24x2xbf16> to vector<1x16x2xbf16>
    %795 = vector.shape_cast %794 : vector<1x16x2xbf16> to vector<16x2xbf16>
    %796 = vector.extract_strided_slice %780 {offsets = [4, 0], sizes = [2, 2], strides = [1, 1]} : vector<6x2xbf16> to vector<2x2xbf16>
    %cst_260 = arith.constant dense<0.000000e+00> : vector<16x2xf32>
    %797 = tpu.matmul %795, %796, %cst_260 {dimension_numbers = #tpu.dot_dimension_numbers<[1], [0], [0], [1], [0, 0, 1, 1], [], []>} : vector<16x2xbf16>, vector<2x2xbf16>, vector<16x2xf32> -> vector<16x2xf32>
    %798 = arith.addf %793, %797 : vector<16x2xf32>
    %799 = vector.shape_cast %798 : vector<16x2xf32> to vector<1x16x2xf32>
    %c216 = arith.constant 216 : index
    %c0_261 = arith.constant 0 : index
    %800 = vector.load %arg3[%c216, %c0_261] : memref<320x128xf32, #tpu.memory_space<vmem>>, vector<2x2xf32>
    %cst_262 = arith.constant 0.000000e+00 : f32
    %801 = vector.broadcast %cst_262 : f32 to vector<1x16x2xf32>
    %802 = arith.maximumf %799, %801 : vector<1x16x2xf32>
    %803 = vector.extract_strided_slice %800 {offsets = [0, 0], sizes = [1, 2], strides = [1, 1]} : vector<2x2xf32> to vector<1x2xf32>
    %804 = vector.shape_cast %803 : vector<1x2xf32> to vector<1x1x2xf32>
    %805 = vector.broadcast %804 : vector<1x1x2xf32> to vector<1x16x2xf32>
    %806 = arith.mulf %802, %805 : vector<1x16x2xf32>
    %807 = vector.extract_strided_slice %800 {offsets = [1, 0], sizes = [1, 2], strides = [1, 1]} : vector<2x2xf32> to vector<1x2xf32>
    %808 = vector.shape_cast %807 : vector<1x2xf32> to vector<1x1x2xf32>
    %809 = vector.broadcast %808 : vector<1x1x2xf32> to vector<1x16x2xf32>
    %810 = arith.addf %806, %809 : vector<1x16x2xf32>
    %811 = arith.truncf %810 : vector<1x16x2xf32> to vector<1x16x2xbf16>
    %c0_263 = arith.constant 0 : index
    %c0_264 = arith.constant 0 : index
    %c6_265 = arith.constant 6 : index
    %812 = vector.load %arg5[%c0_263, %c0_264, %c6_265] : memref<1x16x16xbf16, #tpu.memory_space<vmem>>, vector<1x16x2xbf16>
    tpu.vector_store %arg5[%c0_263, %c0_264, %c6_265], %811 {strides = array<i32>} : memref<1x16x16xbf16, #tpu.memory_space<vmem>>, vector<1x16x2xbf16>,
    %813 = vector.extract_strided_slice %673 {offsets = [0, 0, 8], sizes = [1, 16, 2], strides = [1, 1, 1]} : vector<1x16x16xbf16> to vector<1x16x2xbf16>
    %814 = arith.addf %811, %813 : vector<1x16x2xbf16>
    %c512 = arith.constant 512 : index
    %c0_266 = arith.constant 0 : index
    %815 = vector.load %arg2[%c512, %c0_266] : memref<928x128xbf16, #tpu.memory_space<vmem>>, vector<6x2xbf16>
    %cst_267 = arith.constant 0.000000e+00 : bf16
    %816 = vector.broadcast %cst_267 : bf16 to vector<1x4x2xbf16>
    %817 = tpu.concatenate %816, %814, %816 in 1 : vector<1x4x2xbf16>, vector<1x16x2xbf16>, vector<1x4x2xbf16> -> vector<1x24x2xbf16>
    %cst_268 = arith.constant 0.000000e+00 : f32
    %818 = vector.broadcast %cst_268 : f32 to vector<16x2xf32>
    %819 = vector.extract_strided_slice %817 {offsets = [0, 0, 0], sizes = [1, 16, 2], strides = [1, 1, 1]} : vector<1x24x2xbf16> to vector<1x16x2xbf16>
    %820 = vector.shape_cast %819 : vector<1x16x2xbf16> to vector<16x2xbf16>
    %821 = vector.extract_strided_slice %815 {offsets = [0, 0], sizes = [2, 2], strides = [1, 1]} : vector<6x2xbf16> to vector<2x2xbf16>
    %cst_269 = arith.constant dense<0.000000e+00> : vector<16x2xf32>
    %822 = tpu.matmul %820, %821, %cst_269 {dimension_numbers = #tpu.dot_dimension_numbers<[1], [0], [0], [1], [0, 0, 1, 1], [], []>} : vector<16x2xbf16>, vector<2x2xbf16>, vector<16x2xf32> -> vector<16x2xf32>
    %823 = arith.addf %818, %822 : vector<16x2xf32>
    %824 = vector.extract_strided_slice %817 {offsets = [0, 4, 0], sizes = [1, 16, 2], strides = [1, 1, 1]} : vector<1x24x2xbf16> to vector<1x16x2xbf16>
    %825 = vector.shape_cast %824 : vector<1x16x2xbf16> to vector<16x2xbf16>
    %826 = vector.extract_strided_slice %815 {offsets = [2, 0], sizes = [2, 2], strides = [1, 1]} : vector<6x2xbf16> to vector<2x2xbf16>
    %cst_270 = arith.constant dense<0.000000e+00> : vector<16x2xf32>
    %827 = tpu.matmul %825, %826, %cst_270 {dimension_numbers = #tpu.dot_dimension_numbers<[1], [0], [0], [1], [0, 0, 1, 1], [], []>} : vector<16x2xbf16>, vector<2x2xbf16>, vector<16x2xf32> -> vector<16x2xf32>
    %828 = arith.addf %823, %827 : vector<16x2xf32>
    %829 = vector.extract_strided_slice %817 {offsets = [0, 8, 0], sizes = [1, 16, 2], strides = [1, 1, 1]} : vector<1x24x2xbf16> to vector<1x16x2xbf16>
    %830 = vector.shape_cast %829 : vector<1x16x2xbf16> to vector<16x2xbf16>
    %831 = vector.extract_strided_slice %815 {offsets = [4, 0], sizes = [2, 2], strides = [1, 1]} : vector<6x2xbf16> to vector<2x2xbf16>
    %cst_271 = arith.constant dense<0.000000e+00> : vector<16x2xf32>
    %832 = tpu.matmul %830, %831, %cst_271 {dimension_numbers = #tpu.dot_dimension_numbers<[1], [0], [0], [1], [0, 0, 1, 1], [], []>} : vector<16x2xbf16>, vector<2x2xbf16>, vector<16x2xf32> -> vector<16x2xf32>
    %833 = arith.addf %828, %832 : vector<16x2xf32>
    %834 = vector.shape_cast %833 : vector<16x2xf32> to vector<1x16x2xf32>
    %c224_272 = arith.constant 224 : index
    %c0_273 = arith.constant 0 : index
    %835 = vector.load %arg3[%c224_272, %c0_273] : memref<320x128xf32, #tpu.memory_space<vmem>>, vector<2x2xf32>
    %cst_274 = arith.constant 0.000000e+00 : f32
    %836 = vector.broadcast %cst_274 : f32 to vector<1x16x2xf32>
    %837 = arith.maximumf %834, %836 : vector<1x16x2xf32>
    %838 = vector.extract_strided_slice %835 {offsets = [0, 0], sizes = [1, 2], strides = [1, 1]} : vector<2x2xf32> to vector<1x2xf32>
    %839 = vector.shape_cast %838 : vector<1x2xf32> to vector<1x1x2xf32>
    %840 = vector.broadcast %839 : vector<1x1x2xf32> to vector<1x16x2xf32>
    %841 = arith.mulf %837, %840 : vector<1x16x2xf32>
    %842 = vector.extract_strided_slice %835 {offsets = [1, 0], sizes = [1, 2], strides = [1, 1]} : vector<2x2xf32> to vector<1x2xf32>
    %843 = vector.shape_cast %842 : vector<1x2xf32> to vector<1x1x2xf32>
    %844 = vector.broadcast %843 : vector<1x1x2xf32> to vector<1x16x2xf32>
    %845 = arith.addf %841, %844 : vector<1x16x2xf32>
    %846 = arith.truncf %845 : vector<1x16x2xf32> to vector<1x16x2xbf16>
    %c0_275 = arith.constant 0 : index
    %c0_276 = arith.constant 0 : index
    %c8_277 = arith.constant 8 : index
    %847 = vector.load %arg5[%c0_275, %c0_276, %c8_277] : memref<1x16x16xbf16, #tpu.memory_space<vmem>>, vector<1x16x2xbf16>
    tpu.vector_store %arg5[%c0_275, %c0_276, %c8_277], %846 {strides = array<i32>} : memref<1x16x16xbf16, #tpu.memory_space<vmem>>, vector<1x16x2xbf16>,
    %848 = vector.extract_strided_slice %673 {offsets = [0, 0, 10], sizes = [1, 16, 2], strides = [1, 1, 1]} : vector<1x16x16xbf16> to vector<1x16x2xbf16>
    %849 = arith.addf %846, %848 : vector<1x16x2xbf16>
    %c528 = arith.constant 528 : index
    %c0_278 = arith.constant 0 : index
    %850 = vector.load %arg2[%c528, %c0_278] : memref<928x128xbf16, #tpu.memory_space<vmem>>, vector<6x2xbf16>
    %cst_279 = arith.constant 0.000000e+00 : bf16
    %851 = vector.broadcast %cst_279 : bf16 to vector<1x4x2xbf16>
    %852 = tpu.concatenate %851, %849, %851 in 1 : vector<1x4x2xbf16>, vector<1x16x2xbf16>, vector<1x4x2xbf16> -> vector<1x24x2xbf16>
    %cst_280 = arith.constant 0.000000e+00 : f32
    %853 = vector.broadcast %cst_280 : f32 to vector<16x2xf32>
    %854 = vector.extract_strided_slice %852 {offsets = [0, 0, 0], sizes = [1, 16, 2], strides = [1, 1, 1]} : vector<1x24x2xbf16> to vector<1x16x2xbf16>
    %855 = vector.shape_cast %854 : vector<1x16x2xbf16> to vector<16x2xbf16>
    %856 = vector.extract_strided_slice %850 {offsets = [0, 0], sizes = [2, 2], strides = [1, 1]} : vector<6x2xbf16> to vector<2x2xbf16>
    %cst_281 = arith.constant dense<0.000000e+00> : vector<16x2xf32>
    %857 = tpu.matmul %855, %856, %cst_281 {dimension_numbers = #tpu.dot_dimension_numbers<[1], [0], [0], [1], [0, 0, 1, 1], [], []>} : vector<16x2xbf16>, vector<2x2xbf16>, vector<16x2xf32> -> vector<16x2xf32>
    %858 = arith.addf %853, %857 : vector<16x2xf32>
    %859 = vector.extract_strided_slice %852 {offsets = [0, 4, 0], sizes = [1, 16, 2], strides = [1, 1, 1]} : vector<1x24x2xbf16> to vector<1x16x2xbf16>
    %860 = vector.shape_cast %859 : vector<1x16x2xbf16> to vector<16x2xbf16>
    %861 = vector.extract_strided_slice %850 {offsets = [2, 0], sizes = [2, 2], strides = [1, 1]} : vector<6x2xbf16> to vector<2x2xbf16>
    %cst_282 = arith.constant dense<0.000000e+00> : vector<16x2xf32>
    %862 = tpu.matmul %860, %861, %cst_282 {dimension_numbers = #tpu.dot_dimension_numbers<[1], [0], [0], [1], [0, 0, 1, 1], [], []>} : vector<16x2xbf16>, vector<2x2xbf16>, vector<16x2xf32> -> vector<16x2xf32>
    %863 = arith.addf %858, %862 : vector<16x2xf32>
    %864 = vector.extract_strided_slice %852 {offsets = [0, 8, 0], sizes = [1, 16, 2], strides = [1, 1, 1]} : vector<1x24x2xbf16> to vector<1x16x2xbf16>
    %865 = vector.shape_cast %864 : vector<1x16x2xbf16> to vector<16x2xbf16>
    %866 = vector.extract_strided_slice %850 {offsets = [4, 0], sizes = [2, 2], strides = [1, 1]} : vector<6x2xbf16> to vector<2x2xbf16>
    %cst_283 = arith.constant dense<0.000000e+00> : vector<16x2xf32>
    %867 = tpu.matmul %865, %866, %cst_283 {dimension_numbers = #tpu.dot_dimension_numbers<[1], [0], [0], [1], [0, 0, 1, 1], [], []>} : vector<16x2xbf16>, vector<2x2xbf16>, vector<16x2xf32> -> vector<16x2xf32>
    %868 = arith.addf %863, %867 : vector<16x2xf32>
    %869 = vector.shape_cast %868 : vector<16x2xf32> to vector<1x16x2xf32>
    %c232 = arith.constant 232 : index
    %c0_284 = arith.constant 0 : index
    %870 = vector.load %arg3[%c232, %c0_284] : memref<320x128xf32, #tpu.memory_space<vmem>>, vector<2x2xf32>
    %cst_285 = arith.constant 0.000000e+00 : f32
    %871 = vector.broadcast %cst_285 : f32 to vector<1x16x2xf32>
    %872 = arith.maximumf %869, %871 : vector<1x16x2xf32>
    %873 = vector.extract_strided_slice %870 {offsets = [0, 0], sizes = [1, 2], strides = [1, 1]} : vector<2x2xf32> to vector<1x2xf32>
    %874 = vector.shape_cast %873 : vector<1x2xf32> to vector<1x1x2xf32>
    %875 = vector.broadcast %874 : vector<1x1x2xf32> to vector<1x16x2xf32>
    %876 = arith.mulf %872, %875 : vector<1x16x2xf32>
    %877 = vector.extract_strided_slice %870 {offsets = [1, 0], sizes = [1, 2], strides = [1, 1]} : vector<2x2xf32> to vector<1x2xf32>
    %878 = vector.shape_cast %877 : vector<1x2xf32> to vector<1x1x2xf32>
    %879 = vector.broadcast %878 : vector<1x1x2xf32> to vector<1x16x2xf32>
    %880 = arith.addf %876, %879 : vector<1x16x2xf32>
    %881 = arith.truncf %880 : vector<1x16x2xf32> to vector<1x16x2xbf16>
    %c0_286 = arith.constant 0 : index
    %c0_287 = arith.constant 0 : index
    %c10_288 = arith.constant 10 : index
    %882 = vector.load %arg5[%c0_286, %c0_287, %c10_288] : memref<1x16x16xbf16, #tpu.memory_space<vmem>>, vector<1x16x2xbf16>
    tpu.vector_store %arg5[%c0_286, %c0_287, %c10_288], %881 {strides = array<i32>} : memref<1x16x16xbf16, #tpu.memory_space<vmem>>, vector<1x16x2xbf16>,
    %883 = vector.extract_strided_slice %673 {offsets = [0, 0, 12], sizes = [1, 16, 2], strides = [1, 1, 1]} : vector<1x16x16xbf16> to vector<1x16x2xbf16>
    %884 = arith.addf %881, %883 : vector<1x16x2xbf16>
    %c544 = arith.constant 544 : index
    %c0_289 = arith.constant 0 : index
    %885 = vector.load %arg2[%c544, %c0_289] : memref<928x128xbf16, #tpu.memory_space<vmem>>, vector<6x2xbf16>
    %cst_290 = arith.constant 0.000000e+00 : bf16
    %886 = vector.broadcast %cst_290 : bf16 to vector<1x4x2xbf16>
    %887 = tpu.concatenate %886, %884, %886 in 1 : vector<1x4x2xbf16>, vector<1x16x2xbf16>, vector<1x4x2xbf16> -> vector<1x24x2xbf16>
    %cst_291 = arith.constant 0.000000e+00 : f32
    %888 = vector.broadcast %cst_291 : f32 to vector<16x2xf32>
    %889 = vector.extract_strided_slice %887 {offsets = [0, 0, 0], sizes = [1, 16, 2], strides = [1, 1, 1]} : vector<1x24x2xbf16> to vector<1x16x2xbf16>
    %890 = vector.shape_cast %889 : vector<1x16x2xbf16> to vector<16x2xbf16>
    %891 = vector.extract_strided_slice %885 {offsets = [0, 0], sizes = [2, 2], strides = [1, 1]} : vector<6x2xbf16> to vector<2x2xbf16>
    %cst_292 = arith.constant dense<0.000000e+00> : vector<16x2xf32>
    %892 = tpu.matmul %890, %891, %cst_292 {dimension_numbers = #tpu.dot_dimension_numbers<[1], [0], [0], [1], [0, 0, 1, 1], [], []>} : vector<16x2xbf16>, vector<2x2xbf16>, vector<16x2xf32> -> vector<16x2xf32>
    %893 = arith.addf %888, %892 : vector<16x2xf32>
    %894 = vector.extract_strided_slice %887 {offsets = [0, 4, 0], sizes = [1, 16, 2], strides = [1, 1, 1]} : vector<1x24x2xbf16> to vector<1x16x2xbf16>
    %895 = vector.shape_cast %894 : vector<1x16x2xbf16> to vector<16x2xbf16>
    %896 = vector.extract_strided_slice %885 {offsets = [2, 0], sizes = [2, 2], strides = [1, 1]} : vector<6x2xbf16> to vector<2x2xbf16>
    %cst_293 = arith.constant dense<0.000000e+00> : vector<16x2xf32>
    %897 = tpu.matmul %895, %896, %cst_293 {dimension_numbers = #tpu.dot_dimension_numbers<[1], [0], [0], [1], [0, 0, 1, 1], [], []>} : vector<16x2xbf16>, vector<2x2xbf16>, vector<16x2xf32> -> vector<16x2xf32>
    %898 = arith.addf %893, %897 : vector<16x2xf32>
    %899 = vector.extract_strided_slice %887 {offsets = [0, 8, 0], sizes = [1, 16, 2], strides = [1, 1, 1]} : vector<1x24x2xbf16> to vector<1x16x2xbf16>
    %900 = vector.shape_cast %899 : vector<1x16x2xbf16> to vector<16x2xbf16>
    %901 = vector.extract_strided_slice %885 {offsets = [4, 0], sizes = [2, 2], strides = [1, 1]} : vector<6x2xbf16> to vector<2x2xbf16>
    %cst_294 = arith.constant dense<0.000000e+00> : vector<16x2xf32>
    %902 = tpu.matmul %900, %901, %cst_294 {dimension_numbers = #tpu.dot_dimension_numbers<[1], [0], [0], [1], [0, 0, 1, 1], [], []>} : vector<16x2xbf16>, vector<2x2xbf16>, vector<16x2xf32> -> vector<16x2xf32>
    %903 = arith.addf %898, %902 : vector<16x2xf32>
    %904 = vector.shape_cast %903 : vector<16x2xf32> to vector<1x16x2xf32>
    %c240_295 = arith.constant 240 : index
    %c0_296 = arith.constant 0 : index
    %905 = vector.load %arg3[%c240_295, %c0_296] : memref<320x128xf32, #tpu.memory_space<vmem>>, vector<2x2xf32>
    %cst_297 = arith.constant 0.000000e+00 : f32
    %906 = vector.broadcast %cst_297 : f32 to vector<1x16x2xf32>
    %907 = arith.maximumf %904, %906 : vector<1x16x2xf32>
    %908 = vector.extract_strided_slice %905 {offsets = [0, 0], sizes = [1, 2], strides = [1, 1]} : vector<2x2xf32> to vector<1x2xf32>
    %909 = vector.shape_cast %908 : vector<1x2xf32> to vector<1x1x2xf32>
    %910 = vector.broadcast %909 : vector<1x1x2xf32> to vector<1x16x2xf32>
    %911 = arith.mulf %907, %910 : vector<1x16x2xf32>
    %912 = vector.extract_strided_slice %905 {offsets = [1, 0], sizes = [1, 2], strides = [1, 1]} : vector<2x2xf32> to vector<1x2xf32>
    %913 = vector.shape_cast %912 : vector<1x2xf32> to vector<1x1x2xf32>
    %914 = vector.broadcast %913 : vector<1x1x2xf32> to vector<1x16x2xf32>
    %915 = arith.addf %911, %914 : vector<1x16x2xf32>
    %916 = arith.truncf %915 : vector<1x16x2xf32> to vector<1x16x2xbf16>
    %c0_298 = arith.constant 0 : index
    %c0_299 = arith.constant 0 : index
    %c12_300 = arith.constant 12 : index
    %917 = vector.load %arg5[%c0_298, %c0_299, %c12_300] : memref<1x16x16xbf16, #tpu.memory_space<vmem>>, vector<1x16x2xbf16>
    tpu.vector_store %arg5[%c0_298, %c0_299, %c12_300], %916 {strides = array<i32>} : memref<1x16x16xbf16, #tpu.memory_space<vmem>>, vector<1x16x2xbf16>,
    %918 = vector.extract_strided_slice %673 {offsets = [0, 0, 14], sizes = [1, 16, 2], strides = [1, 1, 1]} : vector<1x16x16xbf16> to vector<1x16x2xbf16>
    %c0_301 = arith.constant 0 : index
    %c0_302 = arith.constant 0 : index
    %c14_303 = arith.constant 14 : index
    %919 = vector.load %arg5[%c0_301, %c0_302, %c14_303] : memref<1x16x16xbf16, #tpu.memory_space<vmem>>, vector<1x16x2xbf16>
    tpu.vector_store %arg5[%c0_301, %c0_302, %c14_303], %918 {strides = array<i32>} : memref<1x16x16xbf16, #tpu.memory_space<vmem>>, vector<1x16x2xbf16>,
    %c0_304 = arith.constant 0 : index
    %c0_305 = arith.constant 0 : index
    %c0_306 = arith.constant 0 : index
    %920 = vector.load %arg5[%c0_304, %c0_305, %c0_306] : memref<1x16x16xbf16, #tpu.memory_space<vmem>>, vector<1x16x16xbf16>
    %c560 = arith.constant 560 : index
    %c0_307 = arith.constant 0 : index
    %921 = vector.load %arg2[%c560, %c0_307] : memref<928x128xbf16, #tpu.memory_space<vmem>>, vector<16x16xbf16>
    %c248 = arith.constant 248 : index
    %c0_308 = arith.constant 0 : index
    %922 = vector.load %arg3[%c248, %c0_308] : memref<320x128xf32, #tpu.memory_space<vmem>>, vector<2x16xf32>
    %923 = vector.shape_cast %920 : vector<1x16x16xbf16> to vector<16x16xbf16>
    %cst_309 = arith.constant dense<0.000000e+00> : vector<16x16xf32>
    %924 = tpu.matmul %923, %921, %cst_309 {dimension_numbers = #tpu.dot_dimension_numbers<[1], [0], [0], [1], [0, 0, 1, 1], [], []>} : vector<16x16xbf16>, vector<16x16xbf16>, vector<16x16xf32> -> vector<16x16xf32>
    %925 = vector.shape_cast %924 : vector<16x16xf32> to vector<1x16x16xf32>
    %cst_310 = arith.constant 0.000000e+00 : f32
    %926 = vector.broadcast %cst_310 : f32 to vector<1x16x16xf32>
    %927 = arith.maximumf %925, %926 : vector<1x16x16xf32>
    %928 = vector.extract_strided_slice %922 {offsets = [0, 0], sizes = [1, 16], strides = [1, 1]} : vector<2x16xf32> to vector<1x16xf32>
    %929 = vector.shape_cast %928 : vector<1x16xf32> to vector<1x1x16xf32>
    %930 = vector.broadcast %929 : vector<1x1x16xf32> to vector<1x16x16xf32>
    %931 = arith.mulf %927, %930 : vector<1x16x16xf32>
    %932 = vector.extract_strided_slice %922 {offsets = [1, 0], sizes = [1, 16], strides = [1, 1]} : vector<2x16xf32> to vector<1x16xf32>
    %933 = vector.shape_cast %932 : vector<1x16xf32> to vector<1x1x16xf32>
    %934 = vector.broadcast %933 : vector<1x1x16xf32> to vector<1x16x16xf32>
    %935 = arith.addf %931, %934 : vector<1x16x16xf32>
    %936 = arith.truncf %935 : vector<1x16x16xf32> to vector<1x16x16xbf16>
    %c576 = arith.constant 576 : index
    %c0_311 = arith.constant 0 : index
    %937 = vector.load %arg2[%c576, %c0_311] : memref<928x128xbf16, #tpu.memory_space<vmem>>, vector<16x8xbf16>
    %c256_312 = arith.constant 256 : index
    %c0_313 = arith.constant 0 : index
    %938 = vector.load %arg3[%c256_312, %c0_313] : memref<320x128xf32, #tpu.memory_space<vmem>>, vector<1x8xf32>
    %c592 = arith.constant 592 : index
    %c0_314 = arith.constant 0 : index
    %939 = vector.load %arg2[%c592, %c0_314] : memref<928x128xbf16, #tpu.memory_space<vmem>>, vector<8x16xbf16>
    %c264 = arith.constant 264 : index
    %c0_315 = arith.constant 0 : index
    %940 = vector.load %arg3[%c264, %c0_315] : memref<320x128xf32, #tpu.memory_space<vmem>>, vector<1x16xf32>
    %941 = arith.extf %936 : vector<1x16x16xbf16> to vector<1x16x16xf32>
    %cst_316 = arith.constant dense<0.000000e+00> : vector<1x16xf32>
    %942 = vector.multi_reduction <add>, %941, %cst_316 [1] : vector<1x16x16xf32> to vector<1x16xf32>
    %cst_317 = arith.constant 1.600000e+01 : f32
    %943 = vector.broadcast %cst_317 : f32 to vector<1x16xf32>
    %944 = arith.divf %942, %943 : vector<1x16xf32>
    %945 = arith.truncf %944 : vector<1x16xf32> to vector<1x16xbf16>
    %cst_318 = arith.constant dense<0.000000e+00> : vector<1x8xf32>
    %946 = tpu.matmul %945, %937, %cst_318 {dimension_numbers = #tpu.dot_dimension_numbers<[1], [0], [0], [1], [0, 0, 1, 1], [], []>} : vector<1x16xbf16>, vector<16x8xbf16>, vector<1x8xf32> -> vector<1x8xf32>
    %947 = arith.addf %946, %938 : vector<1x8xf32>
    %cst_319 = arith.constant 0.000000e+00 : f32
    %948 = vector.broadcast %cst_319 : f32 to vector<1x8xf32>
    %949 = arith.maximumf %947, %948 : vector<1x8xf32>
    %950 = arith.truncf %949 : vector<1x8xf32> to vector<1x8xbf16>
    %cst_320 = arith.constant dense<0.000000e+00> : vector<1x16xf32>
    %951 = tpu.matmul %950, %939, %cst_320 {dimension_numbers = #tpu.dot_dimension_numbers<[1], [0], [0], [1], [0, 0, 1, 1], [], []>} : vector<1x8xbf16>, vector<8x16xbf16>, vector<1x16xf32> -> vector<1x16xf32>
    %952 = arith.addf %951, %940 : vector<1x16xf32>
    %953 = arith.negf %952 : vector<1x16xf32>
    %954 = math.exp %953 : vector<1x16xf32>
    %cst_321 = arith.constant 1.000000e+00 : f32
    %955 = vector.broadcast %cst_321 : f32 to vector<1x16xf32>
    %956 = arith.addf %955, %954 : vector<1x16xf32>
    %957 = arith.divf %955, %956 : vector<1x16xf32>
    %958 = vector.shape_cast %957 : vector<1x16xf32> to vector<1x1x16xf32>
    %959 = arith.extf %936 : vector<1x16x16xbf16> to vector<1x16x16xf32>
    %960 = vector.broadcast %958 : vector<1x1x16xf32> to vector<1x16x16xf32>
    %961 = arith.mulf %959, %960 : vector<1x16x16xf32>
    %962 = arith.addf %961, %656 : vector<1x16x16xf32>
    %963 = tpu.concatenate %348, %655, %962 in 2 : vector<1x16x16xf32>, vector<1x16x16xf32>, vector<1x16x16xf32> -> vector<1x16x48xf32>
    %c608 = arith.constant 608 : index
    %c0_322 = arith.constant 0 : index
    %964 = vector.load %arg2[%c608, %c0_322] : memref<928x128xbf16, #tpu.memory_space<vmem>>, vector<48x48xbf16>
    %965 = vector.shape_cast %963 : vector<1x16x48xf32> to vector<16x48xf32>
    %966 = arith.truncf %965 : vector<16x48xf32> to vector<16x48xbf16>
    %cst_323 = arith.constant dense<0.000000e+00> : vector<16x48xf32>
    %967 = tpu.matmul %966, %964, %cst_323 {dimension_numbers = #tpu.dot_dimension_numbers<[1], [0], [0], [1], [0, 0, 1, 1], [], []>} : vector<16x48xbf16>, vector<48x48xbf16>, vector<16x48xf32> -> vector<16x48xf32>
    %968 = vector.shape_cast %967 : vector<16x48xf32> to vector<1x16x48xf32>
    %c272_324 = arith.constant 272 : index
    %c0_325 = arith.constant 0 : index
    %969 = vector.load %arg3[%c272_324, %c0_325] : memref<320x128xf32, #tpu.memory_space<vmem>>, vector<1x48xf32>
    %970 = vector.shape_cast %969 : vector<1x48xf32> to vector<1x1x48xf32>
    %971 = vector.broadcast %970 : vector<1x1x48xf32> to vector<1x16x48xf32>
    %972 = arith.addf %968, %971 : vector<1x16x48xf32>
    %cst_326 = arith.constant 0.000000e+00 : f32
    %973 = vector.broadcast %cst_326 : f32 to vector<1x16x48xf32>
    %974 = arith.maximumf %972, %973 : vector<1x16x48xf32>
    %c656 = arith.constant 656 : index
    %c0_327 = arith.constant 0 : index
    %975 = vector.load %arg2[%c656, %c0_327] : memref<928x128xbf16, #tpu.memory_space<vmem>>, vector<48x128xbf16>
    %c280 = arith.constant 280 : index
    %c0_328 = arith.constant 0 : index
    %976 = vector.load %arg3[%c280, %c0_328] : memref<320x128xf32, #tpu.memory_space<vmem>>, vector<1x128xf32>
    %c704 = arith.constant 704 : index
    %c0_329 = arith.constant 0 : index
    %977 = vector.load %arg2[%c704, %c0_329] : memref<928x128xbf16, #tpu.memory_space<vmem>>, vector<128x48xbf16>
    %c288_330 = arith.constant 288 : index
    %c0_331 = arith.constant 0 : index
    %978 = vector.load %arg3[%c288_330, %c0_331] : memref<320x128xf32, #tpu.memory_space<vmem>>, vector<1x48xf32>
    %979 = vector.shape_cast %974 : vector<1x16x48xf32> to vector<16x48xf32>
    %980 = arith.truncf %979 : vector<16x48xf32> to vector<16x48xbf16>
    %cst_332 = arith.constant dense<0.000000e+00> : vector<16x128xf32>
    %981 = tpu.matmul %980, %975, %cst_332 {dimension_numbers = #tpu.dot_dimension_numbers<[1], [0], [0], [1], [0, 0, 1, 1], [], []>} : vector<16x48xbf16>, vector<48x128xbf16>, vector<16x128xf32> -> vector<16x128xf32>
    %982 = vector.broadcast %976 : vector<1x128xf32> to vector<16x128xf32>
    %983 = arith.addf %981, %982 : vector<16x128xf32>
    %984 = math.tanh %983 : vector<16x128xf32>
    %985 = arith.truncf %984 : vector<16x128xf32> to vector<16x128xbf16>
    %cst_333 = arith.constant dense<0.000000e+00> : vector<16x48xf32>
    %986 = tpu.matmul %985, %977, %cst_333 {dimension_numbers = #tpu.dot_dimension_numbers<[1], [0], [0], [1], [0, 0, 1, 1], [], []>} : vector<16x128xbf16>, vector<128x48xbf16>, vector<16x48xf32> -> vector<16x48xf32>
    %987 = vector.broadcast %978 : vector<1x48xf32> to vector<16x48xf32>
    %988 = arith.addf %986, %987 : vector<16x48xf32>
    %989 = vector.shape_cast %988 : vector<16x48xf32> to vector<1x16x48xf32>
    %cst_334 = arith.constant dense<0xFF800000> : vector<1x48xf32>
    %990 = vector.multi_reduction <maximumf>, %989, %cst_334 [1] : vector<1x16x48xf32> to vector<1x48xf32>
    %991 = vector.shape_cast %990 : vector<1x48xf32> to vector<1x1x48xf32>
    %992 = vector.broadcast %991 : vector<1x1x48xf32> to vector<1x16x48xf32>
    %993 = arith.subf %989, %992 : vector<1x16x48xf32>
    %994 = math.exp %993 : vector<1x16x48xf32>
    %cst_335 = arith.constant dense<0.000000e+00> : vector<1x48xf32>
    %995 = vector.multi_reduction <add>, %994, %cst_335 [1] : vector<1x16x48xf32> to vector<1x48xf32>
    %996 = vector.shape_cast %995 : vector<1x48xf32> to vector<1x1x48xf32>
    %997 = tpu.reciprocal %996 {approx = true} : vector<1x1x48xf32> -> vector<1x1x48xf32>
    %998 = vector.broadcast %997 : vector<1x1x48xf32> to vector<1x16x48xf32>
    %999 = arith.mulf %994, %998 : vector<1x16x48xf32>
    %1000 = arith.mulf %999, %974 : vector<1x16x48xf32>
    %cst_336 = arith.constant dense<0.000000e+00> : vector<1x48xf32>
    %1001 = vector.multi_reduction <add>, %1000, %cst_336 [1] : vector<1x16x48xf32> to vector<1x48xf32>
    %1002 = arith.mulf %999, %974 : vector<1x16x48xf32>
    %1003 = arith.mulf %1002, %974 : vector<1x16x48xf32>
    %cst_337 = arith.constant dense<0.000000e+00> : vector<1x48xf32>
    %1004 = vector.multi_reduction <add>, %1003, %cst_337 [1] : vector<1x16x48xf32> to vector<1x48xf32>
    %1005 = arith.mulf %1001, %1001 : vector<1x48xf32>
    %1006 = arith.subf %1004, %1005 : vector<1x48xf32>
    %cst_338 = arith.constant 9.99999971E-10 : f32
    %1007 = vector.broadcast %cst_338 : f32 to vector<1x48xf32>
    %1008 = arith.maximumf %1006, %1007 : vector<1x48xf32>
    %1009 = math.sqrt %1008 : vector<1x48xf32>
    %1010 = tpu.concatenate %1001, %1009 in 1 : vector<1x48xf32>, vector<1x48xf32> -> vector<1x96xf32>
    %c296 = arith.constant 296 : index
    %c0_339 = arith.constant 0 : index
    %1011 = vector.load %arg3[%c296, %c0_339] : memref<320x128xf32, #tpu.memory_space<vmem>>, vector<2x96xf32>
    %1012 = vector.extract_strided_slice %1011 {offsets = [0, 0], sizes = [1, 96], strides = [1, 1]} : vector<2x96xf32> to vector<1x96xf32>
    %1013 = arith.mulf %1010, %1012 : vector<1x96xf32>
    %1014 = vector.extract_strided_slice %1011 {offsets = [1, 0], sizes = [1, 96], strides = [1, 1]} : vector<2x96xf32> to vector<1x96xf32>
    %1015 = arith.addf %1013, %1014 : vector<1x96xf32>
    %c832 = arith.constant 832 : index
    %c0_340 = arith.constant 0 : index
    %1016 = vector.load %arg2[%c832, %c0_340] : memref<928x128xbf16, #tpu.memory_space<vmem>>, vector<96x8xbf16>
    %1017 = arith.truncf %1015 : vector<1x96xf32> to vector<1x96xbf16>
    %cst_341 = arith.constant dense<0.000000e+00> : vector<1x8xf32>
    %1018 = tpu.matmul %1017, %1016, %cst_341 {dimension_numbers = #tpu.dot_dimension_numbers<[1], [0], [0], [1], [0, 0, 1, 1], [], []>} : vector<1x96xbf16>, vector<96x8xbf16>, vector<1x8xf32> -> vector<1x8xf32>
    %c304_342 = arith.constant 304 : index
    %c0_343 = arith.constant 0 : index
    %1019 = vector.load %arg3[%c304_342, %c0_343] : memref<320x128xf32, #tpu.memory_space<vmem>>, vector<1x8xf32>
    %1020 = arith.addf %1018, %1019 : vector<1x8xf32>
    %c312 = arith.constant 312 : index
    %c0_344 = arith.constant 0 : index
    %1021 = vector.load %arg3[%c312, %c0_344] : memref<320x128xf32, #tpu.memory_space<vmem>>, vector<2x8xf32>
    %1022 = vector.extract_strided_slice %1021 {offsets = [0, 0], sizes = [1, 8], strides = [1, 1]} : vector<2x8xf32> to vector<1x8xf32>
    %1023 = arith.mulf %1020, %1022 : vector<1x8xf32>
    %1024 = vector.extract_strided_slice %1021 {offsets = [1, 0], sizes = [1, 8], strides = [1, 1]} : vector<2x8xf32> to vector<1x8xf32>
    %1025 = arith.addf %1023, %1024 : vector<1x8xf32>
    %1026 = vector.shape_cast %1025 : vector<1x8xf32> to vector<1x1x8xf32>
    %c0_345 = arith.constant 0 : index
    %c0_346 = arith.constant 0 : index
    %c0_347 = arith.constant 0 : index
    %1027 = vector.load %arg4[%c0_345, %c0_346, %c0_347] : memref<1x1x8xf32, #tpu.memory_space<vmem>>, vector<1x1x8xf32>
    tpu.vector_store %arg4[%c0_345, %c0_346, %c0_347], %1026 {strides = array<i32>} : memref<1x1x8xf32, #tpu.memory_space<vmem>>, vector<1x1x8xf32>,
    return
  }
  func.func @transform_0(%arg0: i32) -> (i32, i32, i32) {
    %c0_i32 = arith.constant 0 : i32
    %c0_i32_0 = arith.constant 0 : i32
    %c0_i32_1 = arith.constant 0 : i32
    return %arg0, %c0_i32, %c0_i32_0 : i32, i32, i32
  }
  func.func @transform_1(%arg0: i32) -> (i32, i32) {
    %c0_i32 = arith.constant 0 : i32
    %c0_i32_0 = arith.constant 0 : i32
    %c0_i32_1 = arith.constant 0 : i32
    return %c0_i32, %c0_i32_0 : i32, i32
  }
  func.func @transform_2(%arg0: i32) -> (i32, i32) {
    %c0_i32 = arith.constant 0 : i32
    %c0_i32_0 = arith.constant 0 : i32
    %c0_i32_1 = arith.constant 0 : i32
    return %c0_i32, %c0_i32_0 : i32, i32
  }
  func.func @transform_3(%arg0: i32) -> (i32, i32, i32) {
    %c0_i32 = arith.constant 0 : i32
    %c0_i32_0 = arith.constant 0 : i32
    %c0_i32_1 = arith.constant 0 : i32
    return %arg0, %c0_i32, %c0_i32_0 : i32, i32, i32
  }
}

</mosaic_0001>

<llo_original>
// kernel: tpu_custom_call.1
$region0: #{tpu_custom_call.1}
  #allocation0 [shape = 'u32[]', space=smem, size = 0x4, offset = 0x4, fixed_abs, tag = 'smem constant byte address 0x4 - core index']
  #allocation1 [shape = 'u32[72,128]{1,0:T(1,128)}', space=vmem, size = 0x9000, scoped, tag = 'internal scratch']
  #allocation2 [shape = 'bf16[1,16,16]{2,1,0:T(8,128)(2,1)}', space=vmem, size = 0x1000, scoped, tag = 'scratch operand']
  %s0 = inlined_call_operand.hbm [shape: f32[2,16,16], index: 0, kind: input, shape index: {}]
  %s1 = inlined_call_operand.hbm [shape: bf16[928,128], index: 1, kind: input, shape index: {}]
  %s2 = inlined_call_operand.hbm [shape: f32[320,128], index: 2, kind: input, shape index: {}]
  %s3 = inlined_call_operand.hbm [shape: f32[2,1,8], index: 3, kind: output, shape index: {}]
  %s4 = sld [smem:[#allocation0]]
  $region57: #{tpu_custom_call.1} parent=0
    _
  %s6 = ssub.s32 1, %s4
  %s7 = scalar_select 0, %s6, %s4
  $region1: #{tpu_custom_call.1} parent=0
    #allocation3 [shape = 'u8[16384]{0}', space=vmem, size = 0x4000, scoped, tag = 'input window, operand 0']
    #allocation4 [shape = 's32[2]{0}', space=sflag, size = 0x8, scoped, tag = 'scoped memory for tpu_custom_call.1']
    #allocation5 [shape = 's32[2]{0}', space=sflag, size = 0x8, scoped, tag = 'scoped memory for tpu_custom_call.1']
    #allocation6 [shape = 'u8[237568]{0}', space=vmem, size = 0x3a000, scoped, tag = 'input window, operand 1, single buffered']
    #allocation7 [shape = 's32[1]{0}', space=sflag, size = 0x4, scoped, tag = 'scoped memory for tpu_custom_call.1']
    #allocation8 [shape = 'u8[163840]{0}', space=vmem, size = 0x28000, scoped, tag = 'input window, operand 2, single buffered']
    #allocation9 [shape = 'u8[1024]{0}', space=vmem, size = 0x400, scoped, tag = 'output window, operand 0']
    %8 = vsyncpa [#allocation4], 0
    %s9 = scalar_lea.sflag [#allocation4], 1
    %10 = vsyncpa %s9, 0
    %11 = vsyncpa [#allocation7], 0
    %12 = vsyncpa [#allocation5], 0
    %s13 = scalar_lea.sflag [#allocation5], 1
    %14 = vsyncpa %s13, 0
    loop: start=0, step=1, limit=4
    $region2: #{tpu_custom_call.1} parent=1 // loop_pre_header
      _
    $region3: #{tpu_custom_call.1} parent=1 // loop_header
      %s16 = sphi 0, %s20
      %p17 = scmp.ge.s32.totalorder %s16, 4
      %s26 = sphi 0, %s28
      %s29 = sphi 0, %s26
      %s30 = sphi 0, %s29
      %s46 = sphi 0, %s30
      %s50 = sphi 0, %s50
      %s52 = sphi 0, %s50
      %s53 = sphi 0, %s52
      %s67 = sphi 0, %s53
      %s71 = sphi 0, %s71
      %s73 = sphi 0, %s71
      %s74 = sphi 0, %s73
      %s88 = sphi 0, %s74
      %s94 = sphi 0, %s96
      %s97 = sphi 0, %s94
      %s98 = sphi 0, %s97
      %s114 = sphi 0, %s98
    $region4: #{tpu_custom_call.1} parent=1 // loop_header_branch
      %19 = sbr.rel (%p17) target = $region8
    $region5: #{tpu_custom_call.1} parent=1 // loop_body
      %s21 = ssub.s32 %s16, 1
      %s22 = ssub.s32 %s16, 2
      %s23 = sadd.s32 %s16, 1
      %s24 = ssub.s32 %s16, %s23
      %p25 = scmp.eq.s32.totalorder %s24, 0
      %s27 = sadd.s32 %s26, 1
      %s28 = scalar_select %p25, %s26, %s27
      %p31 = pneg %p25
      %p32 = scmp.eq.s32.totalorder %s16, 1
      %p33 = por %p31, %p32
      %p34 = scmp.ne.s32.totalorder %s26, %s29
      %p35 = scmp.eq.s32.totalorder %s16, 0
      %p36 = por %p34, %p35
      %p37 = scmp.ne.s32.totalorder %s26, %s29
      %p38 = scmp.eq.s32.totalorder %s21, 1
      %p39 = por %p37, %p38
      %p40 = scmp.ne.s32.totalorder %s29, %s30
      %p41 = scmp.eq.s32.totalorder %s21, 0
      %p42 = por %p40, %p41
      %p43 = scmp.ne.s32.totalorder %s29, %s30
      %p44 = scmp.eq.s32.totalorder %s22, 1
      %p45 = por %p43, %p44
      %p47 = scmp.ne.s32.totalorder %s30, %s46
      %p48 = scmp.eq.s32.totalorder %s22, 0
      %p49 = por %p47, %p48
      %s51 = sadd.s32 %s50, 1
      %p54 = scmp.eq.s32.totalorder %s16, 1
      %p55 = scmp.ne.s32.totalorder %s50, %s52
      %p56 = scmp.eq.s32.totalorder %s16, 0
      %p57 = por %p55, %p56
      %p58 = scmp.ne.s32.totalorder %s50, %s52
      %p59 = scmp.eq.s32.totalorder %s21, 1
      %p60 = por %p58, %p59
      %p61 = scmp.ne.s32.totalorder %s52, %s53
      %p62 = scmp.eq.s32.totalorder %s21, 0
      %p63 = por %p61, %p62
      %p64 = scmp.ne.s32.totalorder %s52, %s53
      %p65 = scmp.eq.s32.totalorder %s22, 1
      %p66 = por %p64, %p65
      %p68 = scmp.ne.s32.totalorder %s53, %s67
      %p69 = scmp.eq.s32.totalorder %s22, 0
      %p70 = por %p68, %p69
      %s72 = sadd.s32 %s71, 1
      %p75 = scmp.eq.s32.totalorder %s16, 1
      %p76 = scmp.ne.s32.totalorder %s71, %s73
      %p77 = scmp.eq.s32.totalorder %s16, 0
      %p78 = por %p76, %p77
      %p79 = scmp.ne.s32.totalorder %s71, %s73
      %p80 = scmp.eq.s32.totalorder %s21, 1
      %p81 = por %p79, %p80
      %p82 = scmp.ne.s32.totalorder %s73, %s74
      %p83 = scmp.eq.s32.totalorder %s21, 0
      %p84 = por %p82, %p83
      %p85 = scmp.ne.s32.totalorder %s73, %s74
      %p86 = scmp.eq.s32.totalorder %s22, 1
      %p87 = por %p85, %p86
      %p89 = scmp.ne.s32.totalorder %s74, %s88
      %p90 = scmp.eq.s32.totalorder %s22, 0
      %p91 = por %p89, %p90
      %s92 = ssub.s32 %s16, %s23
      %p93 = scmp.eq.s32.totalorder %s92, 0
      %s95 = sadd.s32 %s94, 1
      %s96 = scalar_select %p93, %s94, %s95
      %p99 = pneg %p93
      %p100 = scmp.eq.s32.totalorder %s16, 1
      %p101 = por %p99, %p100
      %p102 = scmp.ne.s32.totalorder %s94, %s97
      %p103 = scmp.eq.s32.totalorder %s16, 0
      %p104 = por %p102, %p103
      %p105 = scmp.ne.s32.totalorder %s94, %s97
      %p106 = scmp.eq.s32.totalorder %s21, 1
      %p107 = por %p105, %p106
      %p108 = scmp.ne.s32.totalorder %s97, %s98
      %p109 = scmp.eq.s32.totalorder %s21, 0
      %p110 = por %p108, %p109
      %p111 = scmp.ne.s32.totalorder %s97, %s98
      %p112 = scmp.eq.s32.totalorder %s22, 1
      %p113 = por %p111, %p112
      %p115 = scmp.ne.s32.totalorder %s98, %s114
      %p116 = scmp.eq.s32.totalorder %s22, 0
      %p117 = por %p115, %p116
      %p118 = scmp.le.s32.totalorder 1, %s16
      %p119 = scmp.lt.s32.totalorder %s16, 3
      %p120 = pnand %p118, %p119
      %p121 = pneg %p120
      // Predicated region
      $region9: #{tpu_custom_call.1} parent=5 // pred_check
        _
      $region10: #{tpu_custom_call.1} parent=5 // pred_check_branch
        %123 = sbr.rel (%p120) target = $region12
      $region11: #{tpu_custom_call.1} parent=5 // pred_region
        %s124 = ssub.s32 %s16, 1
        // Predicated region
        $region13: #{tpu_custom_call.1} parent=11 // pred_check
          %p125 = pneg %p63
        $region14: #{tpu_custom_call.1} parent=11 // pred_check_branch
          %127 = sbr.rel (%p125) target = $region16
        $region15: #{tpu_custom_call.1} parent=11 // pred_region
          %129 = vsyncadd [#allocation7], 0
          %s130 = sshll.u32 %s1, 4
          %s131 = int_to_ptr.hbm [resolvable:$true] %s130
          %s132 = sshll.u32 [#allocation6], 4
          %s133 = int_to_ptr.vmem [resolvable:$true] %s132
          %138 = dma.hbm_to_vmem [thread:$0]  %s131, 7424, %s133, [#allocation7], 64, 64, 4
        $region16: #{tpu_custom_call.1} parent=11 // pred_fallthru
          _
        // Predicated region
        $region17: #{tpu_custom_call.1} parent=11 // pred_check
          %p139 = pneg %p84
        $region18: #{tpu_custom_call.1} parent=11 // pred_check_branch
          %141 = sbr.rel (%p139) target = $region20
        $region19: #{tpu_custom_call.1} parent=11 // pred_region
          %143 = vsyncadd [#allocation7], 0
          %s144 = sshll.u32 %s2, 4
          %s145 = int_to_ptr.hbm [resolvable:$true] %s144
          %s146 = sshll.u32 [#allocation8], 4
          %s147 = int_to_ptr.vmem [resolvable:$true] %s146
          %152 = dma.hbm_to_vmem [thread:$0]  %s145, 5120, %s147, [#allocation7], 128, 128, 8
        $region20: #{tpu_custom_call.1} parent=11 // pred_fallthru
          _
      $region12: #{tpu_custom_call.1} parent=5 // pred_fallthru
        _
      %p153 = scmp.lt.s32.totalorder %s16, 2
      // Predicated region
      $region21: #{tpu_custom_call.1} parent=5 // pred_check
        %p154 = pneg %p153
      $region22: #{tpu_custom_call.1} parent=5 // pred_check_branch
        %156 = sbr.rel (%p154) target = $region24
      $region23: #{tpu_custom_call.1} parent=5 // pred_region
        // Predicated region
        $region25: #{tpu_custom_call.1} parent=23 // pred_check
          %p157 = pneg %p36
        $region26: #{tpu_custom_call.1} parent=23 // pred_check_branch
          %159 = sbr.rel (%p157) target = $region28
        $region27: #{tpu_custom_call.1} parent=23 // pred_region
          %s160 = sand.u32 %s26, 1
          %s161 = scalar_lea.sflag [#allocation4], %s160
          %s162 = sand.u32 %s26, 1
          %s163 = smul.addr %s162, 16
          %s164 = scalar_lea.vmem [#allocation3], %s163
          %166 = vsyncadd %s161, 0
          %s167 = smul.addr %s16, 2
          %s168 = smul.addr %s167, 8
          %s169 = scalar_lea.hbm %s0, %s168
          %s170 = sshll.u32 %s169, 4
          %s171 = int_to_ptr.hbm [resolvable:$true] %s170
          %s172 = sshll.u32 %s164, 4
          %s173 = int_to_ptr.vmem [resolvable:$true] %s172
          %178 = dma.hbm_to_vmem [thread:$0]  %s171, 256, %s173, %s161, 128, 128, 8
        $region28: #{tpu_custom_call.1} parent=23 // pred_fallthru
          _
      $region24: #{tpu_custom_call.1} parent=5 // pred_fallthru
        _
      %p179 = scmp.le.s32.totalorder 1, %s16
      %p180 = scmp.lt.s32.totalorder %s16, 3
      %p181 = pnand %p179, %p180
      %p182 = pneg %p181
      // Predicated region
      $region29: #{tpu_custom_call.1} parent=5 // pred_check
        _
      $region30: #{tpu_custom_call.1} parent=5 // pred_check_branch
        %184 = sbr.rel (%p181) target = $region32
      $region31: #{tpu_custom_call.1} parent=5 // pred_region
        %s185 = ssub.s32 %s16, 1
        %s186 = sand.u32 %s29, 1
        %s187 = scalar_lea.sflag [#allocation4], %s186
        %s188 = sand.u32 %s29, 1
        %s189 = smul.addr %s188, 16
        %s190 = scalar_lea.vmem [#allocation3], %s189
        // Predicated region
        $region33: #{tpu_custom_call.1} parent=31 // pred_check
          %p191 = pneg %p42
        $region34: #{tpu_custom_call.1} parent=31 // pred_check_branch
          %193 = sbr.rel (%p191) target = $region36
        $region35: #{tpu_custom_call.1} parent=31 // pred_region
          %195 = dma.done %s187, 256
        $region36: #{tpu_custom_call.1} parent=31 // pred_fallthru
          _
        // Predicated region
        $region37: #{tpu_custom_call.1} parent=31 // pred_check
          %p196 = pneg %p63
        $region38: #{tpu_custom_call.1} parent=31 // pred_check_branch
          %198 = sbr.rel (%p196) target = $region40
        $region39: #{tpu_custom_call.1} parent=31 // pred_region
          %200 = dma.done [#allocation7], 7424
        $region40: #{tpu_custom_call.1} parent=31 // pred_fallthru
          _
        // Predicated region
        $region41: #{tpu_custom_call.1} parent=31 // pred_check
          %p201 = pneg %p84
        $region42: #{tpu_custom_call.1} parent=31 // pred_check_branch
          %203 = sbr.rel (%p201) target = $region44
        $region43: #{tpu_custom_call.1} parent=31 // pred_region
          %205 = dma.done [#allocation7], 5120
        $region44: #{tpu_custom_call.1} parent=31 // pred_fallthru
          _
        %s206 = sand.u32 %s29, 1
        %s207 = scalar_lea.sflag [#allocation4], %s206
        %s208 = sand.u32 %s29, 1
        %s209 = smul.addr %s208, 16
        %s210 = scalar_lea.vmem [#allocation3], %s209
        %p211 = pneg %p42
        %p212 = pneg %p39
        %p213 = pneg %p63
        %p214 = pneg %p60
        %p215 = pneg %p84
        %p216 = pneg %p81
        %p217 = pneg %p110
        %p218 = pneg %p107
        %s219 = sand.u32 %s97, 1
        %s220 = scalar_lea.sflag [#allocation5], %s219
        %s221 = sand.u32 %s97, 1
        %s222 = scalar_lea.vmem [#allocation9], %s221
        %v224 = vld [vmem:[%s190] sm:$0xff]
        %v225 = vld [vmem:[%s190 + $0x8] sm:$0xff]
        %v226 = vld [vmem:[#allocation6] sm:$0xf]
        %v227 = vld [vmem:[#allocation6 + $0x4] sm:$0xf]
        %v228 = vld [vmem:[#allocation6 + $0x8] sm:$0xf]
        %v229 = vld [vmem:[#allocation6 + $0xc] sm:$0xf]
        %v230 = vld [vmem:[#allocation6 + $0x10] sm:$0xf]
        %v231 = vld [vmem:[#allocation6 + $0x14] sm:$0xf]
        %v232 = vld [vmem:[#allocation6 + $0x18] sm:$0xf]
        %v233 = vld [vmem:[#allocation6 + $0x1c] sm:$0xf]
        %v234 = vld [vmem:[#allocation6 + $0x20] sm:$0xf]
        %v235 = vld [vmem:[#allocation6 + $0x24] sm:$0xf]
        %v236 = vld [vmem:[#allocation8] sm:$0x3]
        %v237 = vpack.c.bf16 %v224, %v224
        %v238 = vpack.c.bf16 %v225, %v225
        %v241 = vunpack.c.l.b16 %v237
        %v242 = vunpack.c.l.b16 %v238
        %v243 = vpack.c.b16 %v242, %v241
        %v244 = vrot.slane %v243, 7
        %vm245 = vcmask 1040384
        %v248 = vsel %vm245, 0, %v244
        %v249 = vsel %vm245, %v244, 0
        %vm250 = vsmask.f32 7424
        %v251 = vshrl.u32 %v248, 16
        %v253 = vshll.u32 %v248, 16
        %v255 = vrot.slane %v253, 1
        %v256 = vor.u32 %v251, %v255
        %v257 = vshll.u32 %v249, 16
        %v259 = vrot.slane %v257, 1
        %v260 = vsel %vm250, %v256, %v259
        %v263 = vunpack.c.l.b16 %v228
        %v264 = vunpack.c.l.b16 %v229
        %v265 = vpack.c.b16 %v264, %v263
        %vm267 = vcmask 130048
        %v269 = vsel %vm267, %v260, 0
        %271 = vmatpush.bf16.msra.mxu0 0
        %272 = vmatpush.bf16.msra.mxu0 0
        %273 = vmatpush.bf16.msra.mxu0 0
        %274 = vmatpush.bf16.msra.mxu0 0
        %275 = vmatpush.bf16.msra.mxu0 0
        %276 = vmatpush.bf16.msra.mxu0 0
        %277 = vmatpush.bf16.msra.mxu0 0
        %278 = vmatpush.bf16.msra.mxu0 %v265
        %279 = vmatmul.bf16.gmra.mxu0 %v269
        %v280 = vpop.f32.mrf.mxu0
        %v281 = vadd.f32 0.0, %v280
        %v282 = vpop.f32.mrf.mxu0
        %v283 = vadd.f32 0.0, %v282
        %284 = vdwg.mxu0
        %v287 = vunpack.c.l.b16 %v226
        %v288 = vunpack.c.l.b16 %v227
        %v289 = vpack.c.b16 %v288, %v287
        %v291 = vsel %vm267, %v248, 0
        %293 = vmatpush.bf16.msra.mxu0 0
        %294 = vmatpush.bf16.msra.mxu0 0
        %295 = vmatpush.bf16.msra.mxu0 0
        %296 = vmatpush.bf16.msra.mxu0 0
        %297 = vmatpush.bf16.msra.mxu0 0
        %298 = vmatpush.bf16.msra.mxu0 0
        %299 = vmatpush.bf16.msra.mxu0 0
        %300 = vmatpush.bf16.msra.mxu0 %v289
        %301 = vmatmul.bf16.gmra.mxu0 %v291
        %v302 = vpop.f32.mrf.mxu0
        %v303 = vadd.f32 %v281, %v302
        %v304 = vpop.f32.mrf.mxu0
        %v305 = vadd.f32 %v283, %v304
        %306 = vdwg.mxu0
        %vm309 = vcmask 1046528
        %v310 = vrot.slane %v248, 1
        %v311 = vrot.slane %v249, 1
        %v312 = vsel %vm309, %v310, %v311
        %v315 = vunpack.c.l.b16 %v230
        %v316 = vunpack.c.l.b16 %v231
        %v317 = vpack.c.b16 %v316, %v315
        %v320 = vsel %vm267, %v312, 0
        %322 = vmatpush.bf16.msra.mxu0 0
        %323 = vmatpush.bf16.msra.mxu0 0
        %324 = vmatpush.bf16.msra.mxu0 0
        %325 = vmatpush.bf16.msra.mxu0 0
        %326 = vmatpush.bf16.msra.mxu0 0
        %327 = vmatpush.bf16.msra.mxu0 0
        %328 = vmatpush.bf16.msra.mxu0 0
        %329 = vmatpush.bf16.msra.mxu0 %v317
        %330 = vmatmul.bf16.gmra.mxu0 %v320
        %v331 = vpop.f32.mrf.mxu0
        %v332 = vadd.f32 0.0, %v331
        %v333 = vpop.f32.mrf.mxu0
        %v334 = vadd.f32 0.0, %v333
        %335 = vdwg.mxu0
        %v336 = vadd.f32 %v303, %v332
        %v337 = vadd.f32 %v305, %v334
        %vm338 = vsmask.f32 6400
        %v339 = vrot.slane %v251, 1
        %v340 = vrot.slane %v253, 2
        %v341 = vor.u32 %v339, %v340
        %v342 = vshrl.u32 %v249, 16
        %v344 = vrot.slane %v342, 1
        %v345 = vrot.slane %v257, 2
        %v346 = vor.u32 %v344, %v345
        %v347 = vsel %vm338, %v341, %v346
        %v350 = vunpack.c.l.b16 %v232
        %v351 = vunpack.c.l.b16 %v233
        %v352 = vpack.c.b16 %v351, %v350
        %v355 = vsel %vm267, %v347, 0
        %357 = vmatpush.bf16.msra.mxu0 0
        %358 = vmatpush.bf16.msra.mxu0 0
        %359 = vmatpush.bf16.msra.mxu0 0
        %360 = vmatpush.bf16.msra.mxu0 0
        %361 = vmatpush.bf16.msra.mxu0 0
        %362 = vmatpush.bf16.msra.mxu0 0
        %363 = vmatpush.bf16.msra.mxu0 0
        %364 = vmatpush.bf16.msra.mxu0 %v352
        %365 = vmatmul.bf16.gmra.mxu0 %v355
        %v366 = vpop.f32.mrf.mxu0
        %v367 = vadd.f32 0.0, %v366
        %v368 = vpop.f32.mrf.mxu0
        %v369 = vadd.f32 0.0, %v368
        %370 = vdwg.mxu0
        %v371 = vadd.f32 %v336, %v367
        %v372 = vadd.f32 %v337, %v369
        %vm373 = vcmask 1045504
        %v374 = vrot.slane %v248, 2
        %v375 = vrot.slane %v249, 2
        %v376 = vsel %vm373, %v374, %v375
        %v379 = vunpack.c.l.b16 %v234
        %v380 = vunpack.c.l.b16 %v235
        %v381 = vpack.c.b16 %v380, %v379
        %v384 = vsel %vm267, %v376, 0
        %386 = vmatpush.bf16.msra.mxu0 0
        %387 = vmatpush.bf16.msra.mxu0 0
        %388 = vmatpush.bf16.msra.mxu0 0
        %389 = vmatpush.bf16.msra.mxu0 0
        %390 = vmatpush.bf16.msra.mxu0 0
        %391 = vmatpush.bf16.msra.mxu0 0
        %392 = vmatpush.bf16.msra.mxu0 0
        %393 = vmatpush.bf16.msra.mxu0 %v381
        %394 = vmatmul.bf16.gmra.mxu0 %v384
        %v395 = vpop.f32.mrf.mxu0
        %v396 = vadd.f32 0.0, %v395
        %v397 = vpop.f32.mrf.mxu0
        %v398 = vadd.f32 0.0, %v397
        %399 = vdwg.mxu0
        %v400 = vadd.f32 %v371, %v396
        %v401 = vadd.f32 %v372, %v398
        %v402 = vmax.f32 %v400, 0.0
        %v403 = vmax.f32 %v401, 0.0
        %v404 = vperm.slane %v236, 0
        %v405 = vmul.f32 %v402, %v404
        %v406 = vmul.f32 %v403, %v404
        %v407 = vperm.slane %v236, 1
        %v408 = vadd.f32 %v405, %v407
        %v409 = vadd.f32 %v406, %v407
        %v410 = vld [vmem:[#allocation6 + $0x28] sm:$0xf]
        %v411 = vld [vmem:[#allocation6 + $0x2c] sm:$0xf]
        %v412 = vld [vmem:[#allocation8 + $0x8] sm:$0x3]
        %v413 = vpack.c.bf16 %v409, %v408
        %v416 = vunpack.c.l.b16 %v410
        %v417 = vunpack.c.l.b16 %v411
        %v418 = vpack.c.b16 %v417, %v416
        %v421 = vsel %vm267, %v413, 0
        %423 = vmatpush.bf16.msra.mxu0 0
        %424 = vmatpush.bf16.msra.mxu0 0
        %425 = vmatpush.bf16.msra.mxu0 0
        %426 = vmatpush.bf16.msra.mxu0 0
        %427 = vmatpush.bf16.msra.mxu0 0
        %428 = vmatpush.bf16.msra.mxu0 0
        %429 = vmatpush.bf16.msra.mxu0 0
        %430 = vmatpush.bf16.msra.mxu0 %v418
        %431 = vmatmul.bf16.gmra.mxu0 %v421
        %v432 = vpop.f32.mrf.mxu0
        %v433 = vadd.f32 0.0, %v432
        %v434 = vpop.f32.mrf.mxu0
        %v435 = vadd.f32 0.0, %v434
        %436 = vdwg.mxu0
        %v437 = vmax.f32 %v433, 0.0
        %v438 = vmax.f32 %v435, 0.0
        %v439 = vperm.slane %v412, 0
        %v440 = vmul.f32 %v437, %v439
        %v441 = vmul.f32 %v438, %v439
        %v442 = vperm.slane %v412, 1
        %v443 = vadd.f32 %v440, %v442
        %v444 = vadd.f32 %v441, %v442
        %v445 = vpack.c.bf16 %v443, %v443
        %v446 = vpack.c.bf16 %v444, %v444
        %v447 = vld [vmem:[#allocation6 + $0x30] sm:$0x7]
        %v450 = vunpack.c.l.b16 %v445
        %v451 = vunpack.c.l.b16 %v446
        %v452 = vpack.c.b16 %v451, %v450
        %v453 = vrot.slane %v452, 7
        %v455 = vsel %vm245, 0, %v453
        %v456 = vsel %vm245, %v453, 0
        %v459 = vrot.slane %v455, 1
        %v460 = vrot.slane %v456, 1
        %v461 = vsel %vm309, %v459, %v460
        %v463 = vunpack.c.l.b16 %v447
        %v464 = vpack.c.b16 %v463, %v463
        %v465 = vrot.slane %v464, 1
        %vm466 = vcmask 15360
        %v468 = vsel %vm466, %v461, 0
        %v471 = vsel %vm245, %v465, 0
        %473 = vmatpush.bf16.msra.mxu0 0
        %474 = vmatpush.bf16.msra.mxu0 0
        %475 = vmatpush.bf16.msra.mxu0 0
        %476 = vmatpush.bf16.msra.mxu0 0
        %477 = vmatpush.bf16.msra.mxu0 0
        %478 = vmatpush.bf16.msra.mxu0 0
        %479 = vmatpush.bf16.msra.mxu0 0
        %480 = vmatpush.bf16.msra.mxu0 %v471
        %481 = vmatmul.bf16.gmra.mxu0 %v468
        %v482 = vpop.f32.mrf.mxu0
        %v483 = vadd.f32 0.0, %v482
        %v484 = vpop.f32.mrf.mxu0
        %v485 = vadd.f32 0.0, %v484
        %486 = vdwg.mxu0
        %v487 = vsel %vm466, %v455, 0
        %v490 = vsel %vm245, %v447, 0
        %492 = vmatpush.bf16.msra.mxu0 0
        %493 = vmatpush.bf16.msra.mxu0 0
        %494 = vmatpush.bf16.msra.mxu0 0
        %495 = vmatpush.bf16.msra.mxu0 0
        %496 = vmatpush.bf16.msra.mxu0 0
        %497 = vmatpush.bf16.msra.mxu0 0
        %498 = vmatpush.bf16.msra.mxu0 0
        %499 = vmatpush.bf16.msra.mxu0 %v490
        %500 = vmatmul.bf16.gmra.mxu0 %v487
        %v501 = vpop.f32.mrf.mxu0
        %v502 = vadd.f32 %v483, %v501
        %v503 = vpop.f32.mrf.mxu0
        %v504 = vadd.f32 %v485, %v503
        %505 = vdwg.mxu0
        %v506 = vrot.slane %v455, 2
        %v507 = vrot.slane %v456, 2
        %v508 = vsel %vm373, %v506, %v507
        %v509 = vrot.slane %v464, 2
        %v511 = vsel %vm466, %v508, 0
        %v514 = vsel %vm245, %v509, 0
        %516 = vmatpush.bf16.msra.mxu0 0
        %517 = vmatpush.bf16.msra.mxu0 0
        %518 = vmatpush.bf16.msra.mxu0 0
        %519 = vmatpush.bf16.msra.mxu0 0
        %520 = vmatpush.bf16.msra.mxu0 0
        %521 = vmatpush.bf16.msra.mxu0 0
        %522 = vmatpush.bf16.msra.mxu0 0
        %523 = vmatpush.bf16.msra.mxu0 %v514
        %524 = vmatmul.bf16.gmra.mxu0 %v511
        %v525 = vpop.f32.mrf.mxu0
        %v526 = vadd.f32 0.0, %v525
        %v527 = vpop.f32.mrf.mxu0
        %v528 = vadd.f32 0.0, %v527
        %529 = vdwg.mxu0
        %v530 = vadd.f32 %v502, %v526
        %v531 = vadd.f32 %v504, %v528
        %v532 = vld [vmem:[#allocation8 + $0x10] sm:$0x3]
        %v533 = vmax.f32 %v530, 0.0
        %v534 = vmax.f32 %v531, 0.0
        %v535 = vperm.slane %v532, 0
        %v536 = vmul.f32 %v533, %v535
        %v537 = vmul.f32 %v534, %v535
        %v538 = vperm.slane %v532, 1
        %v539 = vadd.f32 %v536, %v538
        %v540 = vadd.f32 %v537, %v538
        %v541 = vpack.c.bf16 %v539, %v539
        %v542 = vpack.c.bf16 %v540, %v540
        %vm543 = vcmask 11264
        %544 = vst.msk [vmem:[#allocation2] sm:$0xf] %vm543, %v541
        %545 = vst.msk [vmem:[#allocation2 + $0x4] sm:$0xf] %vm543, %v542
        %v546 = vunpack.c.l.bf16 %v541
        %v547 = vunpack.c.l.bf16 %v542
        %v548 = vunpack.c.l.bf16 %v445
        %v549 = vunpack.c.l.bf16 %v446
        %552 = vrot.lane.b32.xlu0 %v548, 126
        %v553 = vpop.permute.xlu0 %552
        %554 = vrot.lane.b32.xlu0 %v549, 126
        %v555 = vpop.permute.xlu0 %554
        %v558 = vadd.f32 %v546, %v553
        %v559 = vadd.f32 %v547, %v555
        %v560 = vpack.c.bf16 %v558, %v558
        %v561 = vpack.c.bf16 %v559, %v559
        %v562 = vld [vmem:[#allocation6 + $0x38] sm:$0x7]
        %v565 = vunpack.c.l.b16 %v560
        %v566 = vunpack.c.l.b16 %v561
        %v567 = vpack.c.b16 %v566, %v565
        %v568 = vrot.slane %v567, 7
        %v570 = vsel %vm245, 0, %v568
        %v571 = vsel %vm245, %v568, 0
        %v574 = vrot.slane %v570, 1
        %v575 = vrot.slane %v571, 1
        %v576 = vsel %vm309, %v574, %v575
        %v578 = vunpack.c.l.b16 %v562
        %v579 = vpack.c.b16 %v578, %v578
        %v580 = vrot.slane %v579, 1
        %v582 = vsel %vm466, %v576, 0
        %v585 = vsel %vm245, %v580, 0
        %587 = vmatpush.bf16.msra.mxu0 0
        %588 = vmatpush.bf16.msra.mxu0 0
        %589 = vmatpush.bf16.msra.mxu0 0
        %590 = vmatpush.bf16.msra.mxu0 0
        %591 = vmatpush.bf16.msra.mxu0 0
        %592 = vmatpush.bf16.msra.mxu0 0
        %593 = vmatpush.bf16.msra.mxu0 0
        %594 = vmatpush.bf16.msra.mxu0 %v585
        %595 = vmatmul.bf16.gmra.mxu0 %v582
        %v596 = vpop.f32.mrf.mxu0
        %v597 = vadd.f32 0.0, %v596
        %v598 = vpop.f32.mrf.mxu0
        %v599 = vadd.f32 0.0, %v598
        %600 = vdwg.mxu0
        %v601 = vsel %vm466, %v570, 0
        %v604 = vsel %vm245, %v562, 0
        %606 = vmatpush.bf16.msra.mxu0 0
        %607 = vmatpush.bf16.msra.mxu0 0
        %608 = vmatpush.bf16.msra.mxu0 0
        %609 = vmatpush.bf16.msra.mxu0 0
        %610 = vmatpush.bf16.msra.mxu0 0
        %611 = vmatpush.bf16.msra.mxu0 0
        %612 = vmatpush.bf16.msra.mxu0 0
        %613 = vmatpush.bf16.msra.mxu0 %v604
        %614 = vmatmul.bf16.gmra.mxu0 %v601
        %v615 = vpop.f32.mrf.mxu0
        %v616 = vadd.f32 %v597, %v615
        %v617 = vpop.f32.mrf.mxu0
        %v618 = vadd.f32 %v599, %v617
        %619 = vdwg.mxu0
        %v620 = vrot.slane %v570, 2
        %v621 = vrot.slane %v571, 2
        %v622 = vsel %vm373, %v620, %v621
        %v623 = vrot.slane %v579, 2
        %v625 = vsel %vm466, %v622, 0
        %v628 = vsel %vm245, %v623, 0
        %630 = vmatpush.bf16.msra.mxu0 0
        %631 = vmatpush.bf16.msra.mxu0 0
        %632 = vmatpush.bf16.msra.mxu0 0
        %633 = vmatpush.bf16.msra.mxu0 0
        %634 = vmatpush.bf16.msra.mxu0 0
        %635 = vmatpush.bf16.msra.mxu0 0
        %636 = vmatpush.bf16.msra.mxu0 0
        %637 = vmatpush.bf16.msra.mxu0 %v628
        %638 = vmatmul.bf16.gmra.mxu0 %v625
        %v639 = vpop.f32.mrf.mxu0
        %v640 = vadd.f32 0.0, %v639
        %v641 = vpop.f32.mrf.mxu0
        %v642 = vadd.f32 0.0, %v641
        %643 = vdwg.mxu0
        %v644 = vadd.f32 %v616, %v640
        %v645 = vadd.f32 %v618, %v642
        %v646 = vld [vmem:[#allocation8 + $0x18] sm:$0x3]
        %v647 = vmax.f32 %v644, 0.0
        %v648 = vmax.f32 %v645, 0.0
        %v649 = vperm.slane %v646, 0
        %v650 = vmul.f32 %v647, %v649
        %v651 = vmul.f32 %v648, %v649
        %v652 = vperm.slane %v646, 1
        %v653 = vadd.f32 %v650, %v652
        %v654 = vadd.f32 %v651, %v652
        %v655 = vpack.c.bf16 %v653, %v653
        %v656 = vpack.c.bf16 %v654, %v654
        %659 = vrot.lane.b32.xlu0 %v655, 2
        %v660 = vpop.permute.xlu0 %659
        %661 = vrot.lane.b32.xlu0 %v656, 2
        %v662 = vpop.permute.xlu0 %661
        %vm665 = vcmask 27664
        %666 = vst.msk [vmem:[#allocation2] sm:$0xf] %vm665, %v660
        %667 = vst.msk [vmem:[#allocation2 + $0x4] sm:$0xf] %vm665, %v662
        %v668 = vunpack.c.l.bf16 %v655
        %v669 = vunpack.c.l.bf16 %v656
        %670 = vrot.lane.b32.xlu0 %v548, 124
        %v671 = vpop.permute.xlu0 %670
        %672 = vrot.lane.b32.xlu0 %v549, 124
        %v673 = vpop.permute.xlu0 %672
        %v676 = vadd.f32 %v668, %v671
        %v677 = vadd.f32 %v669, %v673
        %v678 = vpack.c.bf16 %v676, %v676
        %v679 = vpack.c.bf16 %v677, %v677
        %v680 = vld [vmem:[#allocation6 + $0x40] sm:$0x7]
        %v683 = vunpack.c.l.b16 %v678
        %v684 = vunpack.c.l.b16 %v679
        %v685 = vpack.c.b16 %v684, %v683
        %v686 = vrot.slane %v685, 7
        %v688 = vsel %vm245, 0, %v686
        %v689 = vsel %vm245, %v686, 0
        %v692 = vrot.slane %v688, 1
        %v693 = vrot.slane %v689, 1
        %v694 = vsel %vm309, %v692, %v693
        %v696 = vunpack.c.l.b16 %v680
        %v697 = vpack.c.b16 %v696, %v696
        %v698 = vrot.slane %v697, 1
        %v700 = vsel %vm466, %v694, 0
        %v703 = vsel %vm245, %v698, 0
        %705 = vmatpush.bf16.msra.mxu0 0
        %706 = vmatpush.bf16.msra.mxu0 0
        %707 = vmatpush.bf16.msra.mxu0 0
        %708 = vmatpush.bf16.msra.mxu0 0
        %709 = vmatpush.bf16.msra.mxu0 0
        %710 = vmatpush.bf16.msra.mxu0 0
        %711 = vmatpush.bf16.msra.mxu0 0
        %712 = vmatpush.bf16.msra.mxu0 %v703
        %713 = vmatmul.bf16.gmra.mxu0 %v700
        %v714 = vpop.f32.mrf.mxu0
        %v715 = vadd.f32 0.0, %v714
        %v716 = vpop.f32.mrf.mxu0
        %v717 = vadd.f32 0.0, %v716
        %718 = vdwg.mxu0
        %v719 = vsel %vm466, %v688, 0
        %v722 = vsel %vm245, %v680, 0
        %724 = vmatpush.bf16.msra.mxu0 0
        %725 = vmatpush.bf16.msra.mxu0 0
        %726 = vmatpush.bf16.msra.mxu0 0
        %727 = vmatpush.bf16.msra.mxu0 0
        %728 = vmatpush.bf16.msra.mxu0 0
        %729 = vmatpush.bf16.msra.mxu0 0
        %730 = vmatpush.bf16.msra.mxu0 0
        %731 = vmatpush.bf16.msra.mxu0 %v722
        %732 = vmatmul.bf16.gmra.mxu0 %v719
        %v733 = vpop.f32.mrf.mxu0
        %v734 = vadd.f32 %v715, %v733
        %v735 = vpop.f32.mrf.mxu0
        %v736 = vadd.f32 %v717, %v735
        %737 = vdwg.mxu0
        %v738 = vrot.slane %v688, 2
        %v739 = vrot.slane %v689, 2
        %v740 = vsel %vm373, %v738, %v739
        %v741 = vrot.slane %v697, 2
        %v743 = vsel %vm466, %v740, 0
        %v746 = vsel %vm245, %v741, 0
        %748 = vmatpush.bf16.msra.mxu0 0
        %749 = vmatpush.bf16.msra.mxu0 0
        %750 = vmatpush.bf16.msra.mxu0 0
        %751 = vmatpush.bf16.msra.mxu0 0
        %752 = vmatpush.bf16.msra.mxu0 0
        %753 = vmatpush.bf16.msra.mxu0 0
        %754 = vmatpush.bf16.msra.mxu0 0
        %755 = vmatpush.bf16.msra.mxu0 %v746
        %756 = vmatmul.bf16.gmra.mxu0 %v743
        %v757 = vpop.f32.mrf.mxu0
        %v758 = vadd.f32 0.0, %v757
        %v759 = vpop.f32.mrf.mxu0
        %v760 = vadd.f32 0.0, %v759
        %761 = vdwg.mxu0
        %v762 = vadd.f32 %v734, %v758
        %v763 = vadd.f32 %v736, %v760
        %v764 = vld [vmem:[#allocation8 + $0x20] sm:$0x3]
        %v765 = vmax.f32 %v762, 0.0
        %v766 = vmax.f32 %v763, 0.0
        %v767 = vperm.slane %v764, 0
        %v768 = vmul.f32 %v765, %v767
        %v769 = vmul.f32 %v766, %v767
        %v770 = vperm.slane %v764, 1
        %v771 = vadd.f32 %v768, %v770
        %v772 = vadd.f32 %v769, %v770
        %v773 = vpack.c.bf16 %v771, %v771
        %v774 = vpack.c.bf16 %v772, %v772
        %777 = vrot.lane.b32.xlu0 %v773, 4
        %v778 = vpop.permute.xlu0 %777
        %779 = vrot.lane.b32.xlu0 %v774, 4
        %v780 = vpop.permute.xlu0 %779
        %vm783 = vcmask 44064
        %784 = vst.msk [vmem:[#allocation2] sm:$0xf] %vm783, %v778
        %785 = vst.msk [vmem:[#allocation2 + $0x4] sm:$0xf] %vm783, %v780
        %v786 = vunpack.c.l.bf16 %v773
        %v787 = vunpack.c.l.bf16 %v774
        %788 = vrot.lane.b32.xlu0 %v548, 122
        %v789 = vpop.permute.xlu0 %788
        %790 = vrot.lane.b32.xlu0 %v549, 122
        %v791 = vpop.permute.xlu0 %790
        %v794 = vadd.f32 %v786, %v789
        %v795 = vadd.f32 %v787, %v791
        %v796 = vpack.c.bf16 %v794, %v794
        %v797 = vpack.c.bf16 %v795, %v795
        %v798 = vld [vmem:[#allocation6 + $0x48] sm:$0x7]
        %v801 = vunpack.c.l.b16 %v796
        %v802 = vunpack.c.l.b16 %v797
        %v803 = vpack.c.b16 %v802, %v801
        %v804 = vrot.slane %v803, 7
        %v806 = vsel %vm245, 0, %v804
        %v807 = vsel %vm245, %v804, 0
        %v810 = vrot.slane %v806, 1
        %v811 = vrot.slane %v807, 1
        %v812 = vsel %vm309, %v810, %v811
        %v814 = vunpack.c.l.b16 %v798
        %v815 = vpack.c.b16 %v814, %v814
        %v816 = vrot.slane %v815, 1
        %v818 = vsel %vm466, %v812, 0
        %v821 = vsel %vm245, %v816, 0
        %823 = vmatpush.bf16.msra.mxu0 0
        %824 = vmatpush.bf16.msra.mxu0 0
        %825 = vmatpush.bf16.msra.mxu0 0
        %826 = vmatpush.bf16.msra.mxu0 0
        %827 = vmatpush.bf16.msra.mxu0 0
        %828 = vmatpush.bf16.msra.mxu0 0
        %829 = vmatpush.bf16.msra.mxu0 0
        %830 = vmatpush.bf16.msra.mxu0 %v821
        %831 = vmatmul.bf16.gmra.mxu0 %v818
        %v832 = vpop.f32.mrf.mxu0
        %v833 = vadd.f32 0.0, %v832
        %v834 = vpop.f32.mrf.mxu0
        %v835 = vadd.f32 0.0, %v834
        %836 = vdwg.mxu0
        %v837 = vsel %vm466, %v806, 0
        %v840 = vsel %vm245, %v798, 0
        %842 = vmatpush.bf16.msra.mxu0 0
        %843 = vmatpush.bf16.msra.mxu0 0
        %844 = vmatpush.bf16.msra.mxu0 0
        %845 = vmatpush.bf16.msra.mxu0 0
        %846 = vmatpush.bf16.msra.mxu0 0
        %847 = vmatpush.bf16.msra.mxu0 0
        %848 = vmatpush.bf16.msra.mxu0 0
        %849 = vmatpush.bf16.msra.mxu0 %v840
        %850 = vmatmul.bf16.gmra.mxu0 %v837
        %v851 = vpop.f32.mrf.mxu0
        %v852 = vadd.f32 %v833, %v851
        %v853 = vpop.f32.mrf.mxu0
        %v854 = vadd.f32 %v835, %v853
        %855 = vdwg.mxu0
        %v856 = vrot.slane %v806, 2
        %v857 = vrot.slane %v807, 2
        %v858 = vsel %vm373, %v856, %v857
        %v859 = vrot.slane %v815, 2
        %v861 = vsel %vm466, %v858, 0
        %v864 = vsel %vm245, %v859, 0
        %866 = vmatpush.bf16.msra.mxu0 0
        %867 = vmatpush.bf16.msra.mxu0 0
        %868 = vmatpush.bf16.msra.mxu0 0
        %869 = vmatpush.bf16.msra.mxu0 0
        %870 = vmatpush.bf16.msra.mxu0 0
        %871 = vmatpush.bf16.msra.mxu0 0
        %872 = vmatpush.bf16.msra.mxu0 0
        %873 = vmatpush.bf16.msra.mxu0 %v864
        %874 = vmatmul.bf16.gmra.mxu0 %v861
        %v875 = vpop.f32.mrf.mxu0
        %v876 = vadd.f32 0.0, %v875
        %v877 = vpop.f32.mrf.mxu0
        %v878 = vadd.f32 0.0, %v877
        %879 = vdwg.mxu0
        %v880 = vadd.f32 %v852, %v876
        %v881 = vadd.f32 %v854, %v878
        %v882 = vld [vmem:[#allocation8 + $0x28] sm:$0x3]
        %v883 = vmax.f32 %v880, 0.0
        %v884 = vmax.f32 %v881, 0.0
        %v885 = vperm.slane %v882, 0
        %v886 = vmul.f32 %v883, %v885
        %v887 = vmul.f32 %v884, %v885
        %v888 = vperm.slane %v882, 1
        %v889 = vadd.f32 %v886, %v888
        %v890 = vadd.f32 %v887, %v888
        %v891 = vpack.c.bf16 %v889, %v889
        %v892 = vpack.c.bf16 %v890, %v890
        %895 = vrot.lane.b32.xlu0 %v891, 6
        %v896 = vpop.permute.xlu0 %895
        %897 = vrot.lane.b32.xlu0 %v892, 6
        %v898 = vpop.permute.xlu0 %897
        %vm901 = vcmask 60464
        %902 = vst.msk [vmem:[#allocation2] sm:$0xf] %vm901, %v896
        %903 = vst.msk [vmem:[#allocation2 + $0x4] sm:$0xf] %vm901, %v898
        %v904 = vunpack.c.l.bf16 %v891
        %v905 = vunpack.c.l.bf16 %v892
        %906 = vrot.lane.b32.xlu0 %v548, 120
        %v907 = vpop.permute.xlu0 %906
        %908 = vrot.lane.b32.xlu0 %v549, 120
        %v909 = vpop.permute.xlu0 %908
        %v912 = vadd.f32 %v904, %v907
        %v913 = vadd.f32 %v905, %v909
        %v914 = vpack.c.bf16 %v912, %v912
        %v915 = vpack.c.bf16 %v913, %v913
        %v916 = vld [vmem:[#allocation6 + $0x50] sm:$0x7]
        %v919 = vunpack.c.l.b16 %v914
        %v920 = vunpack.c.l.b16 %v915
        %v921 = vpack.c.b16 %v920, %v919
        %v922 = vrot.slane %v921, 7
        %v924 = vsel %vm245, 0, %v922
        %v925 = vsel %vm245, %v922, 0
        %v928 = vrot.slane %v924, 1
        %v929 = vrot.slane %v925, 1
        %v930 = vsel %vm309, %v928, %v929
        %v932 = vunpack.c.l.b16 %v916
        %v933 = vpack.c.b16 %v932, %v932
        %v934 = vrot.slane %v933, 1
        %v936 = vsel %vm466, %v930, 0
        %v939 = vsel %vm245, %v934, 0
        %941 = vmatpush.bf16.msra.mxu0 0
        %942 = vmatpush.bf16.msra.mxu0 0
        %943 = vmatpush.bf16.msra.mxu0 0
        %944 = vmatpush.bf16.msra.mxu0 0
        %945 = vmatpush.bf16.msra.mxu0 0
        %946 = vmatpush.bf16.msra.mxu0 0
        %947 = vmatpush.bf16.msra.mxu0 0
        %948 = vmatpush.bf16.msra.mxu0 %v939
        %949 = vmatmul.bf16.gmra.mxu0 %v936
        %v950 = vpop.f32.mrf.mxu0
        %v951 = vadd.f32 0.0, %v950
        %v952 = vpop.f32.mrf.mxu0
        %v953 = vadd.f32 0.0, %v952
        %954 = vdwg.mxu0
        %v955 = vsel %vm466, %v924, 0
        %v958 = vsel %vm245, %v916, 0
        %960 = vmatpush.bf16.msra.mxu0 0
        %961 = vmatpush.bf16.msra.mxu0 0
        %962 = vmatpush.bf16.msra.mxu0 0
        %963 = vmatpush.bf16.msra.mxu0 0
        %964 = vmatpush.bf16.msra.mxu0 0
        %965 = vmatpush.bf16.msra.mxu0 0
        %966 = vmatpush.bf16.msra.mxu0 0
        %967 = vmatpush.bf16.msra.mxu0 %v958
        %968 = vmatmul.bf16.gmra.mxu0 %v955
        %v969 = vpop.f32.mrf.mxu0
        %v970 = vadd.f32 %v951, %v969
        %v971 = vpop.f32.mrf.mxu0
        %v972 = vadd.f32 %v953, %v971
        %973 = vdwg.mxu0
        %v974 = vrot.slane %v924, 2
        %v975 = vrot.slane %v925, 2
        %v976 = vsel %vm373, %v974, %v975
        %v977 = vrot.slane %v933, 2
        %v979 = vsel %vm466, %v976, 0
        %v982 = vsel %vm245, %v977, 0
        %984 = vmatpush.bf16.msra.mxu0 0
        %985 = vmatpush.bf16.msra.mxu0 0
        %986 = vmatpush.bf16.msra.mxu0 0
        %987 = vmatpush.bf16.msra.mxu0 0
        %988 = vmatpush.bf16.msra.mxu0 0
        %989 = vmatpush.bf16.msra.mxu0 0
        %990 = vmatpush.bf16.msra.mxu0 0
        %991 = vmatpush.bf16.msra.mxu0 %v982
        %992 = vmatmul.bf16.gmra.mxu0 %v979
        %v993 = vpop.f32.mrf.mxu0
        %v994 = vadd.f32 0.0, %v993
        %v995 = vpop.f32.mrf.mxu0
        %v996 = vadd.f32 0.0, %v995
        %997 = vdwg.mxu0
        %v998 = vadd.f32 %v970, %v994
        %v999 = vadd.f32 %v972, %v996
        %v1000 = vld [vmem:[#allocation8 + $0x30] sm:$0x3]
        %v1001 = vmax.f32 %v998, 0.0
        %v1002 = vmax.f32 %v999, 0.0
        %v1003 = vperm.slane %v1000, 0
        %v1004 = vmul.f32 %v1001, %v1003
        %v1005 = vmul.f32 %v1002, %v1003
        %v1006 = vperm.slane %v1000, 1
        %v1007 = vadd.f32 %v1004, %v1006
        %v1008 = vadd.f32 %v1005, %v1006
        %v1009 = vpack.c.bf16 %v1007, %v1007
        %v1010 = vpack.c.bf16 %v1008, %v1008
        %1013 = vrot.lane.b32.xlu0 %v1009, 8
        %v1014 = vpop.permute.xlu0 %1013
        %1015 = vrot.lane.b32.xlu0 %v1010, 8
        %v1016 = vpop.permute.xlu0 %1015
        %vm1019 = vcmask 76864
        %1020 = vst.msk [vmem:[#allocation2] sm:$0xf] %vm1019, %v1014
        %1021 = vst.msk [vmem:[#allocation2 + $0x4] sm:$0xf] %vm1019, %v1016
        %v1022 = vunpack.c.l.bf16 %v1009
        %v1023 = vunpack.c.l.bf16 %v1010
        %1024 = vrot.lane.b32.xlu0 %v548, 118
        %v1025 = vpop.permute.xlu0 %1024
        %1026 = vrot.lane.b32.xlu0 %v549, 118
        %v1027 = vpop.permute.xlu0 %1026
        %v1030 = vadd.f32 %v1022, %v1025
        %v1031 = vadd.f32 %v1023, %v1027
        %v1032 = vpack.c.bf16 %v1030, %v1030
        %v1033 = vpack.c.bf16 %v1031, %v1031
        %v1034 = vld [vmem:[#allocation6 + $0x58] sm:$0x7]
        %v1037 = vunpack.c.l.b16 %v1032
        %v1038 = vunpack.c.l.b16 %v1033
        %v1039 = vpack.c.b16 %v1038, %v1037
        %v1040 = vrot.slane %v1039, 7
        %v1042 = vsel %vm245, 0, %v1040
        %v1043 = vsel %vm245, %v1040, 0
        %v1046 = vrot.slane %v1042, 1
        %v1047 = vrot.slane %v1043, 1
        %v1048 = vsel %vm309, %v1046, %v1047
        %v1050 = vunpack.c.l.b16 %v1034
        %v1051 = vpack.c.b16 %v1050, %v1050
        %v1052 = vrot.slane %v1051, 1
        %v1054 = vsel %vm466, %v1048, 0
        %v1057 = vsel %vm245, %v1052, 0
        %1059 = vmatpush.bf16.msra.mxu0 0
        %1060 = vmatpush.bf16.msra.mxu0 0
        %1061 = vmatpush.bf16.msra.mxu0 0
        %1062 = vmatpush.bf16.msra.mxu0 0
        %1063 = vmatpush.bf16.msra.mxu0 0
        %1064 = vmatpush.bf16.msra.mxu0 0
        %1065 = vmatpush.bf16.msra.mxu0 0
        %1066 = vmatpush.bf16.msra.mxu0 %v1057
        %1067 = vmatmul.bf16.gmra.mxu0 %v1054
        %v1068 = vpop.f32.mrf.mxu0
        %v1069 = vadd.f32 0.0, %v1068
        %v1070 = vpop.f32.mrf.mxu0
        %v1071 = vadd.f32 0.0, %v1070
        %1072 = vdwg.mxu0
        %v1073 = vsel %vm466, %v1042, 0
        %v1076 = vsel %vm245, %v1034, 0
        %1078 = vmatpush.bf16.msra.mxu0 0
        %1079 = vmatpush.bf16.msra.mxu0 0
        %1080 = vmatpush.bf16.msra.mxu0 0
        %1081 = vmatpush.bf16.msra.mxu0 0
        %1082 = vmatpush.bf16.msra.mxu0 0
        %1083 = vmatpush.bf16.msra.mxu0 0
        %1084 = vmatpush.bf16.msra.mxu0 0
        %1085 = vmatpush.bf16.msra.mxu0 %v1076
        %1086 = vmatmul.bf16.gmra.mxu0 %v1073
        %v1087 = vpop.f32.mrf.mxu0
        %v1088 = vadd.f32 %v1069, %v1087
        %v1089 = vpop.f32.mrf.mxu0
        %v1090 = vadd.f32 %v1071, %v1089
        %1091 = vdwg.mxu0
        %v1092 = vrot.slane %v1042, 2
        %v1093 = vrot.slane %v1043, 2
        %v1094 = vsel %vm373, %v1092, %v1093
        %v1095 = vrot.slane %v1051, 2
        %v1097 = vsel %vm466, %v1094, 0
        %v1100 = vsel %vm245, %v1095, 0
        %1102 = vmatpush.bf16.msra.mxu0 0
        %1103 = vmatpush.bf16.msra.mxu0 0
        %1104 = vmatpush.bf16.msra.mxu0 0
        %1105 = vmatpush.bf16.msra.mxu0 0
        %1106 = vmatpush.bf16.msra.mxu0 0
        %1107 = vmatpush.bf16.msra.mxu0 0
        %1108 = vmatpush.bf16.msra.mxu0 0
        %1109 = vmatpush.bf16.msra.mxu0 %v1100
        %1110 = vmatmul.bf16.gmra.mxu0 %v1097
        %v1111 = vpop.f32.mrf.mxu0
        %v1112 = vadd.f32 0.0, %v1111
        %v1113 = vpop.f32.mrf.mxu0
        %v1114 = vadd.f32 0.0, %v1113
        %1115 = vdwg.mxu0
        %v1116 = vadd.f32 %v1088, %v1112
        %v1117 = vadd.f32 %v1090, %v1114
        %v1118 = vld [vmem:[#allocation8 + $0x38] sm:$0x3]
        %v1119 = vmax.f32 %v1116, 0.0
        %v1120 = vmax.f32 %v1117, 0.0
        %v1121 = vperm.slane %v1118, 0
        %v1122 = vmul.f32 %v1119, %v1121
        %v1123 = vmul.f32 %v1120, %v1121
        %v1124 = vperm.slane %v1118, 1
        %v1125 = vadd.f32 %v1122, %v1124
        %v1126 = vadd.f32 %v1123, %v1124
        %v1127 = vpack.c.bf16 %v1125, %v1125
        %v1128 = vpack.c.bf16 %v1126, %v1126
        %1131 = vrot.lane.b32.xlu0 %v1127, 10
        %v1132 = vpop.permute.xlu0 %1131
        %1133 = vrot.lane.b32.xlu0 %v1128, 10
        %v1134 = vpop.permute.xlu0 %1133
        %vm1137 = vcmask 93264
        %1138 = vst.msk [vmem:[#allocation2] sm:$0xf] %vm1137, %v1132
        %1139 = vst.msk [vmem:[#allocation2 + $0x4] sm:$0xf] %vm1137, %v1134
        %v1140 = vunpack.c.l.bf16 %v1127
        %v1141 = vunpack.c.l.bf16 %v1128
        %1142 = vrot.lane.b32.xlu0 %v548, 116
        %v1143 = vpop.permute.xlu0 %1142
        %1144 = vrot.lane.b32.xlu0 %v549, 116
        %v1145 = vpop.permute.xlu0 %1144
        %v1148 = vadd.f32 %v1140, %v1143
        %v1149 = vadd.f32 %v1141, %v1145
        %v1150 = vpack.c.bf16 %v1148, %v1148
        %v1151 = vpack.c.bf16 %v1149, %v1149
        %v1152 = vld [vmem:[#allocation6 + $0x60] sm:$0x7]
        %v1155 = vunpack.c.l.b16 %v1150
        %v1156 = vunpack.c.l.b16 %v1151
        %v1157 = vpack.c.b16 %v1156, %v1155
        %v1158 = vrot.slane %v1157, 7
        %v1160 = vsel %vm245, 0, %v1158
        %v1161 = vsel %vm245, %v1158, 0
        %v1164 = vrot.slane %v1160, 1
        %v1165 = vrot.slane %v1161, 1
        %v1166 = vsel %vm309, %v1164, %v1165
        %v1168 = vunpack.c.l.b16 %v1152
        %v1169 = vpack.c.b16 %v1168, %v1168
        %v1170 = vrot.slane %v1169, 1
        %v1172 = vsel %vm466, %v1166, 0
        %v1175 = vsel %vm245, %v1170, 0
        %1177 = vmatpush.bf16.msra.mxu0 0
        %1178 = vmatpush.bf16.msra.mxu0 0
        %1179 = vmatpush.bf16.msra.mxu0 0
        %1180 = vmatpush.bf16.msra.mxu0 0
        %1181 = vmatpush.bf16.msra.mxu0 0
        %1182 = vmatpush.bf16.msra.mxu0 0
        %1183 = vmatpush.bf16.msra.mxu0 0
        %1184 = vmatpush.bf16.msra.mxu0 %v1175
        %1185 = vmatmul.bf16.gmra.mxu0 %v1172
        %v1186 = vpop.f32.mrf.mxu0
        %v1187 = vadd.f32 0.0, %v1186
        %v1188 = vpop.f32.mrf.mxu0
        %v1189 = vadd.f32 0.0, %v1188
        %1190 = vdwg.mxu0
        %v1191 = vsel %vm466, %v1160, 0
        %v1194 = vsel %vm245, %v1152, 0
        %1196 = vmatpush.bf16.msra.mxu0 0
        %1197 = vmatpush.bf16.msra.mxu0 0
        %1198 = vmatpush.bf16.msra.mxu0 0
        %1199 = vmatpush.bf16.msra.mxu0 0
        %1200 = vmatpush.bf16.msra.mxu0 0
        %1201 = vmatpush.bf16.msra.mxu0 0
        %1202 = vmatpush.bf16.msra.mxu0 0
        %1203 = vmatpush.bf16.msra.mxu0 %v1194
        %1204 = vmatmul.bf16.gmra.mxu0 %v1191
        %v1205 = vpop.f32.mrf.mxu0
        %v1206 = vadd.f32 %v1187, %v1205
        %v1207 = vpop.f32.mrf.mxu0
        %v1208 = vadd.f32 %v1189, %v1207
        %1209 = vdwg.mxu0
        %v1210 = vrot.slane %v1160, 2
        %v1211 = vrot.slane %v1161, 2
        %v1212 = vsel %vm373, %v1210, %v1211
        %v1213 = vrot.slane %v1169, 2
        %v1215 = vsel %vm466, %v1212, 0
        %v1218 = vsel %vm245, %v1213, 0
        %1220 = vmatpush.bf16.msra.mxu0 0
        %1221 = vmatpush.bf16.msra.mxu0 0
        %1222 = vmatpush.bf16.msra.mxu0 0
        %1223 = vmatpush.bf16.msra.mxu0 0
        %1224 = vmatpush.bf16.msra.mxu0 0
        %1225 = vmatpush.bf16.msra.mxu0 0
        %1226 = vmatpush.bf16.msra.mxu0 0
        %1227 = vmatpush.bf16.msra.mxu0 %v1218
        %1228 = vmatmul.bf16.gmra.mxu0 %v1215
        %v1229 = vpop.f32.mrf.mxu0
        %v1230 = vadd.f32 0.0, %v1229
        %v1231 = vpop.f32.mrf.mxu0
        %v1232 = vadd.f32 0.0, %v1231
        %1233 = vdwg.mxu0
        %v1234 = vadd.f32 %v1206, %v1230
        %v1235 = vadd.f32 %v1208, %v1232
        %v1236 = vld [vmem:[#allocation8 + $0x40] sm:$0x3]
        %v1237 = vmax.f32 %v1234, 0.0
        %v1238 = vmax.f32 %v1235, 0.0
        %v1239 = vperm.slane %v1236, 0
        %v1240 = vmul.f32 %v1237, %v1239
        %v1241 = vmul.f32 %v1238, %v1239
        %v1242 = vperm.slane %v1236, 1
        %v1243 = vadd.f32 %v1240, %v1242
        %v1244 = vadd.f32 %v1241, %v1242
        %v1245 = vpack.c.bf16 %v1243, %v1243
        %v1246 = vpack.c.bf16 %v1244, %v1244
        %1249 = vrot.lane.b32.xlu0 %v1245, 12
        %v1250 = vpop.permute.xlu0 %1249
        %1251 = vrot.lane.b32.xlu0 %v1246, 12
        %v1252 = vpop.permute.xlu0 %1251
        %vm1255 = vcmask 109664
        %1256 = vst.msk [vmem:[#allocation2] sm:$0xf] %vm1255, %v1250
        %1257 = vst.msk [vmem:[#allocation2 + $0x4] sm:$0xf] %vm1255, %v1252
        %vm1258 = vcmask 126064
        %1259 = vst.msk [vmem:[#allocation2] sm:$0xf] %vm1258, %v445
        %1260 = vst.msk [vmem:[#allocation2 + $0x4] sm:$0xf] %vm1258, %v446
        %v1261 = vld [vmem:[#allocation2] sm:$0xf]
        %v1262 = vld [vmem:[#allocation2 + $0x4] sm:$0xf]
        %v1263 = vld [vmem:[#allocation6 + $0x68] sm:$0xf]
        %v1264 = vld [vmem:[#allocation6 + $0x6c] sm:$0xf]
        %v1265 = vld [vmem:[#allocation8 + $0x48] sm:$0x3]
        %v1268 = vunpack.c.l.b16 %v1261
        %v1269 = vunpack.c.l.b16 %v1262
        %v1270 = vpack.c.b16 %v1269, %v1268
        %v1273 = vunpack.c.l.b16 %v1263
        %v1274 = vunpack.c.l.b16 %v1264
        %v1275 = vpack.c.b16 %v1274, %v1273
        %v1278 = vsel %vm267, %v1270, 0
        %1280 = vmatpush.bf16.msra.mxu0 0
        %1281 = vmatpush.bf16.msra.mxu0 0
        %1282 = vmatpush.bf16.msra.mxu0 0
        %1283 = vmatpush.bf16.msra.mxu0 0
        %1284 = vmatpush.bf16.msra.mxu0 0
        %1285 = vmatpush.bf16.msra.mxu0 0
        %1286 = vmatpush.bf16.msra.mxu0 0
        %1287 = vmatpush.bf16.msra.mxu0 %v1275
        %1288 = vmatmul.bf16.gmra.mxu0 %v1278
        %v1289 = vpop.f32.mrf.mxu0
        %v1290 = vadd.f32 0.0, %v1289
        %v1291 = vpop.f32.mrf.mxu0
        %v1292 = vadd.f32 0.0, %v1291
        %1293 = vdwg.mxu0
        %v1294 = vmax.f32 %v1290, 0.0
        %v1295 = vmax.f32 %v1292, 0.0
        %v1296 = vperm.slane %v1265, 0
        %v1297 = vmul.f32 %v1294, %v1296
        %v1298 = vmul.f32 %v1295, %v1296
        %v1299 = vperm.slane %v1265, 1
        %v1300 = vadd.f32 %v1297, %v1299
        %v1301 = vadd.f32 %v1298, %v1299
        %v1302 = vpack.c.bf16 %v1300, %v1300
        %v1303 = vpack.c.bf16 %v1301, %v1301
        %v1304 = vld [vmem:[#allocation6 + $0x70] sm:$0xf]
        %v1305 = vld [vmem:[#allocation6 + $0x74] sm:$0xf]
        %v1306 = vld [vmem:[#allocation8 + $0x50] sm:$0x1]
        %v1307 = vld [vmem:[#allocation6 + $0x78] sm:$0xf]
        %v1308 = vld [vmem:[#allocation8 + $0x58] sm:$0x1]
        %v1309 = vunpack.c.l.bf16 %v1302
        %v1310 = vunpack.c.l.bf16 %v1303
        %v1311 = vsel %vm267, %v1309, 0.0
        %v1312 = vsel %vm267, %v1310, 0.0
        %v1313 = vadd.f32 %v1311, %v1312
        %v1314 = vrot.slane %v1313, 4
        %v1315 = vadd.f32 %v1313, %v1314
        %v1316 = vrot.slane %v1315, 2
        %v1317 = vadd.f32 %v1315, %v1316
        %v1318 = vrot.slane %v1317, 1
        %v1319 = vadd.f32 %v1317, %v1318
        %v1320 = vrcp.pop 16.0
        %v1321 = vmul.f32 16.0, %v1320
        %v1322 = vsub.f32 1.0, %v1321
        %v1323 = vmul.f32 %v1320, %v1322
        %v1324 = vadd.f32 %v1320, %v1323
        %vm1325 = vweird.f32 %v1320
        %v1326 = vsel %vm1325, %v1320, %v1324
        %v1327 = vmul.f32 %v1319, %v1326
        %v1328 = vpack.c.bf16 %v1327, %v1327
        %v1331 = vunpack.c.l.b16 %v1304
        %v1332 = vunpack.c.l.b16 %v1305
        %v1333 = vpack.c.b16 %v1332, %v1331
        %v1336 = vsel %vm267, %v1328, 0
        %1338 = vmatpush.bf16.msra.mxu0 0
        %1339 = vmatpush.bf16.msra.mxu0 0
        %1340 = vmatpush.bf16.msra.mxu0 0
        %1341 = vmatpush.bf16.msra.mxu0 0
        %1342 = vmatpush.bf16.msra.mxu0 0
        %1343 = vmatpush.bf16.msra.mxu0 0
        %1344 = vmatpush.bf16.msra.mxu0 0
        %1345 = vmatpush.bf16.msra.mxu0 %v1333
        %1346 = vmatmul.bf16.gmra.mxu0 %v1336
        %v1347 = vpop.f32.mrf.mxu0
        %v1348 = vadd.f32 %v1306, %v1347
        %v1349 = vpop.f32.mrf.mxu0
        %1350 = vdwg.mxu0
        %v1351 = vmax.f32 %v1348, 0.0
        %v1352 = vpack.c.bf16 %v1351, %v1351
        %vm1353 = vcmask 64512
        %v1355 = vsel %vm1353, %v1352, 0
        %vm1357 = vcmask 1043456
        %v1359 = vsel %vm1357, %v1307, 0
        %1361 = vmatpush.bf16.msra.mxu0 0
        %1362 = vmatpush.bf16.msra.mxu0 0
        %1363 = vmatpush.bf16.msra.mxu0 0
        %1364 = vmatpush.bf16.msra.mxu0 0
        %1365 = vmatpush.bf16.msra.mxu0 0
        %1366 = vmatpush.bf16.msra.mxu0 0
        %1367 = vmatpush.bf16.msra.mxu0 0
        %1368 = vmatpush.bf16.msra.mxu0 %v1359
        %1369 = vmatmul.bf16.gmra.mxu0 %v1355
        %v1370 = vpop.f32.mrf.mxu0
        %v1371 = vadd.f32 %v1308, %v1370
        %v1372 = vpop.f32.mrf.mxu0
        %1373 = vdwg.mxu0
        %v1374 = vxor.u32 %v1371, 2147483648
        %v1375 = vmul.f32 %v1374, 1.442695
        %v1376 = vpow.pop %v1375
        %v1377 = vadd.f32 %v1376, 1.0
        %v1378 = vrcp.pop %v1377
        %v1379 = vmul.f32 %v1377, %v1378
        %v1380 = vsub.f32 1.0, %v1379
        %v1381 = vmul.f32 %v1378, %v1380
        %v1382 = vadd.f32 %v1378, %v1381
        %vm1383 = vweird.f32 %v1377
        %vm1384 = vweird.f32 %v1378
        %vm1385 = vmor %vm1383, %vm1384
        %v1386 = vsel %vm1385, %v1378, %v1382
        %v1387 = vand.u32 2147483647, %v1377
        %vm1388 = vcmp.eq.f32.partialorder %v1387, 8.507059e+37
        %v1389 = vand.u32 %v1377, 2147483648
        %v1390 = vor.u32 1.1754944e-38, %v1389
        %v1391 = vsel %vm1388, %v1390, %v1386
        %v1392 = vmul.f32 1.0, %v1391
        %v1393 = vperm.slane %v1392, 0
        %v1394 = vmul.f32 %v1309, %v1393
        %v1395 = vmul.f32 %v1310, %v1393
        %v1396 = vadd.f32 %v1394, %v408
        %v1397 = vadd.f32 %v1395, %v409
        %v1398 = vadd.f32 %v408, %v1396
        %v1399 = vadd.f32 %v409, %v1397
        %v1400 = vld [vmem:[#allocation6 + $0x80] sm:$0xf]
        %v1401 = vld [vmem:[#allocation6 + $0x84] sm:$0xf]
        %v1402 = vld [vmem:[#allocation8 + $0x60] sm:$0x3]
        %v1403 = vpack.c.bf16 %v1399, %v1398
        %v1406 = vunpack.c.l.b16 %v1400
        %v1407 = vunpack.c.l.b16 %v1401
        %v1408 = vpack.c.b16 %v1407, %v1406
        %v1411 = vsel %vm267, %v1403, 0
        %1413 = vmatpush.bf16.msra.mxu0 0
        %1414 = vmatpush.bf16.msra.mxu0 0
        %1415 = vmatpush.bf16.msra.mxu0 0
        %1416 = vmatpush.bf16.msra.mxu0 0
        %1417 = vmatpush.bf16.msra.mxu0 0
        %1418 = vmatpush.bf16.msra.mxu0 0
        %1419 = vmatpush.bf16.msra.mxu0 0
        %1420 = vmatpush.bf16.msra.mxu0 %v1408
        %1421 = vmatmul.bf16.gmra.mxu0 %v1411
        %v1422 = vpop.f32.mrf.mxu0
        %v1423 = vadd.f32 0.0, %v1422
        %v1424 = vpop.f32.mrf.mxu0
        %v1425 = vadd.f32 0.0, %v1424
        %1426 = vdwg.mxu0
        %v1427 = vmax.f32 %v1423, 0.0
        %v1428 = vmax.f32 %v1425, 0.0
        %v1429 = vperm.slane %v1402, 0
        %v1430 = vmul.f32 %v1427, %v1429
        %v1431 = vmul.f32 %v1428, %v1429
        %v1432 = vperm.slane %v1402, 1
        %v1433 = vadd.f32 %v1430, %v1432
        %v1434 = vadd.f32 %v1431, %v1432
        %v1435 = vpack.c.bf16 %v1433, %v1433
        %v1436 = vpack.c.bf16 %v1434, %v1434
        %v1437 = vld [vmem:[#allocation6 + $0x88] sm:$0x7]
        %v1440 = vunpack.c.l.b16 %v1435
        %v1441 = vunpack.c.l.b16 %v1436
        %v1442 = vpack.c.b16 %v1441, %v1440
        %v1444 = vshrl.u32 %v1442, 16
        %v1446 = vrot.slane %v1444, 6
        %v1447 = vshll.u32 %v1442, 16
        %v1449 = vrot.slane %v1447, 7
        %v1450 = vor.u32 %v1446, %v1449
        %vm1452 = vcmask 1041408
        %vm1453 = vsmask.f32 1280
        %vm1454 = vmand %vm1452, %vm1453
        %v1455 = vsel %vm1454, 0, %v1450
        %v1456 = vsel %vm1454, %v1450, 0
        %v1458 = vshrl.u32 %v1455, 16
        %v1460 = vrot.slane %v1458, 1
        %v1461 = vshll.u32 %v1455, 16
        %v1463 = vrot.slane %v1461, 2
        %v1464 = vor.u32 %v1460, %v1463
        %v1466 = vshrl.u32 %v1456, 16
        %v1468 = vrot.slane %v1466, 1
        %v1469 = vshll.u32 %v1456, 16
        %v1471 = vrot.slane %v1469, 2
        %v1472 = vor.u32 %v1468, %v1471
        %v1473 = vsel %vm338, %v1464, %v1472
        %v1475 = vunpack.c.l.b16 %v1437
        %v1476 = vpack.c.b16 %v1475, %v1475
        %v1477 = vrot.slane %v1476, 1
        %v1479 = vsel %vm466, %v1473, 0
        %v1482 = vsel %vm245, %v1477, 0
        %1484 = vmatpush.bf16.msra.mxu0 0
        %1485 = vmatpush.bf16.msra.mxu0 0
        %1486 = vmatpush.bf16.msra.mxu0 0
        %1487 = vmatpush.bf16.msra.mxu0 0
        %1488 = vmatpush.bf16.msra.mxu0 0
        %1489 = vmatpush.bf16.msra.mxu0 0
        %1490 = vmatpush.bf16.msra.mxu0 0
        %1491 = vmatpush.bf16.msra.mxu0 %v1482
        %1492 = vmatmul.bf16.gmra.mxu0 %v1479
        %v1493 = vpop.f32.mrf.mxu0
        %v1494 = vadd.f32 0.0, %v1493
        %v1495 = vpop.f32.mrf.mxu0
        %v1496 = vadd.f32 0.0, %v1495
        %1497 = vdwg.mxu0
        %v1498 = vsel %vm466, %v1455, 0
        %v1501 = vsel %vm245, %v1437, 0
        %1503 = vmatpush.bf16.msra.mxu0 0
        %1504 = vmatpush.bf16.msra.mxu0 0
        %1505 = vmatpush.bf16.msra.mxu0 0
        %1506 = vmatpush.bf16.msra.mxu0 0
        %1507 = vmatpush.bf16.msra.mxu0 0
        %1508 = vmatpush.bf16.msra.mxu0 0
        %1509 = vmatpush.bf16.msra.mxu0 0
        %1510 = vmatpush.bf16.msra.mxu0 %v1501
        %1511 = vmatmul.bf16.gmra.mxu0 %v1498
        %v1512 = vpop.f32.mrf.mxu0
        %v1513 = vadd.f32 %v1494, %v1512
        %v1514 = vpop.f32.mrf.mxu0
        %v1515 = vadd.f32 %v1496, %v1514
        %1516 = vdwg.mxu0
        %vm1519 = vcmask 1044480
        %v1520 = vrot.slane %v1455, 3
        %v1521 = vrot.slane %v1456, 3
        %v1522 = vsel %vm1519, %v1520, %v1521
        %v1523 = vrot.slane %v1476, 2
        %v1525 = vsel %vm466, %v1522, 0
        %v1528 = vsel %vm245, %v1523, 0
        %1530 = vmatpush.bf16.msra.mxu0 0
        %1531 = vmatpush.bf16.msra.mxu0 0
        %1532 = vmatpush.bf16.msra.mxu0 0
        %1533 = vmatpush.bf16.msra.mxu0 0
        %1534 = vmatpush.bf16.msra.mxu0 0
        %1535 = vmatpush.bf16.msra.mxu0 0
        %1536 = vmatpush.bf16.msra.mxu0 0
        %1537 = vmatpush.bf16.msra.mxu0 %v1528
        %1538 = vmatmul.bf16.gmra.mxu0 %v1525
        %v1539 = vpop.f32.mrf.mxu0
        %v1540 = vadd.f32 0.0, %v1539
        %v1541 = vpop.f32.mrf.mxu0
        %v1542 = vadd.f32 0.0, %v1541
        %1543 = vdwg.mxu0
        %v1544 = vadd.f32 %v1513, %v1540
        %v1545 = vadd.f32 %v1515, %v1542
        %v1546 = vld [vmem:[#allocation8 + $0x68] sm:$0x3]
        %v1547 = vmax.f32 %v1544, 0.0
        %v1548 = vmax.f32 %v1545, 0.0
        %v1549 = vperm.slane %v1546, 0
        %v1550 = vmul.f32 %v1547, %v1549
        %v1551 = vmul.f32 %v1548, %v1549
        %v1552 = vperm.slane %v1546, 1
        %v1553 = vadd.f32 %v1550, %v1552
        %v1554 = vadd.f32 %v1551, %v1552
        %v1555 = vpack.c.bf16 %v1553, %v1553
        %v1556 = vpack.c.bf16 %v1554, %v1554
        %1557 = vst.msk [vmem:[#allocation2] sm:$0xf] %vm543, %v1555
        %1558 = vst.msk [vmem:[#allocation2 + $0x4] sm:$0xf] %vm543, %v1556
        %v1559 = vunpack.c.l.bf16 %v1555
        %v1560 = vunpack.c.l.bf16 %v1556
        %v1561 = vunpack.c.l.bf16 %v1435
        %v1562 = vunpack.c.l.bf16 %v1436
        %1565 = vrot.lane.b32.xlu0 %v1561, 126
        %v1566 = vpop.permute.xlu0 %1565
        %1567 = vrot.lane.b32.xlu0 %v1562, 126
        %v1568 = vpop.permute.xlu0 %1567
        %v1571 = vadd.f32 %v1559, %v1566
        %v1572 = vadd.f32 %v1560, %v1568
        %v1573 = vpack.c.bf16 %v1571, %v1571
        %v1574 = vpack.c.bf16 %v1572, %v1572
        %v1575 = vld [vmem:[#allocation6 + $0x90] sm:$0x7]
        %v1578 = vunpack.c.l.b16 %v1573
        %v1579 = vunpack.c.l.b16 %v1574
        %v1580 = vpack.c.b16 %v1579, %v1578
        %v1582 = vshrl.u32 %v1580, 16
        %v1584 = vrot.slane %v1582, 6
        %v1585 = vshll.u32 %v1580, 16
        %v1587 = vrot.slane %v1585, 7
        %v1588 = vor.u32 %v1584, %v1587
        %v1590 = vsel %vm1454, 0, %v1588
        %v1591 = vsel %vm1454, %v1588, 0
        %v1593 = vshrl.u32 %v1590, 16
        %v1595 = vrot.slane %v1593, 1
        %v1596 = vshll.u32 %v1590, 16
        %v1598 = vrot.slane %v1596, 2
        %v1599 = vor.u32 %v1595, %v1598
        %v1601 = vshrl.u32 %v1591, 16
        %v1603 = vrot.slane %v1601, 1
        %v1604 = vshll.u32 %v1591, 16
        %v1606 = vrot.slane %v1604, 2
        %v1607 = vor.u32 %v1603, %v1606
        %v1608 = vsel %vm338, %v1599, %v1607
        %v1610 = vunpack.c.l.b16 %v1575
        %v1611 = vpack.c.b16 %v1610, %v1610
        %v1612 = vrot.slane %v1611, 1
        %v1614 = vsel %vm466, %v1608, 0
        %v1617 = vsel %vm245, %v1612, 0
        %1619 = vmatpush.bf16.msra.mxu0 0
        %1620 = vmatpush.bf16.msra.mxu0 0
        %1621 = vmatpush.bf16.msra.mxu0 0
        %1622 = vmatpush.bf16.msra.mxu0 0
        %1623 = vmatpush.bf16.msra.mxu0 0
        %1624 = vmatpush.bf16.msra.mxu0 0
        %1625 = vmatpush.bf16.msra.mxu0 0
        %1626 = vmatpush.bf16.msra.mxu0 %v1617
        %1627 = vmatmul.bf16.gmra.mxu0 %v1614
        %v1628 = vpop.f32.mrf.mxu0
        %v1629 = vadd.f32 0.0, %v1628
        %v1630 = vpop.f32.mrf.mxu0
        %v1631 = vadd.f32 0.0, %v1630
        %1632 = vdwg.mxu0
        %v1633 = vsel %vm466, %v1590, 0
        %v1636 = vsel %vm245, %v1575, 0
        %1638 = vmatpush.bf16.msra.mxu0 0
        %1639 = vmatpush.bf16.msra.mxu0 0
        %1640 = vmatpush.bf16.msra.mxu0 0
        %1641 = vmatpush.bf16.msra.mxu0 0
        %1642 = vmatpush.bf16.msra.mxu0 0
        %1643 = vmatpush.bf16.msra.mxu0 0
        %1644 = vmatpush.bf16.msra.mxu0 0
        %1645 = vmatpush.bf16.msra.mxu0 %v1636
        %1646 = vmatmul.bf16.gmra.mxu0 %v1633
        %v1647 = vpop.f32.mrf.mxu0
        %v1648 = vadd.f32 %v1629, %v1647
        %v1649 = vpop.f32.mrf.mxu0
        %v1650 = vadd.f32 %v1631, %v1649
        %1651 = vdwg.mxu0
        %v1654 = vrot.slane %v1590, 3
        %v1655 = vrot.slane %v1591, 3
        %v1656 = vsel %vm1519, %v1654, %v1655
        %v1657 = vrot.slane %v1611, 2
        %v1659 = vsel %vm466, %v1656, 0
        %v1662 = vsel %vm245, %v1657, 0
        %1664 = vmatpush.bf16.msra.mxu0 0
        %1665 = vmatpush.bf16.msra.mxu0 0
        %1666 = vmatpush.bf16.msra.mxu0 0
        %1667 = vmatpush.bf16.msra.mxu0 0
        %1668 = vmatpush.bf16.msra.mxu0 0
        %1669 = vmatpush.bf16.msra.mxu0 0
        %1670 = vmatpush.bf16.msra.mxu0 0
        %1671 = vmatpush.bf16.msra.mxu0 %v1662
        %1672 = vmatmul.bf16.gmra.mxu0 %v1659
        %v1673 = vpop.f32.mrf.mxu0
        %v1674 = vadd.f32 0.0, %v1673
        %v1675 = vpop.f32.mrf.mxu0
        %v1676 = vadd.f32 0.0, %v1675
        %1677 = vdwg.mxu0
        %v1678 = vadd.f32 %v1648, %v1674
        %v1679 = vadd.f32 %v1650, %v1676
        %v1680 = vld [vmem:[#allocation8 + $0x70] sm:$0x3]
        %v1681 = vmax.f32 %v1678, 0.0
        %v1682 = vmax.f32 %v1679, 0.0
        %v1683 = vperm.slane %v1680, 0
        %v1684 = vmul.f32 %v1681, %v1683
        %v1685 = vmul.f32 %v1682, %v1683
        %v1686 = vperm.slane %v1680, 1
        %v1687 = vadd.f32 %v1684, %v1686
        %v1688 = vadd.f32 %v1685, %v1686
        %v1689 = vpack.c.bf16 %v1687, %v1687
        %v1690 = vpack.c.bf16 %v1688, %v1688
        %1693 = vrot.lane.b32.xlu0 %v1689, 2
        %v1694 = vpop.permute.xlu0 %1693
        %1695 = vrot.lane.b32.xlu0 %v1690, 2
        %v1696 = vpop.permute.xlu0 %1695
        %1699 = vst.msk [vmem:[#allocation2] sm:$0xf] %vm665, %v1694
        %1700 = vst.msk [vmem:[#allocation2 + $0x4] sm:$0xf] %vm665, %v1696
        %v1701 = vunpack.c.l.bf16 %v1689
        %v1702 = vunpack.c.l.bf16 %v1690
        %1703 = vrot.lane.b32.xlu0 %v1561, 124
        %v1704 = vpop.permute.xlu0 %1703
        %1705 = vrot.lane.b32.xlu0 %v1562, 124
        %v1706 = vpop.permute.xlu0 %1705
        %v1709 = vadd.f32 %v1701, %v1704
        %v1710 = vadd.f32 %v1702, %v1706
        %v1711 = vpack.c.bf16 %v1709, %v1709
        %v1712 = vpack.c.bf16 %v1710, %v1710
        %v1713 = vld [vmem:[#allocation6 + $0x98] sm:$0x7]
        %v1716 = vunpack.c.l.b16 %v1711
        %v1717 = vunpack.c.l.b16 %v1712
        %v1718 = vpack.c.b16 %v1717, %v1716
        %v1720 = vshrl.u32 %v1718, 16
        %v1722 = vrot.slane %v1720, 6
        %v1723 = vshll.u32 %v1718, 16
        %v1725 = vrot.slane %v1723, 7
        %v1726 = vor.u32 %v1722, %v1725
        %v1728 = vsel %vm1454, 0, %v1726
        %v1729 = vsel %vm1454, %v1726, 0
        %v1731 = vshrl.u32 %v1728, 16
        %v1733 = vrot.slane %v1731, 1
        %v1734 = vshll.u32 %v1728, 16
        %v1736 = vrot.slane %v1734, 2
        %v1737 = vor.u32 %v1733, %v1736
        %v1739 = vshrl.u32 %v1729, 16
        %v1741 = vrot.slane %v1739, 1
        %v1742 = vshll.u32 %v1729, 16
        %v1744 = vrot.slane %v1742, 2
        %v1745 = vor.u32 %v1741, %v1744
        %v1746 = vsel %vm338, %v1737, %v1745
        %v1748 = vunpack.c.l.b16 %v1713
        %v1749 = vpack.c.b16 %v1748, %v1748
        %v1750 = vrot.slane %v1749, 1
        %v1752 = vsel %vm466, %v1746, 0
        %v1755 = vsel %vm245, %v1750, 0
        %1757 = vmatpush.bf16.msra.mxu0 0
        %1758 = vmatpush.bf16.msra.mxu0 0
        %1759 = vmatpush.bf16.msra.mxu0 0
        %1760 = vmatpush.bf16.msra.mxu0 0
        %1761 = vmatpush.bf16.msra.mxu0 0
        %1762 = vmatpush.bf16.msra.mxu0 0
        %1763 = vmatpush.bf16.msra.mxu0 0
        %1764 = vmatpush.bf16.msra.mxu0 %v1755
        %1765 = vmatmul.bf16.gmra.mxu0 %v1752
        %v1766 = vpop.f32.mrf.mxu0
        %v1767 = vadd.f32 0.0, %v1766
        %v1768 = vpop.f32.mrf.mxu0
        %v1769 = vadd.f32 0.0, %v1768
        %1770 = vdwg.mxu0
        %v1771 = vsel %vm466, %v1728, 0
        %v1774 = vsel %vm245, %v1713, 0
        %1776 = vmatpush.bf16.msra.mxu0 0
        %1777 = vmatpush.bf16.msra.mxu0 0
        %1778 = vmatpush.bf16.msra.mxu0 0
        %1779 = vmatpush.bf16.msra.mxu0 0
        %1780 = vmatpush.bf16.msra.mxu0 0
        %1781 = vmatpush.bf16.msra.mxu0 0
        %1782 = vmatpush.bf16.msra.mxu0 0
        %1783 = vmatpush.bf16.msra.mxu0 %v1774
        %1784 = vmatmul.bf16.gmra.mxu0 %v1771
        %v1785 = vpop.f32.mrf.mxu0
        %v1786 = vadd.f32 %v1767, %v1785
        %v1787 = vpop.f32.mrf.mxu0
        %v1788 = vadd.f32 %v1769, %v1787
        %1789 = vdwg.mxu0
        %v1792 = vrot.slane %v1728, 3
        %v1793 = vrot.slane %v1729, 3
        %v1794 = vsel %vm1519, %v1792, %v1793
        %v1795 = vrot.slane %v1749, 2
        %v1797 = vsel %vm466, %v1794, 0
        %v1800 = vsel %vm245, %v1795, 0
        %1802 = vmatpush.bf16.msra.mxu0 0
        %1803 = vmatpush.bf16.msra.mxu0 0
        %1804 = vmatpush.bf16.msra.mxu0 0
        %1805 = vmatpush.bf16.msra.mxu0 0
        %1806 = vmatpush.bf16.msra.mxu0 0
        %1807 = vmatpush.bf16.msra.mxu0 0
        %1808 = vmatpush.bf16.msra.mxu0 0
        %1809 = vmatpush.bf16.msra.mxu0 %v1800
        %1810 = vmatmul.bf16.gmra.mxu0 %v1797
        %v1811 = vpop.f32.mrf.mxu0
        %v1812 = vadd.f32 0.0, %v1811
        %v1813 = vpop.f32.mrf.mxu0
        %v1814 = vadd.f32 0.0, %v1813
        %1815 = vdwg.mxu0
        %v1816 = vadd.f32 %v1786, %v1812
        %v1817 = vadd.f32 %v1788, %v1814
        %v1818 = vld [vmem:[#allocation8 + $0x78] sm:$0x3]
        %v1819 = vmax.f32 %v1816, 0.0
        %v1820 = vmax.f32 %v1817, 0.0
        %v1821 = vperm.slane %v1818, 0
        %v1822 = vmul.f32 %v1819, %v1821
        %v1823 = vmul.f32 %v1820, %v1821
        %v1824 = vperm.slane %v1818, 1
        %v1825 = vadd.f32 %v1822, %v1824
        %v1826 = vadd.f32 %v1823, %v1824
        %v1827 = vpack.c.bf16 %v1825, %v1825
        %v1828 = vpack.c.bf16 %v1826, %v1826
        %1831 = vrot.lane.b32.xlu0 %v1827, 4
        %v1832 = vpop.permute.xlu0 %1831
        %1833 = vrot.lane.b32.xlu0 %v1828, 4
        %v1834 = vpop.permute.xlu0 %1833
        %1837 = vst.msk [vmem:[#allocation2] sm:$0xf] %vm783, %v1832
        %1838 = vst.msk [vmem:[#allocation2 + $0x4] sm:$0xf] %vm783, %v1834
        %v1839 = vunpack.c.l.bf16 %v1827
        %v1840 = vunpack.c.l.bf16 %v1828
        %1841 = vrot.lane.b32.xlu0 %v1561, 122
        %v1842 = vpop.permute.xlu0 %1841
        %1843 = vrot.lane.b32.xlu0 %v1562, 122
        %v1844 = vpop.permute.xlu0 %1843
        %v1847 = vadd.f32 %v1839, %v1842
        %v1848 = vadd.f32 %v1840, %v1844
        %v1849 = vpack.c.bf16 %v1847, %v1847
        %v1850 = vpack.c.bf16 %v1848, %v1848
        %v1851 = vld [vmem:[#allocation6 + $0xa0] sm:$0x7]
        %v1854 = vunpack.c.l.b16 %v1849
        %v1855 = vunpack.c.l.b16 %v1850
        %v1856 = vpack.c.b16 %v1855, %v1854
        %v1858 = vshrl.u32 %v1856, 16
        %v1860 = vrot.slane %v1858, 6
        %v1861 = vshll.u32 %v1856, 16
        %v1863 = vrot.slane %v1861, 7
        %v1864 = vor.u32 %v1860, %v1863
        %v1866 = vsel %vm1454, 0, %v1864
        %v1867 = vsel %vm1454, %v1864, 0
        %v1869 = vshrl.u32 %v1866, 16
        %v1871 = vrot.slane %v1869, 1
        %v1872 = vshll.u32 %v1866, 16
        %v1874 = vrot.slane %v1872, 2
        %v1875 = vor.u32 %v1871, %v1874
        %v1877 = vshrl.u32 %v1867, 16
        %v1879 = vrot.slane %v1877, 1
        %v1880 = vshll.u32 %v1867, 16
        %v1882 = vrot.slane %v1880, 2
        %v1883 = vor.u32 %v1879, %v1882
        %v1884 = vsel %vm338, %v1875, %v1883
        %v1886 = vunpack.c.l.b16 %v1851
        %v1887 = vpack.c.b16 %v1886, %v1886
        %v1888 = vrot.slane %v1887, 1
        %v1890 = vsel %vm466, %v1884, 0
        %v1893 = vsel %vm245, %v1888, 0
        %1895 = vmatpush.bf16.msra.mxu0 0
        %1896 = vmatpush.bf16.msra.mxu0 0
        %1897 = vmatpush.bf16.msra.mxu0 0
        %1898 = vmatpush.bf16.msra.mxu0 0
        %1899 = vmatpush.bf16.msra.mxu0 0
        %1900 = vmatpush.bf16.msra.mxu0 0
        %1901 = vmatpush.bf16.msra.mxu0 0
        %1902 = vmatpush.bf16.msra.mxu0 %v1893
        %1903 = vmatmul.bf16.gmra.mxu0 %v1890
        %v1904 = vpop.f32.mrf.mxu0
        %v1905 = vadd.f32 0.0, %v1904
        %v1906 = vpop.f32.mrf.mxu0
        %v1907 = vadd.f32 0.0, %v1906
        %1908 = vdwg.mxu0
        %v1909 = vsel %vm466, %v1866, 0
        %v1912 = vsel %vm245, %v1851, 0
        %1914 = vmatpush.bf16.msra.mxu0 0
        %1915 = vmatpush.bf16.msra.mxu0 0
        %1916 = vmatpush.bf16.msra.mxu0 0
        %1917 = vmatpush.bf16.msra.mxu0 0
        %1918 = vmatpush.bf16.msra.mxu0 0
        %1919 = vmatpush.bf16.msra.mxu0 0
        %1920 = vmatpush.bf16.msra.mxu0 0
        %1921 = vmatpush.bf16.msra.mxu0 %v1912
        %1922 = vmatmul.bf16.gmra.mxu0 %v1909
        %v1923 = vpop.f32.mrf.mxu0
        %v1924 = vadd.f32 %v1905, %v1923
        %v1925 = vpop.f32.mrf.mxu0
        %v1926 = vadd.f32 %v1907, %v1925
        %1927 = vdwg.mxu0
        %v1930 = vrot.slane %v1866, 3
        %v1931 = vrot.slane %v1867, 3
        %v1932 = vsel %vm1519, %v1930, %v1931
        %v1933 = vrot.slane %v1887, 2
        %v1935 = vsel %vm466, %v1932, 0
        %v1938 = vsel %vm245, %v1933, 0
        %1940 = vmatpush.bf16.msra.mxu0 0
        %1941 = vmatpush.bf16.msra.mxu0 0
        %1942 = vmatpush.bf16.msra.mxu0 0
        %1943 = vmatpush.bf16.msra.mxu0 0
        %1944 = vmatpush.bf16.msra.mxu0 0
        %1945 = vmatpush.bf16.msra.mxu0 0
        %1946 = vmatpush.bf16.msra.mxu0 0
        %1947 = vmatpush.bf16.msra.mxu0 %v1938
        %1948 = vmatmul.bf16.gmra.mxu0 %v1935
        %v1949 = vpop.f32.mrf.mxu0
        %v1950 = vadd.f32 0.0, %v1949
        %v1951 = vpop.f32.mrf.mxu0
        %v1952 = vadd.f32 0.0, %v1951
        %1953 = vdwg.mxu0
        %v1954 = vadd.f32 %v1924, %v1950
        %v1955 = vadd.f32 %v1926, %v1952
        %v1956 = vld [vmem:[#allocation8 + $0x80] sm:$0x3]
        %v1957 = vmax.f32 %v1954, 0.0
        %v1958 = vmax.f32 %v1955, 0.0
        %v1959 = vperm.slane %v1956, 0
        %v1960 = vmul.f32 %v1957, %v1959
        %v1961 = vmul.f32 %v1958, %v1959
        %v1962 = vperm.slane %v1956, 1
        %v1963 = vadd.f32 %v1960, %v1962
        %v1964 = vadd.f32 %v1961, %v1962
        %v1965 = vpack.c.bf16 %v1963, %v1963
        %v1966 = vpack.c.bf16 %v1964, %v1964
        %1969 = vrot.lane.b32.xlu0 %v1965, 6
        %v1970 = vpop.permute.xlu0 %1969
        %1971 = vrot.lane.b32.xlu0 %v1966, 6
        %v1972 = vpop.permute.xlu0 %1971
        %1975 = vst.msk [vmem:[#allocation2] sm:$0xf] %vm901, %v1970
        %1976 = vst.msk [vmem:[#allocation2 + $0x4] sm:$0xf] %vm901, %v1972
        %v1977 = vunpack.c.l.bf16 %v1965
        %v1978 = vunpack.c.l.bf16 %v1966
        %1979 = vrot.lane.b32.xlu0 %v1561, 120
        %v1980 = vpop.permute.xlu0 %1979
        %1981 = vrot.lane.b32.xlu0 %v1562, 120
        %v1982 = vpop.permute.xlu0 %1981
        %v1985 = vadd.f32 %v1977, %v1980
        %v1986 = vadd.f32 %v1978, %v1982
        %v1987 = vpack.c.bf16 %v1985, %v1985
        %v1988 = vpack.c.bf16 %v1986, %v1986
        %v1989 = vld [vmem:[#allocation6 + $0xa8] sm:$0x7]
        %v1992 = vunpack.c.l.b16 %v1987
        %v1993 = vunpack.c.l.b16 %v1988
        %v1994 = vpack.c.b16 %v1993, %v1992
        %v1996 = vshrl.u32 %v1994, 16
        %v1998 = vrot.slane %v1996, 6
        %v1999 = vshll.u32 %v1994, 16
        %v2001 = vrot.slane %v1999, 7
        %v2002 = vor.u32 %v1998, %v2001
        %v2004 = vsel %vm1454, 0, %v2002
        %v2005 = vsel %vm1454, %v2002, 0
        %v2007 = vshrl.u32 %v2004, 16
        %v2009 = vrot.slane %v2007, 1
        %v2010 = vshll.u32 %v2004, 16
        %v2012 = vrot.slane %v2010, 2
        %v2013 = vor.u32 %v2009, %v2012
        %v2015 = vshrl.u32 %v2005, 16
        %v2017 = vrot.slane %v2015, 1
        %v2018 = vshll.u32 %v2005, 16
        %v2020 = vrot.slane %v2018, 2
        %v2021 = vor.u32 %v2017, %v2020
        %v2022 = vsel %vm338, %v2013, %v2021
        %v2024 = vunpack.c.l.b16 %v1989
        %v2025 = vpack.c.b16 %v2024, %v2024
        %v2026 = vrot.slane %v2025, 1
        %v2028 = vsel %vm466, %v2022, 0
        %v2031 = vsel %vm245, %v2026, 0
        %2033 = vmatpush.bf16.msra.mxu0 0
        %2034 = vmatpush.bf16.msra.mxu0 0
        %2035 = vmatpush.bf16.msra.mxu0 0
        %2036 = vmatpush.bf16.msra.mxu0 0
        %2037 = vmatpush.bf16.msra.mxu0 0
        %2038 = vmatpush.bf16.msra.mxu0 0
        %2039 = vmatpush.bf16.msra.mxu0 0
        %2040 = vmatpush.bf16.msra.mxu0 %v2031
        %2041 = vmatmul.bf16.gmra.mxu0 %v2028
        %v2042 = vpop.f32.mrf.mxu0
        %v2043 = vadd.f32 0.0, %v2042
        %v2044 = vpop.f32.mrf.mxu0
        %v2045 = vadd.f32 0.0, %v2044
        %2046 = vdwg.mxu0
        %v2047 = vsel %vm466, %v2004, 0
        %v2050 = vsel %vm245, %v1989, 0
        %2052 = vmatpush.bf16.msra.mxu0 0
        %2053 = vmatpush.bf16.msra.mxu0 0
        %2054 = vmatpush.bf16.msra.mxu0 0
        %2055 = vmatpush.bf16.msra.mxu0 0
        %2056 = vmatpush.bf16.msra.mxu0 0
        %2057 = vmatpush.bf16.msra.mxu0 0
        %2058 = vmatpush.bf16.msra.mxu0 0
        %2059 = vmatpush.bf16.msra.mxu0 %v2050
        %2060 = vmatmul.bf16.gmra.mxu0 %v2047
        %v2061 = vpop.f32.mrf.mxu0
        %v2062 = vadd.f32 %v2043, %v2061
        %v2063 = vpop.f32.mrf.mxu0
        %v2064 = vadd.f32 %v2045, %v2063
        %2065 = vdwg.mxu0
        %v2068 = vrot.slane %v2004, 3
        %v2069 = vrot.slane %v2005, 3
        %v2070 = vsel %vm1519, %v2068, %v2069
        %v2071 = vrot.slane %v2025, 2
        %v2073 = vsel %vm466, %v2070, 0
        %v2076 = vsel %vm245, %v2071, 0
        %2078 = vmatpush.bf16.msra.mxu0 0
        %2079 = vmatpush.bf16.msra.mxu0 0
        %2080 = vmatpush.bf16.msra.mxu0 0
        %2081 = vmatpush.bf16.msra.mxu0 0
        %2082 = vmatpush.bf16.msra.mxu0 0
        %2083 = vmatpush.bf16.msra.mxu0 0
        %2084 = vmatpush.bf16.msra.mxu0 0
        %2085 = vmatpush.bf16.msra.mxu0 %v2076
        %2086 = vmatmul.bf16.gmra.mxu0 %v2073
        %v2087 = vpop.f32.mrf.mxu0
        %v2088 = vadd.f32 0.0, %v2087
        %v2089 = vpop.f32.mrf.mxu0
        %v2090 = vadd.f32 0.0, %v2089
        %2091 = vdwg.mxu0
        %v2092 = vadd.f32 %v2062, %v2088
        %v2093 = vadd.f32 %v2064, %v2090
        %v2094 = vld [vmem:[#allocation8 + $0x88] sm:$0x3]
        %v2095 = vmax.f32 %v2092, 0.0
        %v2096 = vmax.f32 %v2093, 0.0
        %v2097 = vperm.slane %v2094, 0
        %v2098 = vmul.f32 %v2095, %v2097
        %v2099 = vmul.f32 %v2096, %v2097
        %v2100 = vperm.slane %v2094, 1
        %v2101 = vadd.f32 %v2098, %v2100
        %v2102 = vadd.f32 %v2099, %v2100
        %v2103 = vpack.c.bf16 %v2101, %v2101
        %v2104 = vpack.c.bf16 %v2102, %v2102
        %2107 = vrot.lane.b32.xlu0 %v2103, 8
        %v2108 = vpop.permute.xlu0 %2107
        %2109 = vrot.lane.b32.xlu0 %v2104, 8
        %v2110 = vpop.permute.xlu0 %2109
        %2113 = vst.msk [vmem:[#allocation2] sm:$0xf] %vm1019, %v2108
        %2114 = vst.msk [vmem:[#allocation2 + $0x4] sm:$0xf] %vm1019, %v2110
        %v2115 = vunpack.c.l.bf16 %v2103
        %v2116 = vunpack.c.l.bf16 %v2104
        %2117 = vrot.lane.b32.xlu0 %v1561, 118
        %v2118 = vpop.permute.xlu0 %2117
        %2119 = vrot.lane.b32.xlu0 %v1562, 118
        %v2120 = vpop.permute.xlu0 %2119
        %v2123 = vadd.f32 %v2115, %v2118
        %v2124 = vadd.f32 %v2116, %v2120
        %v2125 = vpack.c.bf16 %v2123, %v2123
        %v2126 = vpack.c.bf16 %v2124, %v2124
        %v2127 = vld [vmem:[#allocation6 + $0xb0] sm:$0x7]
        %v2130 = vunpack.c.l.b16 %v2125
        %v2131 = vunpack.c.l.b16 %v2126
        %v2132 = vpack.c.b16 %v2131, %v2130
        %v2134 = vshrl.u32 %v2132, 16
        %v2136 = vrot.slane %v2134, 6
        %v2137 = vshll.u32 %v2132, 16
        %v2139 = vrot.slane %v2137, 7
        %v2140 = vor.u32 %v2136, %v2139
        %v2142 = vsel %vm1454, 0, %v2140
        %v2143 = vsel %vm1454, %v2140, 0
        %v2145 = vshrl.u32 %v2142, 16
        %v2147 = vrot.slane %v2145, 1
        %v2148 = vshll.u32 %v2142, 16
        %v2150 = vrot.slane %v2148, 2
        %v2151 = vor.u32 %v2147, %v2150
        %v2153 = vshrl.u32 %v2143, 16
        %v2155 = vrot.slane %v2153, 1
        %v2156 = vshll.u32 %v2143, 16
        %v2158 = vrot.slane %v2156, 2
        %v2159 = vor.u32 %v2155, %v2158
        %v2160 = vsel %vm338, %v2151, %v2159
        %v2162 = vunpack.c.l.b16 %v2127
        %v2163 = vpack.c.b16 %v2162, %v2162
        %v2164 = vrot.slane %v2163, 1
        %v2166 = vsel %vm466, %v2160, 0
        %v2169 = vsel %vm245, %v2164, 0
        %2171 = vmatpush.bf16.msra.mxu0 0
        %2172 = vmatpush.bf16.msra.mxu0 0
        %2173 = vmatpush.bf16.msra.mxu0 0
        %2174 = vmatpush.bf16.msra.mxu0 0
        %2175 = vmatpush.bf16.msra.mxu0 0
        %2176 = vmatpush.bf16.msra.mxu0 0
        %2177 = vmatpush.bf16.msra.mxu0 0
        %2178 = vmatpush.bf16.msra.mxu0 %v2169
        %2179 = vmatmul.bf16.gmra.mxu0 %v2166
        %v2180 = vpop.f32.mrf.mxu0
        %v2181 = vadd.f32 0.0, %v2180
        %v2182 = vpop.f32.mrf.mxu0
        %v2183 = vadd.f32 0.0, %v2182
        %2184 = vdwg.mxu0
        %v2185 = vsel %vm466, %v2142, 0
        %v2188 = vsel %vm245, %v2127, 0
        %2190 = vmatpush.bf16.msra.mxu0 0
        %2191 = vmatpush.bf16.msra.mxu0 0
        %2192 = vmatpush.bf16.msra.mxu0 0
        %2193 = vmatpush.bf16.msra.mxu0 0
        %2194 = vmatpush.bf16.msra.mxu0 0
        %2195 = vmatpush.bf16.msra.mxu0 0
        %2196 = vmatpush.bf16.msra.mxu0 0
        %2197 = vmatpush.bf16.msra.mxu0 %v2188
        %2198 = vmatmul.bf16.gmra.mxu0 %v2185
        %v2199 = vpop.f32.mrf.mxu0
        %v2200 = vadd.f32 %v2181, %v2199
        %v2201 = vpop.f32.mrf.mxu0
        %v2202 = vadd.f32 %v2183, %v2201
        %2203 = vdwg.mxu0
        %v2206 = vrot.slane %v2142, 3
        %v2207 = vrot.slane %v2143, 3
        %v2208 = vsel %vm1519, %v2206, %v2207
        %v2209 = vrot.slane %v2163, 2
        %v2211 = vsel %vm466, %v2208, 0
        %v2214 = vsel %vm245, %v2209, 0
        %2216 = vmatpush.bf16.msra.mxu0 0
        %2217 = vmatpush.bf16.msra.mxu0 0
        %2218 = vmatpush.bf16.msra.mxu0 0
        %2219 = vmatpush.bf16.msra.mxu0 0
        %2220 = vmatpush.bf16.msra.mxu0 0
        %2221 = vmatpush.bf16.msra.mxu0 0
        %2222 = vmatpush.bf16.msra.mxu0 0
        %2223 = vmatpush.bf16.msra.mxu0 %v2214
        %2224 = vmatmul.bf16.gmra.mxu0 %v2211
        %v2225 = vpop.f32.mrf.mxu0
        %v2226 = vadd.f32 0.0, %v2225
        %v2227 = vpop.f32.mrf.mxu0
        %v2228 = vadd.f32 0.0, %v2227
        %2229 = vdwg.mxu0
        %v2230 = vadd.f32 %v2200, %v2226
        %v2231 = vadd.f32 %v2202, %v2228
        %v2232 = vld [vmem:[#allocation8 + $0x90] sm:$0x3]
        %v2233 = vmax.f32 %v2230, 0.0
        %v2234 = vmax.f32 %v2231, 0.0
        %v2235 = vperm.slane %v2232, 0
        %v2236 = vmul.f32 %v2233, %v2235
        %v2237 = vmul.f32 %v2234, %v2235
        %v2238 = vperm.slane %v2232, 1
        %v2239 = vadd.f32 %v2236, %v2238
        %v2240 = vadd.f32 %v2237, %v2238
        %v2241 = vpack.c.bf16 %v2239, %v2239
        %v2242 = vpack.c.bf16 %v2240, %v2240
        %2245 = vrot.lane.b32.xlu0 %v2241, 10
        %v2246 = vpop.permute.xlu0 %2245
        %2247 = vrot.lane.b32.xlu0 %v2242, 10
        %v2248 = vpop.permute.xlu0 %2247
        %2251 = vst.msk [vmem:[#allocation2] sm:$0xf] %vm1137, %v2246
        %2252 = vst.msk [vmem:[#allocation2 + $0x4] sm:$0xf] %vm1137, %v2248
        %v2253 = vunpack.c.l.bf16 %v2241
        %v2254 = vunpack.c.l.bf16 %v2242
        %2255 = vrot.lane.b32.xlu0 %v1561, 116
        %v2256 = vpop.permute.xlu0 %2255
        %2257 = vrot.lane.b32.xlu0 %v1562, 116
        %v2258 = vpop.permute.xlu0 %2257
        %v2261 = vadd.f32 %v2253, %v2256
        %v2262 = vadd.f32 %v2254, %v2258
        %v2263 = vpack.c.bf16 %v2261, %v2261
        %v2264 = vpack.c.bf16 %v2262, %v2262
        %v2265 = vld [vmem:[#allocation6 + $0xb8] sm:$0x7]
        %v2268 = vunpack.c.l.b16 %v2263
        %v2269 = vunpack.c.l.b16 %v2264
        %v2270 = vpack.c.b16 %v2269, %v2268
        %v2272 = vshrl.u32 %v2270, 16
        %v2274 = vrot.slane %v2272, 6
        %v2275 = vshll.u32 %v2270, 16
        %v2277 = vrot.slane %v2275, 7
        %v2278 = vor.u32 %v2274, %v2277
        %v2280 = vsel %vm1454, 0, %v2278
        %v2281 = vsel %vm1454, %v2278, 0
        %v2283 = vshrl.u32 %v2280, 16
        %v2285 = vrot.slane %v2283, 1
        %v2286 = vshll.u32 %v2280, 16
        %v2288 = vrot.slane %v2286, 2
        %v2289 = vor.u32 %v2285, %v2288
        %v2291 = vshrl.u32 %v2281, 16
        %v2293 = vrot.slane %v2291, 1
        %v2294 = vshll.u32 %v2281, 16
        %v2296 = vrot.slane %v2294, 2
        %v2297 = vor.u32 %v2293, %v2296
        %v2298 = vsel %vm338, %v2289, %v2297
        %v2300 = vunpack.c.l.b16 %v2265
        %v2301 = vpack.c.b16 %v2300, %v2300
        %v2302 = vrot.slane %v2301, 1
        %v2304 = vsel %vm466, %v2298, 0
        %v2307 = vsel %vm245, %v2302, 0
        %2309 = vmatpush.bf16.msra.mxu0 0
        %2310 = vmatpush.bf16.msra.mxu0 0
        %2311 = vmatpush.bf16.msra.mxu0 0
        %2312 = vmatpush.bf16.msra.mxu0 0
        %2313 = vmatpush.bf16.msra.mxu0 0
        %2314 = vmatpush.bf16.msra.mxu0 0
        %2315 = vmatpush.bf16.msra.mxu0 0
        %2316 = vmatpush.bf16.msra.mxu0 %v2307
        %2317 = vmatmul.bf16.gmra.mxu0 %v2304
        %v2318 = vpop.f32.mrf.mxu0
        %v2319 = vadd.f32 0.0, %v2318
        %v2320 = vpop.f32.mrf.mxu0
        %v2321 = vadd.f32 0.0, %v2320
        %2322 = vdwg.mxu0
        %v2323 = vsel %vm466, %v2280, 0
        %v2326 = vsel %vm245, %v2265, 0
        %2328 = vmatpush.bf16.msra.mxu0 0
        %2329 = vmatpush.bf16.msra.mxu0 0
        %2330 = vmatpush.bf16.msra.mxu0 0
        %2331 = vmatpush.bf16.msra.mxu0 0
        %2332 = vmatpush.bf16.msra.mxu0 0
        %2333 = vmatpush.bf16.msra.mxu0 0
        %2334 = vmatpush.bf16.msra.mxu0 0
        %2335 = vmatpush.bf16.msra.mxu0 %v2326
        %2336 = vmatmul.bf16.gmra.mxu0 %v2323
        %v2337 = vpop.f32.mrf.mxu0
        %v2338 = vadd.f32 %v2319, %v2337
        %v2339 = vpop.f32.mrf.mxu0
        %v2340 = vadd.f32 %v2321, %v2339
        %2341 = vdwg.mxu0
        %v2344 = vrot.slane %v2280, 3
        %v2345 = vrot.slane %v2281, 3
        %v2346 = vsel %vm1519, %v2344, %v2345
        %v2347 = vrot.slane %v2301, 2
        %v2349 = vsel %vm466, %v2346, 0
        %v2352 = vsel %vm245, %v2347, 0
        %2354 = vmatpush.bf16.msra.mxu0 0
        %2355 = vmatpush.bf16.msra.mxu0 0
        %2356 = vmatpush.bf16.msra.mxu0 0
        %2357 = vmatpush.bf16.msra.mxu0 0
        %2358 = vmatpush.bf16.msra.mxu0 0
        %2359 = vmatpush.bf16.msra.mxu0 0
        %2360 = vmatpush.bf16.msra.mxu0 0
        %2361 = vmatpush.bf16.msra.mxu0 %v2352
        %2362 = vmatmul.bf16.gmra.mxu0 %v2349
        %v2363 = vpop.f32.mrf.mxu0
        %v2364 = vadd.f32 0.0, %v2363
        %v2365 = vpop.f32.mrf.mxu0
        %v2366 = vadd.f32 0.0, %v2365
        %2367 = vdwg.mxu0
        %v2368 = vadd.f32 %v2338, %v2364
        %v2369 = vadd.f32 %v2340, %v2366
        %v2370 = vld [vmem:[#allocation8 + $0x98] sm:$0x3]
        %v2371 = vmax.f32 %v2368, 0.0
        %v2372 = vmax.f32 %v2369, 0.0
        %v2373 = vperm.slane %v2370, 0
        %v2374 = vmul.f32 %v2371, %v2373
        %v2375 = vmul.f32 %v2372, %v2373
        %v2376 = vperm.slane %v2370, 1
        %v2377 = vadd.f32 %v2374, %v2376
        %v2378 = vadd.f32 %v2375, %v2376
        %v2379 = vpack.c.bf16 %v2377, %v2377
        %v2380 = vpack.c.bf16 %v2378, %v2378
        %2383 = vrot.lane.b32.xlu0 %v2379, 12
        %v2384 = vpop.permute.xlu0 %2383
        %2385 = vrot.lane.b32.xlu0 %v2380, 12
        %v2386 = vpop.permute.xlu0 %2385
        %2389 = vst.msk [vmem:[#allocation2] sm:$0xf] %vm1255, %v2384
        %2390 = vst.msk [vmem:[#allocation2 + $0x4] sm:$0xf] %vm1255, %v2386
        %2391 = vst.msk [vmem:[#allocation2] sm:$0xf] %vm1258, %v1435
        %2392 = vst.msk [vmem:[#allocation2 + $0x4] sm:$0xf] %vm1258, %v1436
        %v2393 = vld [vmem:[#allocation2] sm:$0xf]
        %v2394 = vld [vmem:[#allocation2 + $0x4] sm:$0xf]
        %v2395 = vld [vmem:[#allocation6 + $0xc0] sm:$0xf]
        %v2396 = vld [vmem:[#allocation6 + $0xc4] sm:$0xf]
        %v2397 = vld [vmem:[#allocation8 + $0xa0] sm:$0x3]
        %v2400 = vunpack.c.l.b16 %v2393
        %v2401 = vunpack.c.l.b16 %v2394
        %v2402 = vpack.c.b16 %v2401, %v2400
        %v2405 = vunpack.c.l.b16 %v2395
        %v2406 = vunpack.c.l.b16 %v2396
        %v2407 = vpack.c.b16 %v2406, %v2405
        %v2410 = vsel %vm267, %v2402, 0
        %2412 = vmatpush.bf16.msra.mxu0 0
        %2413 = vmatpush.bf16.msra.mxu0 0
        %2414 = vmatpush.bf16.msra.mxu0 0
        %2415 = vmatpush.bf16.msra.mxu0 0
        %2416 = vmatpush.bf16.msra.mxu0 0
        %2417 = vmatpush.bf16.msra.mxu0 0
        %2418 = vmatpush.bf16.msra.mxu0 0
        %2419 = vmatpush.bf16.msra.mxu0 %v2407
        %2420 = vmatmul.bf16.gmra.mxu0 %v2410
        %v2421 = vpop.f32.mrf.mxu0
        %v2422 = vadd.f32 0.0, %v2421
        %v2423 = vpop.f32.mrf.mxu0
        %v2424 = vadd.f32 0.0, %v2423
        %2425 = vdwg.mxu0
        %v2426 = vmax.f32 %v2422, 0.0
        %v2427 = vmax.f32 %v2424, 0.0
        %v2428 = vperm.slane %v2397, 0
        %v2429 = vmul.f32 %v2426, %v2428
        %v2430 = vmul.f32 %v2427, %v2428
        %v2431 = vperm.slane %v2397, 1
        %v2432 = vadd.f32 %v2429, %v2431
        %v2433 = vadd.f32 %v2430, %v2431
        %v2434 = vpack.c.bf16 %v2432, %v2432
        %v2435 = vpack.c.bf16 %v2433, %v2433
        %v2436 = vld [vmem:[#allocation6 + $0xc8] sm:$0xf]
        %v2437 = vld [vmem:[#allocation6 + $0xcc] sm:$0xf]
        %v2438 = vld [vmem:[#allocation8 + $0xa8] sm:$0x1]
        %v2439 = vld [vmem:[#allocation6 + $0xd0] sm:$0xf]
        %v2440 = vld [vmem:[#allocation8 + $0xb0] sm:$0x1]
        %v2441 = vunpack.c.l.bf16 %v2434
        %v2442 = vunpack.c.l.bf16 %v2435
        %v2443 = vsel %vm267, %v2441, 0.0
        %v2444 = vsel %vm267, %v2442, 0.0
        %v2445 = vadd.f32 %v2443, %v2444
        %v2446 = vrot.slane %v2445, 4
        %v2447 = vadd.f32 %v2445, %v2446
        %v2448 = vrot.slane %v2447, 2
        %v2449 = vadd.f32 %v2447, %v2448
        %v2450 = vrot.slane %v2449, 1
        %v2451 = vadd.f32 %v2449, %v2450
        %v2452 = vmul.f32 %v2451, %v1326
        %v2453 = vpack.c.bf16 %v2452, %v2452
        %v2456 = vunpack.c.l.b16 %v2436
        %v2457 = vunpack.c.l.b16 %v2437
        %v2458 = vpack.c.b16 %v2457, %v2456
        %v2461 = vsel %vm267, %v2453, 0
        %2463 = vmatpush.bf16.msra.mxu0 0
        %2464 = vmatpush.bf16.msra.mxu0 0
        %2465 = vmatpush.bf16.msra.mxu0 0
        %2466 = vmatpush.bf16.msra.mxu0 0
        %2467 = vmatpush.bf16.msra.mxu0 0
        %2468 = vmatpush.bf16.msra.mxu0 0
        %2469 = vmatpush.bf16.msra.mxu0 0
        %2470 = vmatpush.bf16.msra.mxu0 %v2458
        %2471 = vmatmul.bf16.gmra.mxu0 %v2461
        %v2472 = vpop.f32.mrf.mxu0
        %v2473 = vadd.f32 %v2438, %v2472
        %v2474 = vpop.f32.mrf.mxu0
        %2475 = vdwg.mxu0
        %v2476 = vmax.f32 %v2473, 0.0
        %v2477 = vpack.c.bf16 %v2476, %v2476
        %v2479 = vsel %vm1353, %v2477, 0
        %v2482 = vsel %vm1357, %v2439, 0
        %2484 = vmatpush.bf16.msra.mxu0 0
        %2485 = vmatpush.bf16.msra.mxu0 0
        %2486 = vmatpush.bf16.msra.mxu0 0
        %2487 = vmatpush.bf16.msra.mxu0 0
        %2488 = vmatpush.bf16.msra.mxu0 0
        %2489 = vmatpush.bf16.msra.mxu0 0
        %2490 = vmatpush.bf16.msra.mxu0 0
        %2491 = vmatpush.bf16.msra.mxu0 %v2482
        %2492 = vmatmul.bf16.gmra.mxu0 %v2479
        %v2493 = vpop.f32.mrf.mxu0
        %v2494 = vadd.f32 %v2440, %v2493
        %v2495 = vpop.f32.mrf.mxu0
        %2496 = vdwg.mxu0
        %v2497 = vxor.u32 %v2494, 2147483648
        %v2498 = vmul.f32 %v2497, 1.442695
        %v2499 = vpow.pop %v2498
        %v2500 = vadd.f32 %v2499, 1.0
        %v2501 = vrcp.pop %v2500
        %v2502 = vmul.f32 %v2500, %v2501
        %v2503 = vsub.f32 1.0, %v2502
        %v2504 = vmul.f32 %v2501, %v2503
        %v2505 = vadd.f32 %v2501, %v2504
        %vm2506 = vweird.f32 %v2500
        %vm2507 = vweird.f32 %v2501
        %vm2508 = vmor %vm2506, %vm2507
        %v2509 = vsel %vm2508, %v2501, %v2505
        %v2510 = vand.u32 2147483647, %v2500
        %vm2511 = vcmp.eq.f32.partialorder %v2510, 8.507059e+37
        %v2512 = vand.u32 %v2500, 2147483648
        %v2513 = vor.u32 1.1754944e-38, %v2512
        %v2514 = vsel %vm2511, %v2513, %v2509
        %v2515 = vmul.f32 1.0, %v2514
        %v2516 = vperm.slane %v2515, 0
        %v2517 = vmul.f32 %v2441, %v2516
        %v2518 = vmul.f32 %v2442, %v2516
        %v2519 = vadd.f32 %v2517, %v1398
        %v2520 = vadd.f32 %v2518, %v1399
        %v2521 = vadd.f32 %v1398, %v2519
        %v2522 = vadd.f32 %v1399, %v2520
        %v2523 = vld [vmem:[#allocation6 + $0xd8] sm:$0xf]
        %v2524 = vld [vmem:[#allocation6 + $0xdc] sm:$0xf]
        %v2525 = vld [vmem:[#allocation8 + $0xb8] sm:$0x3]
        %v2526 = vpack.c.bf16 %v2522, %v2521
        %v2529 = vunpack.c.l.b16 %v2523
        %v2530 = vunpack.c.l.b16 %v2524
        %v2531 = vpack.c.b16 %v2530, %v2529
        %v2534 = vsel %vm267, %v2526, 0
        %2536 = vmatpush.bf16.msra.mxu0 0
        %2537 = vmatpush.bf16.msra.mxu0 0
        %2538 = vmatpush.bf16.msra.mxu0 0
        %2539 = vmatpush.bf16.msra.mxu0 0
        %2540 = vmatpush.bf16.msra.mxu0 0
        %2541 = vmatpush.bf16.msra.mxu0 0
        %2542 = vmatpush.bf16.msra.mxu0 0
        %2543 = vmatpush.bf16.msra.mxu0 %v2531
        %2544 = vmatmul.bf16.gmra.mxu0 %v2534
        %v2545 = vpop.f32.mrf.mxu0
        %v2546 = vadd.f32 0.0, %v2545
        %v2547 = vpop.f32.mrf.mxu0
        %v2548 = vadd.f32 0.0, %v2547
        %2549 = vdwg.mxu0
        %v2550 = vmax.f32 %v2546, 0.0
        %v2551 = vmax.f32 %v2548, 0.0
        %v2552 = vperm.slane %v2525, 0
        %v2553 = vmul.f32 %v2550, %v2552
        %v2554 = vmul.f32 %v2551, %v2552
        %v2555 = vperm.slane %v2525, 1
        %v2556 = vadd.f32 %v2553, %v2555
        %v2557 = vadd.f32 %v2554, %v2555
        %v2558 = vpack.c.bf16 %v2556, %v2556
        %v2559 = vpack.c.bf16 %v2557, %v2557
        %v2560 = vld [vmem:[#allocation6 + $0xe0] sm:$0x7]
        %v2563 = vunpack.c.l.b16 %v2558
        %v2564 = vunpack.c.l.b16 %v2559
        %v2565 = vpack.c.b16 %v2564, %v2563
        %v2566 = vrot.slane %v2565, 6
        %vm2567 = vcmask 1041408
        %v2569 = vsel %vm2567, 0, %v2566
        %v2570 = vsel %vm2567, %v2566, 0
        %v2573 = vrot.slane %v2569, 2
        %v2574 = vrot.slane %v2570, 2
        %v2575 = vsel %vm373, %v2573, %v2574
        %v2577 = vunpack.c.l.b16 %v2560
        %v2578 = vpack.c.b16 %v2577, %v2577
        %v2579 = vrot.slane %v2578, 1
        %v2581 = vsel %vm466, %v2575, 0
        %v2584 = vsel %vm245, %v2579, 0
        %2586 = vmatpush.bf16.msra.mxu0 0
        %2587 = vmatpush.bf16.msra.mxu0 0
        %2588 = vmatpush.bf16.msra.mxu0 0
        %2589 = vmatpush.bf16.msra.mxu0 0
        %2590 = vmatpush.bf16.msra.mxu0 0
        %2591 = vmatpush.bf16.msra.mxu0 0
        %2592 = vmatpush.bf16.msra.mxu0 0
        %2593 = vmatpush.bf16.msra.mxu0 %v2584
        %2594 = vmatmul.bf16.gmra.mxu0 %v2581
        %v2595 = vpop.f32.mrf.mxu0
        %v2596 = vadd.f32 0.0, %v2595
        %v2597 = vpop.f32.mrf.mxu0
        %v2598 = vadd.f32 0.0, %v2597
        %2599 = vdwg.mxu0
        %v2600 = vsel %vm466, %v2569, 0
        %v2603 = vsel %vm245, %v2560, 0
        %2605 = vmatpush.bf16.msra.mxu0 0
        %2606 = vmatpush.bf16.msra.mxu0 0
        %2607 = vmatpush.bf16.msra.mxu0 0
        %2608 = vmatpush.bf16.msra.mxu0 0
        %2609 = vmatpush.bf16.msra.mxu0 0
        %2610 = vmatpush.bf16.msra.mxu0 0
        %2611 = vmatpush.bf16.msra.mxu0 0
        %2612 = vmatpush.bf16.msra.mxu0 %v2603
        %2613 = vmatmul.bf16.gmra.mxu0 %v2600
        %v2614 = vpop.f32.mrf.mxu0
        %v2615 = vadd.f32 %v2596, %v2614
        %v2616 = vpop.f32.mrf.mxu0
        %v2617 = vadd.f32 %v2598, %v2616
        %2618 = vdwg.mxu0
        %vm2619 = vcmask 1043456
        %v2620 = vrot.slane %v2569, 4
        %v2621 = vrot.slane %v2570, 4
        %v2622 = vsel %vm2619, %v2620, %v2621
        %v2623 = vrot.slane %v2578, 2
        %v2625 = vsel %vm466, %v2622, 0
        %v2628 = vsel %vm245, %v2623, 0
        %2630 = vmatpush.bf16.msra.mxu0 0
        %2631 = vmatpush.bf16.msra.mxu0 0
        %2632 = vmatpush.bf16.msra.mxu0 0
        %2633 = vmatpush.bf16.msra.mxu0 0
        %2634 = vmatpush.bf16.msra.mxu0 0
        %2635 = vmatpush.bf16.msra.mxu0 0
        %2636 = vmatpush.bf16.msra.mxu0 0
        %2637 = vmatpush.bf16.msra.mxu0 %v2628
        %2638 = vmatmul.bf16.gmra.mxu0 %v2625
        %v2639 = vpop.f32.mrf.mxu0
        %v2640 = vadd.f32 0.0, %v2639
        %v2641 = vpop.f32.mrf.mxu0
        %v2642 = vadd.f32 0.0, %v2641
        %2643 = vdwg.mxu0
        %v2644 = vadd.f32 %v2615, %v2640
        %v2645 = vadd.f32 %v2617, %v2642
        %v2646 = vld [vmem:[#allocation8 + $0xc0] sm:$0x3]
        %v2647 = vmax.f32 %v2644, 0.0
        %v2648 = vmax.f32 %v2645, 0.0
        %v2649 = vperm.slane %v2646, 0
        %v2650 = vmul.f32 %v2647, %v2649
        %v2651 = vmul.f32 %v2648, %v2649
        %v2652 = vperm.slane %v2646, 1
        %v2653 = vadd.f32 %v2650, %v2652
        %v2654 = vadd.f32 %v2651, %v2652
        %v2655 = vpack.c.bf16 %v2653, %v2653
        %v2656 = vpack.c.bf16 %v2654, %v2654
        %2657 = vst.msk [vmem:[#allocation2] sm:$0xf] %vm543, %v2655
        %2658 = vst.msk [vmem:[#allocation2 + $0x4] sm:$0xf] %vm543, %v2656
        %v2659 = vunpack.c.l.bf16 %v2655
        %v2660 = vunpack.c.l.bf16 %v2656
        %v2661 = vunpack.c.l.bf16 %v2558
        %v2662 = vunpack.c.l.bf16 %v2559
        %2665 = vrot.lane.b32.xlu0 %v2661, 126
        %v2666 = vpop.permute.xlu0 %2665
        %2667 = vrot.lane.b32.xlu0 %v2662, 126
        %v2668 = vpop.permute.xlu0 %2667
        %v2671 = vadd.f32 %v2659, %v2666
        %v2672 = vadd.f32 %v2660, %v2668
        %v2673 = vpack.c.bf16 %v2671, %v2671
        %v2674 = vpack.c.bf16 %v2672, %v2672
        %v2675 = vld [vmem:[#allocation6 + $0xe8] sm:$0x7]
        %v2678 = vunpack.c.l.b16 %v2673
        %v2679 = vunpack.c.l.b16 %v2674
        %v2680 = vpack.c.b16 %v2679, %v2678
        %v2681 = vrot.slane %v2680, 6
        %v2683 = vsel %vm2567, 0, %v2681
        %v2684 = vsel %vm2567, %v2681, 0
        %v2687 = vrot.slane %v2683, 2
        %v2688 = vrot.slane %v2684, 2
        %v2689 = vsel %vm373, %v2687, %v2688
        %v2691 = vunpack.c.l.b16 %v2675
        %v2692 = vpack.c.b16 %v2691, %v2691
        %v2693 = vrot.slane %v2692, 1
        %v2695 = vsel %vm466, %v2689, 0
        %v2698 = vsel %vm245, %v2693, 0
        %2700 = vmatpush.bf16.msra.mxu0 0
        %2701 = vmatpush.bf16.msra.mxu0 0
        %2702 = vmatpush.bf16.msra.mxu0 0
        %2703 = vmatpush.bf16.msra.mxu0 0
        %2704 = vmatpush.bf16.msra.mxu0 0
        %2705 = vmatpush.bf16.msra.mxu0 0
        %2706 = vmatpush.bf16.msra.mxu0 0
        %2707 = vmatpush.bf16.msra.mxu0 %v2698
        %2708 = vmatmul.bf16.gmra.mxu0 %v2695
        %v2709 = vpop.f32.mrf.mxu0
        %v2710 = vadd.f32 0.0, %v2709
        %v2711 = vpop.f32.mrf.mxu0
        %v2712 = vadd.f32 0.0, %v2711
        %2713 = vdwg.mxu0
        %v2714 = vsel %vm466, %v2683, 0
        %v2717 = vsel %vm245, %v2675, 0
        %2719 = vmatpush.bf16.msra.mxu0 0
        %2720 = vmatpush.bf16.msra.mxu0 0
        %2721 = vmatpush.bf16.msra.mxu0 0
        %2722 = vmatpush.bf16.msra.mxu0 0
        %2723 = vmatpush.bf16.msra.mxu0 0
        %2724 = vmatpush.bf16.msra.mxu0 0
        %2725 = vmatpush.bf16.msra.mxu0 0
        %2726 = vmatpush.bf16.msra.mxu0 %v2717
        %2727 = vmatmul.bf16.gmra.mxu0 %v2714
        %v2728 = vpop.f32.mrf.mxu0
        %v2729 = vadd.f32 %v2710, %v2728
        %v2730 = vpop.f32.mrf.mxu0
        %v2731 = vadd.f32 %v2712, %v2730
        %2732 = vdwg.mxu0
        %v2733 = vrot.slane %v2683, 4
        %v2734 = vrot.slane %v2684, 4
        %v2735 = vsel %vm2619, %v2733, %v2734
        %v2736 = vrot.slane %v2692, 2
        %v2738 = vsel %vm466, %v2735, 0
        %v2741 = vsel %vm245, %v2736, 0
        %2743 = vmatpush.bf16.msra.mxu0 0
        %2744 = vmatpush.bf16.msra.mxu0 0
        %2745 = vmatpush.bf16.msra.mxu0 0
        %2746 = vmatpush.bf16.msra.mxu0 0
        %2747 = vmatpush.bf16.msra.mxu0 0
        %2748 = vmatpush.bf16.msra.mxu0 0
        %2749 = vmatpush.bf16.msra.mxu0 0
        %2750 = vmatpush.bf16.msra.mxu0 %v2741
        %2751 = vmatmul.bf16.gmra.mxu0 %v2738
        %v2752 = vpop.f32.mrf.mxu0
        %v2753 = vadd.f32 0.0, %v2752
        %v2754 = vpop.f32.mrf.mxu0
        %v2755 = vadd.f32 0.0, %v2754
        %2756 = vdwg.mxu0
        %v2757 = vadd.f32 %v2729, %v2753
        %v2758 = vadd.f32 %v2731, %v2755
        %v2759 = vld [vmem:[#allocation8 + $0xc8] sm:$0x3]
        %v2760 = vmax.f32 %v2757, 0.0
        %v2761 = vmax.f32 %v2758, 0.0
        %v2762 = vperm.slane %v2759, 0
        %v2763 = vmul.f32 %v2760, %v2762
        %v2764 = vmul.f32 %v2761, %v2762
        %v2765 = vperm.slane %v2759, 1
        %v2766 = vadd.f32 %v2763, %v2765
        %v2767 = vadd.f32 %v2764, %v2765
        %v2768 = vpack.c.bf16 %v2766, %v2766
        %v2769 = vpack.c.bf16 %v2767, %v2767
        %2772 = vrot.lane.b32.xlu0 %v2768, 2
        %v2773 = vpop.permute.xlu0 %2772
        %2774 = vrot.lane.b32.xlu0 %v2769, 2
        %v2775 = vpop.permute.xlu0 %2774
        %2778 = vst.msk [vmem:[#allocation2] sm:$0xf] %vm665, %v2773
        %2779 = vst.msk [vmem:[#allocation2 + $0x4] sm:$0xf] %vm665, %v2775
        %v2780 = vunpack.c.l.bf16 %v2768
        %v2781 = vunpack.c.l.bf16 %v2769
        %2782 = vrot.lane.b32.xlu0 %v2661, 124
        %v2783 = vpop.permute.xlu0 %2782
        %2784 = vrot.lane.b32.xlu0 %v2662, 124
        %v2785 = vpop.permute.xlu0 %2784
        %v2788 = vadd.f32 %v2780, %v2783
        %v2789 = vadd.f32 %v2781, %v2785
        %v2790 = vpack.c.bf16 %v2788, %v2788
        %v2791 = vpack.c.bf16 %v2789, %v2789
        %v2792 = vld [vmem:[#allocation6 + $0xf0] sm:$0x7]
        %v2795 = vunpack.c.l.b16 %v2790
        %v2796 = vunpack.c.l.b16 %v2791
        %v2797 = vpack.c.b16 %v2796, %v2795
        %v2798 = vrot.slane %v2797, 6
        %v2800 = vsel %vm2567, 0, %v2798
        %v2801 = vsel %vm2567, %v2798, 0
        %v2804 = vrot.slane %v2800, 2
        %v2805 = vrot.slane %v2801, 2
        %v2806 = vsel %vm373, %v2804, %v2805
        %v2808 = vunpack.c.l.b16 %v2792
        %v2809 = vpack.c.b16 %v2808, %v2808
        %v2810 = vrot.slane %v2809, 1
        %v2812 = vsel %vm466, %v2806, 0
        %v2815 = vsel %vm245, %v2810, 0
        %2817 = vmatpush.bf16.msra.mxu0 0
        %2818 = vmatpush.bf16.msra.mxu0 0
        %2819 = vmatpush.bf16.msra.mxu0 0
        %2820 = vmatpush.bf16.msra.mxu0 0
        %2821 = vmatpush.bf16.msra.mxu0 0
        %2822 = vmatpush.bf16.msra.mxu0 0
        %2823 = vmatpush.bf16.msra.mxu0 0
        %2824 = vmatpush.bf16.msra.mxu0 %v2815
        %2825 = vmatmul.bf16.gmra.mxu0 %v2812
        %v2826 = vpop.f32.mrf.mxu0
        %v2827 = vadd.f32 0.0, %v2826
        %v2828 = vpop.f32.mrf.mxu0
        %v2829 = vadd.f32 0.0, %v2828
        %2830 = vdwg.mxu0
        %v2831 = vsel %vm466, %v2800, 0
        %v2834 = vsel %vm245, %v2792, 0
        %2836 = vmatpush.bf16.msra.mxu0 0
        %2837 = vmatpush.bf16.msra.mxu0 0
        %2838 = vmatpush.bf16.msra.mxu0 0
        %2839 = vmatpush.bf16.msra.mxu0 0
        %2840 = vmatpush.bf16.msra.mxu0 0
        %2841 = vmatpush.bf16.msra.mxu0 0
        %2842 = vmatpush.bf16.msra.mxu0 0
        %2843 = vmatpush.bf16.msra.mxu0 %v2834
        %2844 = vmatmul.bf16.gmra.mxu0 %v2831
        %v2845 = vpop.f32.mrf.mxu0
        %v2846 = vadd.f32 %v2827, %v2845
        %v2847 = vpop.f32.mrf.mxu0
        %v2848 = vadd.f32 %v2829, %v2847
        %2849 = vdwg.mxu0
        %v2850 = vrot.slane %v2800, 4
        %v2851 = vrot.slane %v2801, 4
        %v2852 = vsel %vm2619, %v2850, %v2851
        %v2853 = vrot.slane %v2809, 2
        %v2855 = vsel %vm466, %v2852, 0
        %v2858 = vsel %vm245, %v2853, 0
        %2860 = vmatpush.bf16.msra.mxu0 0
        %2861 = vmatpush.bf16.msra.mxu0 0
        %2862 = vmatpush.bf16.msra.mxu0 0
        %2863 = vmatpush.bf16.msra.mxu0 0
        %2864 = vmatpush.bf16.msra.mxu0 0
        %2865 = vmatpush.bf16.msra.mxu0 0
        %2866 = vmatpush.bf16.msra.mxu0 0
        %2867 = vmatpush.bf16.msra.mxu0 %v2858
        %2868 = vmatmul.bf16.gmra.mxu0 %v2855
        %v2869 = vpop.f32.mrf.mxu0
        %v2870 = vadd.f32 0.0, %v2869
        %v2871 = vpop.f32.mrf.mxu0
        %v2872 = vadd.f32 0.0, %v2871
        %2873 = vdwg.mxu0
        %v2874 = vadd.f32 %v2846, %v2870
        %v2875 = vadd.f32 %v2848, %v2872
        %v2876 = vld [vmem:[#allocation8 + $0xd0] sm:$0x3]
        %v2877 = vmax.f32 %v2874, 0.0
        %v2878 = vmax.f32 %v2875, 0.0
        %v2879 = vperm.slane %v2876, 0
        %v2880 = vmul.f32 %v2877, %v2879
        %v2881 = vmul.f32 %v2878, %v2879
        %v2882 = vperm.slane %v2876, 1
        %v2883 = vadd.f32 %v2880, %v2882
        %v2884 = vadd.f32 %v2881, %v2882
        %v2885 = vpack.c.bf16 %v2883, %v2883
        %v2886 = vpack.c.bf16 %v2884, %v2884
        %2889 = vrot.lane.b32.xlu0 %v2885, 4
        %v2890 = vpop.permute.xlu0 %2889
        %2891 = vrot.lane.b32.xlu0 %v2886, 4
        %v2892 = vpop.permute.xlu0 %2891
        %2895 = vst.msk [vmem:[#allocation2] sm:$0xf] %vm783, %v2890
        %2896 = vst.msk [vmem:[#allocation2 + $0x4] sm:$0xf] %vm783, %v2892
        %v2897 = vunpack.c.l.bf16 %v2885
        %v2898 = vunpack.c.l.bf16 %v2886
        %2899 = vrot.lane.b32.xlu0 %v2661, 122
        %v2900 = vpop.permute.xlu0 %2899
        %2901 = vrot.lane.b32.xlu0 %v2662, 122
        %v2902 = vpop.permute.xlu0 %2901
        %v2905 = vadd.f32 %v2897, %v2900
        %v2906 = vadd.f32 %v2898, %v2902
        %v2907 = vpack.c.bf16 %v2905, %v2905
        %v2908 = vpack.c.bf16 %v2906, %v2906
        %v2909 = vld [vmem:[#allocation6 + $0xf8] sm:$0x7]
        %v2912 = vunpack.c.l.b16 %v2907
        %v2913 = vunpack.c.l.b16 %v2908
        %v2914 = vpack.c.b16 %v2913, %v2912
        %v2915 = vrot.slane %v2914, 6
        %v2917 = vsel %vm2567, 0, %v2915
        %v2918 = vsel %vm2567, %v2915, 0
        %v2921 = vrot.slane %v2917, 2
        %v2922 = vrot.slane %v2918, 2
        %v2923 = vsel %vm373, %v2921, %v2922
        %v2925 = vunpack.c.l.b16 %v2909
        %v2926 = vpack.c.b16 %v2925, %v2925
        %v2927 = vrot.slane %v2926, 1
        %v2929 = vsel %vm466, %v2923, 0
        %v2932 = vsel %vm245, %v2927, 0
        %2934 = vmatpush.bf16.msra.mxu0 0
        %2935 = vmatpush.bf16.msra.mxu0 0
        %2936 = vmatpush.bf16.msra.mxu0 0
        %2937 = vmatpush.bf16.msra.mxu0 0
        %2938 = vmatpush.bf16.msra.mxu0 0
        %2939 = vmatpush.bf16.msra.mxu0 0
        %2940 = vmatpush.bf16.msra.mxu0 0
        %2941 = vmatpush.bf16.msra.mxu0 %v2932
        %2942 = vmatmul.bf16.gmra.mxu0 %v2929
        %v2943 = vpop.f32.mrf.mxu0
        %v2944 = vadd.f32 0.0, %v2943
        %v2945 = vpop.f32.mrf.mxu0
        %v2946 = vadd.f32 0.0, %v2945
        %2947 = vdwg.mxu0
        %v2948 = vsel %vm466, %v2917, 0
        %v2951 = vsel %vm245, %v2909, 0
        %2953 = vmatpush.bf16.msra.mxu0 0
        %2954 = vmatpush.bf16.msra.mxu0 0
        %2955 = vmatpush.bf16.msra.mxu0 0
        %2956 = vmatpush.bf16.msra.mxu0 0
        %2957 = vmatpush.bf16.msra.mxu0 0
        %2958 = vmatpush.bf16.msra.mxu0 0
        %2959 = vmatpush.bf16.msra.mxu0 0
        %2960 = vmatpush.bf16.msra.mxu0 %v2951
        %2961 = vmatmul.bf16.gmra.mxu0 %v2948
        %v2962 = vpop.f32.mrf.mxu0
        %v2963 = vadd.f32 %v2944, %v2962
        %v2964 = vpop.f32.mrf.mxu0
        %v2965 = vadd.f32 %v2946, %v2964
        %2966 = vdwg.mxu0
        %v2967 = vrot.slane %v2917, 4
        %v2968 = vrot.slane %v2918, 4
        %v2969 = vsel %vm2619, %v2967, %v2968
        %v2970 = vrot.slane %v2926, 2
        %v2972 = vsel %vm466, %v2969, 0
        %v2975 = vsel %vm245, %v2970, 0
        %2977 = vmatpush.bf16.msra.mxu0 0
        %2978 = vmatpush.bf16.msra.mxu0 0
        %2979 = vmatpush.bf16.msra.mxu0 0
        %2980 = vmatpush.bf16.msra.mxu0 0
        %2981 = vmatpush.bf16.msra.mxu0 0
        %2982 = vmatpush.bf16.msra.mxu0 0
        %2983 = vmatpush.bf16.msra.mxu0 0
        %2984 = vmatpush.bf16.msra.mxu0 %v2975
        %2985 = vmatmul.bf16.gmra.mxu0 %v2972
        %v2986 = vpop.f32.mrf.mxu0
        %v2987 = vadd.f32 0.0, %v2986
        %v2988 = vpop.f32.mrf.mxu0
        %v2989 = vadd.f32 0.0, %v2988
        %2990 = vdwg.mxu0
        %v2991 = vadd.f32 %v2963, %v2987
        %v2992 = vadd.f32 %v2965, %v2989
        %v2993 = vld [vmem:[#allocation8 + $0xd8] sm:$0x3]
        %v2994 = vmax.f32 %v2991, 0.0
        %v2995 = vmax.f32 %v2992, 0.0
        %v2996 = vperm.slane %v2993, 0
        %v2997 = vmul.f32 %v2994, %v2996
        %v2998 = vmul.f32 %v2995, %v2996
        %v2999 = vperm.slane %v2993, 1
        %v3000 = vadd.f32 %v2997, %v2999
        %v3001 = vadd.f32 %v2998, %v2999
        %v3002 = vpack.c.bf16 %v3000, %v3000
        %v3003 = vpack.c.bf16 %v3001, %v3001
        %3006 = vrot.lane.b32.xlu0 %v3002, 6
        %v3007 = vpop.permute.xlu0 %3006
        %3008 = vrot.lane.b32.xlu0 %v3003, 6
        %v3009 = vpop.permute.xlu0 %3008
        %3012 = vst.msk [vmem:[#allocation2] sm:$0xf] %vm901, %v3007
        %3013 = vst.msk [vmem:[#allocation2 + $0x4] sm:$0xf] %vm901, %v3009
        %v3014 = vunpack.c.l.bf16 %v3002
        %v3015 = vunpack.c.l.bf16 %v3003
        %3016 = vrot.lane.b32.xlu0 %v2661, 120
        %v3017 = vpop.permute.xlu0 %3016
        %3018 = vrot.lane.b32.xlu0 %v2662, 120
        %v3019 = vpop.permute.xlu0 %3018
        %v3022 = vadd.f32 %v3014, %v3017
        %v3023 = vadd.f32 %v3015, %v3019
        %v3024 = vpack.c.bf16 %v3022, %v3022
        %v3025 = vpack.c.bf16 %v3023, %v3023
        %v3026 = vld [vmem:[#allocation6 + $0x100] sm:$0x7]
        %v3029 = vunpack.c.l.b16 %v3024
        %v3030 = vunpack.c.l.b16 %v3025
        %v3031 = vpack.c.b16 %v3030, %v3029
        %v3032 = vrot.slane %v3031, 6
        %v3034 = vsel %vm2567, 0, %v3032
        %v3035 = vsel %vm2567, %v3032, 0
        %v3038 = vrot.slane %v3034, 2
        %v3039 = vrot.slane %v3035, 2
        %v3040 = vsel %vm373, %v3038, %v3039
        %v3042 = vunpack.c.l.b16 %v3026
        %v3043 = vpack.c.b16 %v3042, %v3042
        %v3044 = vrot.slane %v3043, 1
        %v3046 = vsel %vm466, %v3040, 0
        %v3049 = vsel %vm245, %v3044, 0
        %3051 = vmatpush.bf16.msra.mxu0 0
        %3052 = vmatpush.bf16.msra.mxu0 0
        %3053 = vmatpush.bf16.msra.mxu0 0
        %3054 = vmatpush.bf16.msra.mxu0 0
        %3055 = vmatpush.bf16.msra.mxu0 0
        %3056 = vmatpush.bf16.msra.mxu0 0
        %3057 = vmatpush.bf16.msra.mxu0 0
        %3058 = vmatpush.bf16.msra.mxu0 %v3049
        %3059 = vmatmul.bf16.gmra.mxu0 %v3046
        %v3060 = vpop.f32.mrf.mxu0
        %v3061 = vadd.f32 0.0, %v3060
        %v3062 = vpop.f32.mrf.mxu0
        %v3063 = vadd.f32 0.0, %v3062
        %3064 = vdwg.mxu0
        %v3065 = vsel %vm466, %v3034, 0
        %v3068 = vsel %vm245, %v3026, 0
        %3070 = vmatpush.bf16.msra.mxu0 0
        %3071 = vmatpush.bf16.msra.mxu0 0
        %3072 = vmatpush.bf16.msra.mxu0 0
        %3073 = vmatpush.bf16.msra.mxu0 0
        %3074 = vmatpush.bf16.msra.mxu0 0
        %3075 = vmatpush.bf16.msra.mxu0 0
        %3076 = vmatpush.bf16.msra.mxu0 0
        %3077 = vmatpush.bf16.msra.mxu0 %v3068
        %3078 = vmatmul.bf16.gmra.mxu0 %v3065
        %v3079 = vpop.f32.mrf.mxu0
        %v3080 = vadd.f32 %v3061, %v3079
        %v3081 = vpop.f32.mrf.mxu0
        %v3082 = vadd.f32 %v3063, %v3081
        %3083 = vdwg.mxu0
        %v3084 = vrot.slane %v3034, 4
        %v3085 = vrot.slane %v3035, 4
        %v3086 = vsel %vm2619, %v3084, %v3085
        %v3087 = vrot.slane %v3043, 2
        %v3089 = vsel %vm466, %v3086, 0
        %v3092 = vsel %vm245, %v3087, 0
        %3094 = vmatpush.bf16.msra.mxu0 0
        %3095 = vmatpush.bf16.msra.mxu0 0
        %3096 = vmatpush.bf16.msra.mxu0 0
        %3097 = vmatpush.bf16.msra.mxu0 0
        %3098 = vmatpush.bf16.msra.mxu0 0
        %3099 = vmatpush.bf16.msra.mxu0 0
        %3100 = vmatpush.bf16.msra.mxu0 0
        %3101 = vmatpush.bf16.msra.mxu0 %v3092
        %3102 = vmatmul.bf16.gmra.mxu0 %v3089
        %v3103 = vpop.f32.mrf.mxu0
        %v3104 = vadd.f32 0.0, %v3103
        %v3105 = vpop.f32.mrf.mxu0
        %v3106 = vadd.f32 0.0, %v3105
        %3107 = vdwg.mxu0
        %v3108 = vadd.f32 %v3080, %v3104
        %v3109 = vadd.f32 %v3082, %v3106
        %v3110 = vld [vmem:[#allocation8 + $0xe0] sm:$0x3]
        %v3111 = vmax.f32 %v3108, 0.0
        %v3112 = vmax.f32 %v3109, 0.0
        %v3113 = vperm.slane %v3110, 0
        %v3114 = vmul.f32 %v3111, %v3113
        %v3115 = vmul.f32 %v3112, %v3113
        %v3116 = vperm.slane %v3110, 1
        %v3117 = vadd.f32 %v3114, %v3116
        %v3118 = vadd.f32 %v3115, %v3116
        %v3119 = vpack.c.bf16 %v3117, %v3117
        %v3120 = vpack.c.bf16 %v3118, %v3118
        %3123 = vrot.lane.b32.xlu0 %v3119, 8
        %v3124 = vpop.permute.xlu0 %3123
        %3125 = vrot.lane.b32.xlu0 %v3120, 8
        %v3126 = vpop.permute.xlu0 %3125
        %3129 = vst.msk [vmem:[#allocation2] sm:$0xf] %vm1019, %v3124
        %3130 = vst.msk [vmem:[#allocation2 + $0x4] sm:$0xf] %vm1019, %v3126
        %v3131 = vunpack.c.l.bf16 %v3119
        %v3132 = vunpack.c.l.bf16 %v3120
        %3133 = vrot.lane.b32.xlu0 %v2661, 118
        %v3134 = vpop.permute.xlu0 %3133
        %3135 = vrot.lane.b32.xlu0 %v2662, 118
        %v3136 = vpop.permute.xlu0 %3135
        %v3139 = vadd.f32 %v3131, %v3134
        %v3140 = vadd.f32 %v3132, %v3136
        %v3141 = vpack.c.bf16 %v3139, %v3139
        %v3142 = vpack.c.bf16 %v3140, %v3140
        %v3143 = vld [vmem:[#allocation6 + $0x108] sm:$0x7]
        %v3146 = vunpack.c.l.b16 %v3141
        %v3147 = vunpack.c.l.b16 %v3142
        %v3148 = vpack.c.b16 %v3147, %v3146
        %v3149 = vrot.slane %v3148, 6
        %v3151 = vsel %vm2567, 0, %v3149
        %v3152 = vsel %vm2567, %v3149, 0
        %v3155 = vrot.slane %v3151, 2
        %v3156 = vrot.slane %v3152, 2
        %v3157 = vsel %vm373, %v3155, %v3156
        %v3159 = vunpack.c.l.b16 %v3143
        %v3160 = vpack.c.b16 %v3159, %v3159
        %v3161 = vrot.slane %v3160, 1
        %v3163 = vsel %vm466, %v3157, 0
        %v3166 = vsel %vm245, %v3161, 0
        %3168 = vmatpush.bf16.msra.mxu0 0
        %3169 = vmatpush.bf16.msra.mxu0 0
        %3170 = vmatpush.bf16.msra.mxu0 0
        %3171 = vmatpush.bf16.msra.mxu0 0
        %3172 = vmatpush.bf16.msra.mxu0 0
        %3173 = vmatpush.bf16.msra.mxu0 0
        %3174 = vmatpush.bf16.msra.mxu0 0
        %3175 = vmatpush.bf16.msra.mxu0 %v3166
        %3176 = vmatmul.bf16.gmra.mxu0 %v3163
        %v3177 = vpop.f32.mrf.mxu0
        %v3178 = vadd.f32 0.0, %v3177
        %v3179 = vpop.f32.mrf.mxu0
        %v3180 = vadd.f32 0.0, %v3179
        %3181 = vdwg.mxu0
        %v3182 = vsel %vm466, %v3151, 0
        %v3185 = vsel %vm245, %v3143, 0
        %3187 = vmatpush.bf16.msra.mxu0 0
        %3188 = vmatpush.bf16.msra.mxu0 0
        %3189 = vmatpush.bf16.msra.mxu0 0
        %3190 = vmatpush.bf16.msra.mxu0 0
        %3191 = vmatpush.bf16.msra.mxu0 0
        %3192 = vmatpush.bf16.msra.mxu0 0
        %3193 = vmatpush.bf16.msra.mxu0 0
        %3194 = vmatpush.bf16.msra.mxu0 %v3185
        %3195 = vmatmul.bf16.gmra.mxu0 %v3182
        %v3196 = vpop.f32.mrf.mxu0
        %v3197 = vadd.f32 %v3178, %v3196
        %v3198 = vpop.f32.mrf.mxu0
        %v3199 = vadd.f32 %v3180, %v3198
        %3200 = vdwg.mxu0
        %v3201 = vrot.slane %v3151, 4
        %v3202 = vrot.slane %v3152, 4
        %v3203 = vsel %vm2619, %v3201, %v3202
        %v3204 = vrot.slane %v3160, 2
        %v3206 = vsel %vm466, %v3203, 0
        %v3209 = vsel %vm245, %v3204, 0
        %3211 = vmatpush.bf16.msra.mxu0 0
        %3212 = vmatpush.bf16.msra.mxu0 0
        %3213 = vmatpush.bf16.msra.mxu0 0
        %3214 = vmatpush.bf16.msra.mxu0 0
        %3215 = vmatpush.bf16.msra.mxu0 0
        %3216 = vmatpush.bf16.msra.mxu0 0
        %3217 = vmatpush.bf16.msra.mxu0 0
        %3218 = vmatpush.bf16.msra.mxu0 %v3209
        %3219 = vmatmul.bf16.gmra.mxu0 %v3206
        %v3220 = vpop.f32.mrf.mxu0
        %v3221 = vadd.f32 0.0, %v3220
        %v3222 = vpop.f32.mrf.mxu0
        %v3223 = vadd.f32 0.0, %v3222
        %3224 = vdwg.mxu0
        %v3225 = vadd.f32 %v3197, %v3221
        %v3226 = vadd.f32 %v3199, %v3223
        %v3227 = vld [vmem:[#allocation8 + $0xe8] sm:$0x3]
        %v3228 = vmax.f32 %v3225, 0.0
        %v3229 = vmax.f32 %v3226, 0.0
        %v3230 = vperm.slane %v3227, 0
        %v3231 = vmul.f32 %v3228, %v3230
        %v3232 = vmul.f32 %v3229, %v3230
        %v3233 = vperm.slane %v3227, 1
        %v3234 = vadd.f32 %v3231, %v3233
        %v3235 = vadd.f32 %v3232, %v3233
        %v3236 = vpack.c.bf16 %v3234, %v3234
        %v3237 = vpack.c.bf16 %v3235, %v3235
        %3240 = vrot.lane.b32.xlu0 %v3236, 10
        %v3241 = vpop.permute.xlu0 %3240
        %3242 = vrot.lane.b32.xlu0 %v3237, 10
        %v3243 = vpop.permute.xlu0 %3242
        %3246 = vst.msk [vmem:[#allocation2] sm:$0xf] %vm1137, %v3241
        %3247 = vst.msk [vmem:[#allocation2 + $0x4] sm:$0xf] %vm1137, %v3243
        %v3248 = vunpack.c.l.bf16 %v3236
        %v3249 = vunpack.c.l.bf16 %v3237
        %3250 = vrot.lane.b32.xlu0 %v2661, 116
        %v3251 = vpop.permute.xlu0 %3250
        %3252 = vrot.lane.b32.xlu0 %v2662, 116
        %v3253 = vpop.permute.xlu0 %3252
        %v3256 = vadd.f32 %v3248, %v3251
        %v3257 = vadd.f32 %v3249, %v3253
        %v3258 = vpack.c.bf16 %v3256, %v3256
        %v3259 = vpack.c.bf16 %v3257, %v3257
        %v3260 = vld [vmem:[#allocation6 + $0x110] sm:$0x7]
        %v3263 = vunpack.c.l.b16 %v3258
        %v3264 = vunpack.c.l.b16 %v3259
        %v3265 = vpack.c.b16 %v3264, %v3263
        %v3266 = vrot.slane %v3265, 6
        %v3268 = vsel %vm2567, 0, %v3266
        %v3269 = vsel %vm2567, %v3266, 0
        %v3272 = vrot.slane %v3268, 2
        %v3273 = vrot.slane %v3269, 2
        %v3274 = vsel %vm373, %v3272, %v3273
        %v3276 = vunpack.c.l.b16 %v3260
        %v3277 = vpack.c.b16 %v3276, %v3276
        %v3278 = vrot.slane %v3277, 1
        %v3280 = vsel %vm466, %v3274, 0
        %v3283 = vsel %vm245, %v3278, 0
        %3285 = vmatpush.bf16.msra.mxu0 0
        %3286 = vmatpush.bf16.msra.mxu0 0
        %3287 = vmatpush.bf16.msra.mxu0 0
        %3288 = vmatpush.bf16.msra.mxu0 0
        %3289 = vmatpush.bf16.msra.mxu0 0
        %3290 = vmatpush.bf16.msra.mxu0 0
        %3291 = vmatpush.bf16.msra.mxu0 0
        %3292 = vmatpush.bf16.msra.mxu0 %v3283
        %3293 = vmatmul.bf16.gmra.mxu0 %v3280
        %v3294 = vpop.f32.mrf.mxu0
        %v3295 = vadd.f32 0.0, %v3294
        %v3296 = vpop.f32.mrf.mxu0
        %v3297 = vadd.f32 0.0, %v3296
        %3298 = vdwg.mxu0
        %v3299 = vsel %vm466, %v3268, 0
        %v3302 = vsel %vm245, %v3260, 0
        %3304 = vmatpush.bf16.msra.mxu0 0
        %3305 = vmatpush.bf16.msra.mxu0 0
        %3306 = vmatpush.bf16.msra.mxu0 0
        %3307 = vmatpush.bf16.msra.mxu0 0
        %3308 = vmatpush.bf16.msra.mxu0 0
        %3309 = vmatpush.bf16.msra.mxu0 0
        %3310 = vmatpush.bf16.msra.mxu0 0
        %3311 = vmatpush.bf16.msra.mxu0 %v3302
        %3312 = vmatmul.bf16.gmra.mxu0 %v3299
        %v3313 = vpop.f32.mrf.mxu0
        %v3314 = vadd.f32 %v3295, %v3313
        %v3315 = vpop.f32.mrf.mxu0
        %v3316 = vadd.f32 %v3297, %v3315
        %3317 = vdwg.mxu0
        %v3318 = vrot.slane %v3268, 4
        %v3319 = vrot.slane %v3269, 4
        %v3320 = vsel %vm2619, %v3318, %v3319
        %v3321 = vrot.slane %v3277, 2
        %v3323 = vsel %vm466, %v3320, 0
        %v3326 = vsel %vm245, %v3321, 0
        %3328 = vmatpush.bf16.msra.mxu0 0
        %3329 = vmatpush.bf16.msra.mxu0 0
        %3330 = vmatpush.bf16.msra.mxu0 0
        %3331 = vmatpush.bf16.msra.mxu0 0
        %3332 = vmatpush.bf16.msra.mxu0 0
        %3333 = vmatpush.bf16.msra.mxu0 0
        %3334 = vmatpush.bf16.msra.mxu0 0
        %3335 = vmatpush.bf16.msra.mxu0 %v3326
        %3336 = vmatmul.bf16.gmra.mxu0 %v3323
        %v3337 = vpop.f32.mrf.mxu0
        %v3338 = vadd.f32 0.0, %v3337
        %v3339 = vpop.f32.mrf.mxu0
        %v3340 = vadd.f32 0.0, %v3339
        %3341 = vdwg.mxu0
        %v3342 = vadd.f32 %v3314, %v3338
        %v3343 = vadd.f32 %v3316, %v3340
        %v3344 = vld [vmem:[#allocation8 + $0xf0] sm:$0x3]
        %v3345 = vmax.f32 %v3342, 0.0
        %v3346 = vmax.f32 %v3343, 0.0
        %v3347 = vperm.slane %v3344, 0
        %v3348 = vmul.f32 %v3345, %v3347
        %v3349 = vmul.f32 %v3346, %v3347
        %v3350 = vperm.slane %v3344, 1
        %v3351 = vadd.f32 %v3348, %v3350
        %v3352 = vadd.f32 %v3349, %v3350
        %v3353 = vpack.c.bf16 %v3351, %v3351
        %v3354 = vpack.c.bf16 %v3352, %v3352
        %3357 = vrot.lane.b32.xlu0 %v3353, 12
        %v3358 = vpop.permute.xlu0 %3357
        %3359 = vrot.lane.b32.xlu0 %v3354, 12
        %v3360 = vpop.permute.xlu0 %3359
        %3363 = vst.msk [vmem:[#allocation2] sm:$0xf] %vm1255, %v3358
        %3364 = vst.msk [vmem:[#allocation2 + $0x4] sm:$0xf] %vm1255, %v3360
        %3365 = vst.msk [vmem:[#allocation2] sm:$0xf] %vm1258, %v2558
        %3366 = vst.msk [vmem:[#allocation2 + $0x4] sm:$0xf] %vm1258, %v2559
        %v3367 = vld [vmem:[#allocation2] sm:$0xf]
        %v3368 = vld [vmem:[#allocation2 + $0x4] sm:$0xf]
        %v3369 = vld [vmem:[#allocation6 + $0x118] sm:$0xf]
        %v3370 = vld [vmem:[#allocation6 + $0x11c] sm:$0xf]
        %v3371 = vld [vmem:[#allocation8 + $0xf8] sm:$0x3]
        %v3374 = vunpack.c.l.b16 %v3367
        %v3375 = vunpack.c.l.b16 %v3368
        %v3376 = vpack.c.b16 %v3375, %v3374
        %v3379 = vunpack.c.l.b16 %v3369
        %v3380 = vunpack.c.l.b16 %v3370
        %v3381 = vpack.c.b16 %v3380, %v3379
        %v3384 = vsel %vm267, %v3376, 0
        %3386 = vmatpush.bf16.msra.mxu0 0
        %3387 = vmatpush.bf16.msra.mxu0 0
        %3388 = vmatpush.bf16.msra.mxu0 0
        %3389 = vmatpush.bf16.msra.mxu0 0
        %3390 = vmatpush.bf16.msra.mxu0 0
        %3391 = vmatpush.bf16.msra.mxu0 0
        %3392 = vmatpush.bf16.msra.mxu0 0
        %3393 = vmatpush.bf16.msra.mxu0 %v3381
        %3394 = vmatmul.bf16.gmra.mxu0 %v3384
        %v3395 = vpop.f32.mrf.mxu0
        %v3396 = vadd.f32 0.0, %v3395
        %v3397 = vpop.f32.mrf.mxu0
        %v3398 = vadd.f32 0.0, %v3397
        %3399 = vdwg.mxu0
        %v3400 = vmax.f32 %v3396, 0.0
        %v3401 = vmax.f32 %v3398, 0.0
        %v3402 = vperm.slane %v3371, 0
        %v3403 = vmul.f32 %v3400, %v3402
        %v3404 = vmul.f32 %v3401, %v3402
        %v3405 = vperm.slane %v3371, 1
        %v3406 = vadd.f32 %v3403, %v3405
        %v3407 = vadd.f32 %v3404, %v3405
        %v3408 = vpack.c.bf16 %v3406, %v3406
        %v3409 = vpack.c.bf16 %v3407, %v3407
        %v3410 = vld [vmem:[#allocation6 + $0x120] sm:$0xf]
        %v3411 = vld [vmem:[#allocation6 + $0x124] sm:$0xf]
        %v3412 = vld [vmem:[#allocation8 + $0x100] sm:$0x1]
        %v3413 = vld [vmem:[#allocation6 + $0x128] sm:$0xf]
        %v3414 = vld [vmem:[#allocation8 + $0x108] sm:$0x1]
        %v3415 = vunpack.c.l.bf16 %v3408
        %v3416 = vunpack.c.l.bf16 %v3409
        %v3417 = vsel %vm267, %v3415, 0.0
        %v3418 = vsel %vm267, %v3416, 0.0
        %v3419 = vadd.f32 %v3417, %v3418
        %v3420 = vrot.slane %v3419, 4
        %v3421 = vadd.f32 %v3419, %v3420
        %v3422 = vrot.slane %v3421, 2
        %v3423 = vadd.f32 %v3421, %v3422
        %v3424 = vrot.slane %v3423, 1
        %v3425 = vadd.f32 %v3423, %v3424
        %v3426 = vmul.f32 %v3425, %v1326
        %v3427 = vpack.c.bf16 %v3426, %v3426
        %v3430 = vunpack.c.l.b16 %v3410
        %v3431 = vunpack.c.l.b16 %v3411
        %v3432 = vpack.c.b16 %v3431, %v3430
        %v3435 = vsel %vm267, %v3427, 0
        %3437 = vmatpush.bf16.msra.mxu0 0
        %3438 = vmatpush.bf16.msra.mxu0 0
        %3439 = vmatpush.bf16.msra.mxu0 0
        %3440 = vmatpush.bf16.msra.mxu0 0
        %3441 = vmatpush.bf16.msra.mxu0 0
        %3442 = vmatpush.bf16.msra.mxu0 0
        %3443 = vmatpush.bf16.msra.mxu0 0
        %3444 = vmatpush.bf16.msra.mxu0 %v3432
        %3445 = vmatmul.bf16.gmra.mxu0 %v3435
        %v3446 = vpop.f32.mrf.mxu0
        %v3447 = vadd.f32 %v3412, %v3446
        %v3448 = vpop.f32.mrf.mxu0
        %3449 = vdwg.mxu0
        %v3450 = vmax.f32 %v3447, 0.0
        %v3451 = vpack.c.bf16 %v3450, %v3450
        %v3453 = vsel %vm1353, %v3451, 0
        %v3456 = vsel %vm1357, %v3413, 0
        %3458 = vmatpush.bf16.msra.mxu0 0
        %3459 = vmatpush.bf16.msra.mxu0 0
        %3460 = vmatpush.bf16.msra.mxu0 0
        %3461 = vmatpush.bf16.msra.mxu0 0
        %3462 = vmatpush.bf16.msra.mxu0 0
        %3463 = vmatpush.bf16.msra.mxu0 0
        %3464 = vmatpush.bf16.msra.mxu0 0
        %3465 = vmatpush.bf16.msra.mxu0 %v3456
        %3466 = vmatmul.bf16.gmra.mxu0 %v3453
        %v3467 = vpop.f32.mrf.mxu0
        %v3468 = vadd.f32 %v3414, %v3467
        %v3469 = vpop.f32.mrf.mxu0
        %3470 = vdwg.mxu0
        %v3471 = vxor.u32 %v3468, 2147483648
        %v3472 = vmul.f32 %v3471, 1.442695
        %v3473 = vpow.pop %v3472
        %v3474 = vadd.f32 %v3473, 1.0
        %v3475 = vrcp.pop %v3474
        %v3476 = vmul.f32 %v3474, %v3475
        %v3477 = vsub.f32 1.0, %v3476
        %v3478 = vmul.f32 %v3475, %v3477
        %v3479 = vadd.f32 %v3475, %v3478
        %vm3480 = vweird.f32 %v3474
        %vm3481 = vweird.f32 %v3475
        %vm3482 = vmor %vm3480, %vm3481
        %v3483 = vsel %vm3482, %v3475, %v3479
        %v3484 = vand.u32 2147483647, %v3474
        %vm3485 = vcmp.eq.f32.partialorder %v3484, 8.507059e+37
        %v3486 = vand.u32 %v3474, 2147483648
        %v3487 = vor.u32 1.1754944e-38, %v3486
        %v3488 = vsel %vm3485, %v3487, %v3483
        %v3489 = vmul.f32 1.0, %v3488
        %v3490 = vperm.slane %v3489, 0
        %v3491 = vmul.f32 %v3415, %v3490
        %v3492 = vmul.f32 %v3416, %v3490
        %v3493 = vadd.f32 %v3491, %v2521
        %v3494 = vadd.f32 %v3492, %v2522
        %3497 = vrot.lane.b32.xlu0 %v2519, 16
        %v3498 = vpop.permute.xlu0 %3497
        %3499 = vrot.lane.b32.xlu0 %v2520, 16
        %v3500 = vpop.permute.xlu0 %3499
        %3505 = vrot.lane.b32.xlu0 %v3493, 32
        %v3506 = vpop.permute.xlu0 %3505
        %3507 = vrot.lane.b32.xlu0 %v3494, 32
        %v3508 = vpop.permute.xlu0 %3507
        %v3511 = vsel %vm267, %v1396, %v3498
        %v3512 = vsel %vm267, %v1397, %v3500
        %vm3513 = vcmask 261120
        %v3514 = vsel %vm3513, %v3511, %v3506
        %v3515 = vsel %vm3513, %v3512, %v3508
        %v3516 = vld [vmem:[#allocation6 + $0x130] sm:$0xf]
        %v3517 = vld [vmem:[#allocation6 + $0x134] sm:$0xf]
        %v3518 = vld [vmem:[#allocation6 + $0x138] sm:$0xf]
        %v3519 = vld [vmem:[#allocation6 + $0x13c] sm:$0xf]
        %v3520 = vld [vmem:[#allocation6 + $0x140] sm:$0xf]
        %v3521 = vld [vmem:[#allocation6 + $0x144] sm:$0xf]
        %v3522 = vpack.c.bf16 %v3515, %v3514
        %v3529 = vunpack.c.l.b16 %v3516
        %v3530 = vunpack.c.l.b16 %v3517
        %v3531 = vunpack.c.l.b16 %v3518
        %v3532 = vunpack.c.l.b16 %v3519
        %v3533 = vunpack.c.l.b16 %v3520
        %v3534 = vunpack.c.l.b16 %v3521
        %v3535 = vpack.c.b16 %v3530, %v3529
        %v3536 = vpack.c.b16 %v3532, %v3531
        %v3537 = vpack.c.b16 %v3534, %v3533
        %vm3541 = vcmask 392192
        %v3543 = vsel %vm3541, %v3522, 0
        %3545 = vmatpush.bf16.msra.mxu0 0
        %3546 = vmatpush.bf16.msra.mxu0 0
        %3547 = vmatpush.bf16.msra.mxu0 0
        %3548 = vmatpush.bf16.msra.mxu0 0
        %3549 = vmatpush.bf16.msra.mxu0 0
        %3550 = vmatpush.bf16.msra.mxu0 %v3537
        %3551 = vmatpush.bf16.msra.mxu0 %v3536
        %3552 = vmatpush.bf16.msra.mxu0 %v3535
        %3553 = vmatmul.bf16.gmra.mxu0 %v3543
        %v3554 = vpop.f32.mrf.mxu0
        %v3555 = vadd.f32 0.0, %v3554
        %v3556 = vpop.f32.mrf.mxu0
        %v3557 = vadd.f32 0.0, %v3556
        %3558 = vdwg.mxu0
        %v3559 = vld [vmem:[#allocation8 + $0x110] sm:$0x1]
        %v3560 = vperm.slane %v3559, 0
        %v3561 = vadd.f32 %v3555, %v3560
        %v3562 = vadd.f32 %v3557, %v3560
        %v3563 = vmax.f32 %v3561, 0.0
        %v3564 = vmax.f32 %v3562, 0.0
        %v3565 = vld [vmem:[#allocation6 + $0x148] sm:$0xf]
        %v3566 = vld [vmem:[#allocation6 + $0x14c] sm:$0xf]
        %v3567 = vld [vmem:[#allocation6 + $0x150] sm:$0xf]
        %v3568 = vld [vmem:[#allocation6 + $0x154] sm:$0xf]
        %v3569 = vld [vmem:[#allocation6 + $0x158] sm:$0xf]
        %v3570 = vld [vmem:[#allocation6 + $0x15c] sm:$0xf]
        %v3571 = vld [vmem:[#allocation8 + $0x118] sm:$0x1]
        %v3572 = vld [vmem:[#allocation6 + $0x160] sm:$0xf]
        %v3573 = vld [vmem:[#allocation6 + $0x164] sm:$0xf]
        %v3574 = vld [vmem:[#allocation6 + $0x168] sm:$0xf]
        %v3575 = vld [vmem:[#allocation6 + $0x16c] sm:$0xf]
        %v3576 = vld [vmem:[#allocation6 + $0x170] sm:$0xf]
        %v3577 = vld [vmem:[#allocation6 + $0x174] sm:$0xf]
        %v3578 = vld [vmem:[#allocation6 + $0x178] sm:$0xf]
        %v3579 = vld [vmem:[#allocation6 + $0x17c] sm:$0xf]
        %v3580 = vld [vmem:[#allocation6 + $0x180] sm:$0xf]
        %v3581 = vld [vmem:[#allocation6 + $0x184] sm:$0xf]
        %v3582 = vld [vmem:[#allocation6 + $0x188] sm:$0xf]
        %v3583 = vld [vmem:[#allocation6 + $0x18c] sm:$0xf]
        %v3584 = vld [vmem:[#allocation6 + $0x190] sm:$0xf]
        %v3585 = vld [vmem:[#allocation6 + $0x194] sm:$0xf]
        %v3586 = vld [vmem:[#allocation6 + $0x198] sm:$0xf]
        %v3587 = vld [vmem:[#allocation6 + $0x19c] sm:$0xf]
        %v3588 = vld [vmem:[#allocation8 + $0x120] sm:$0x1]
        %v3589 = vpack.c.bf16 %v3564, %v3563
        %v3590 = vperm.slane %v3571, 0
        %v3597 = vunpack.c.l.b16 %v3565
        %v3598 = vunpack.c.l.b16 %v3566
        %v3599 = vunpack.c.l.b16 %v3567
        %v3600 = vunpack.c.l.b16 %v3568
        %v3601 = vunpack.c.l.b16 %v3569
        %v3602 = vunpack.c.l.b16 %v3570
        %v3603 = vpack.c.b16 %v3598, %v3597
        %v3604 = vpack.c.b16 %v3600, %v3599
        %v3605 = vpack.c.b16 %v3602, %v3601
        %v3610 = vsel %vm3541, %v3589, 0
        %3612 = vmatpush.bf16.msra.mxu0 0
        %3613 = vmatpush.bf16.msra.mxu0 0
        %3614 = vmatpush.bf16.msra.mxu0 0
        %3615 = vmatpush.bf16.msra.mxu0 0
        %3616 = vmatpush.bf16.msra.mxu0 0
        %3617 = vmatpush.bf16.msra.mxu0 %v3605
        %3618 = vmatpush.bf16.msra.mxu0 %v3604
        %3619 = vmatpush.bf16.msra.mxu0 %v3603
        %3620 = vmatmul.bf16.gmra.mxu0 %v3610
        %v3621 = vpop.f32.mrf.mxu0
        %v3622 = vadd.f32 %v3590, %v3621
        %v3623 = vpop.f32.mrf.mxu0
        %v3624 = vadd.f32 %v3590, %v3623
        %3625 = vdwg.mxu0
        %v3626 = vtanh.pop %v3622
        %v3627 = vtanh.pop %v3624
        %v3628 = vpack.c.bf16 %v3627, %v3626
        %v3629 = vperm.slane %v3588, 0
        %v3646 = vunpack.c.l.b16 %v3572
        %v3647 = vunpack.c.l.b16 %v3573
        %v3648 = vunpack.c.l.b16 %v3574
        %v3649 = vunpack.c.l.b16 %v3575
        %v3650 = vunpack.c.l.b16 %v3576
        %v3651 = vunpack.c.l.b16 %v3577
        %v3652 = vunpack.c.l.b16 %v3578
        %v3653 = vunpack.c.l.b16 %v3579
        %v3654 = vunpack.c.l.b16 %v3580
        %v3655 = vunpack.c.l.b16 %v3581
        %v3656 = vunpack.c.l.b16 %v3582
        %v3657 = vunpack.c.l.b16 %v3583
        %v3658 = vunpack.c.l.b16 %v3584
        %v3659 = vunpack.c.l.b16 %v3585
        %v3660 = vunpack.c.l.b16 %v3586
        %v3661 = vunpack.c.l.b16 %v3587
        %v3662 = vpack.c.b16 %v3647, %v3646
        %v3663 = vpack.c.b16 %v3649, %v3648
        %v3664 = vpack.c.b16 %v3651, %v3650
        %v3665 = vpack.c.b16 %v3653, %v3652
        %v3666 = vpack.c.b16 %v3655, %v3654
        %v3667 = vpack.c.b16 %v3657, %v3656
        %v3668 = vpack.c.b16 %v3659, %v3658
        %v3669 = vpack.c.b16 %v3661, %v3660
        %3678 = vmatpush.bf16.msra.mxu0 %v3669
        %3679 = vmatpush.bf16.msra.mxu0 %v3668
        %3680 = vmatpush.bf16.msra.mxu0 %v3667
        %3681 = vmatpush.bf16.msra.mxu0 %v3666
        %3682 = vmatpush.bf16.msra.mxu0 %v3665
        %3683 = vmatpush.bf16.msra.mxu0 %v3664
        %3684 = vmatpush.bf16.msra.mxu0 %v3663
        %3685 = vmatpush.bf16.msra.mxu0 %v3662
        %3686 = vmatmul.bf16.gmra.mxu0 %v3628
        %v3687 = vpop.f32.mrf.mxu0
        %v3688 = vadd.f32 %v3629, %v3687
        %v3689 = vpop.f32.mrf.mxu0
        %v3690 = vadd.f32 %v3629, %v3689
        %3691 = vdwg.mxu0
        %v3692 = vsel %vm3541, %v3688, -inf
        %v3693 = vsel %vm3541, %v3690, -inf
        %v3694 = vmax.f32 %v3692, %v3693
        %v3695 = vrot.slane %v3694, 4
        %v3696 = vmax.f32 %v3694, %v3695
        %v3697 = vrot.slane %v3696, 2
        %v3698 = vmax.f32 %v3696, %v3697
        %v3699 = vrot.slane %v3698, 1
        %v3700 = vmax.f32 %v3698, %v3699
        %v3701 = vsub.f32 %v3688, %v3700
        %v3702 = vsub.f32 %v3690, %v3700
        %v3703 = vmul.f32 %v3701, 1.442695
        %v3704 = vpow.pop %v3703
        %v3705 = vmul.f32 %v3702, 1.442695
        %v3706 = vpow.pop %v3705
        %v3707 = vsel %vm3541, %v3704, 0.0
        %v3708 = vsel %vm3541, %v3706, 0.0
        %v3709 = vadd.f32 %v3707, %v3708
        %v3710 = vrot.slane %v3709, 4
        %v3711 = vadd.f32 %v3709, %v3710
        %v3712 = vrot.slane %v3711, 2
        %v3713 = vadd.f32 %v3711, %v3712
        %v3714 = vrot.slane %v3713, 1
        %v3715 = vadd.f32 %v3713, %v3714
        %v3716 = vrcp.pop %v3715
        %v3717 = vmul.f32 %v3704, %v3716
        %v3718 = vmul.f32 %v3706, %v3716
        %v3719 = vmul.f32 %v3717, %v3563
        %v3720 = vmul.f32 %v3718, %v3564
        %v3721 = vsel %vm3541, %v3719, 0.0
        %v3722 = vsel %vm3541, %v3720, 0.0
        %v3723 = vadd.f32 %v3721, %v3722
        %v3724 = vrot.slane %v3723, 4
        %v3725 = vadd.f32 %v3723, %v3724
        %v3726 = vrot.slane %v3725, 2
        %v3727 = vadd.f32 %v3725, %v3726
        %v3728 = vrot.slane %v3727, 1
        %v3729 = vadd.f32 %v3727, %v3728
        %v3730 = vmul.f32 %v3719, %v3563
        %v3731 = vmul.f32 %v3720, %v3564
        %v3732 = vsel %vm3541, %v3730, 0.0
        %v3733 = vsel %vm3541, %v3731, 0.0
        %v3734 = vadd.f32 %v3732, %v3733
        %v3735 = vrot.slane %v3734, 4
        %v3736 = vadd.f32 %v3734, %v3735
        %v3737 = vrot.slane %v3736, 2
        %v3738 = vadd.f32 %v3736, %v3737
        %v3739 = vrot.slane %v3738, 1
        %v3740 = vadd.f32 %v3738, %v3739
        %v3741 = vmul.f32 %v3729, %v3729
        %v3742 = vsub.f32 %v3740, %v3741
        %v3743 = vmax.f32 %v3742, 1e-09
        %v3744 = vrsqrt.pop %v3743
        %v3745 = vmul.f32 %v3744, %v3743
        %v3746 = vmul.f32 %v3745, %v3744
        %v3747 = vmul.f32 0.5, %v3746
        %v3748 = vsub.f32 1.5, %v3747
        %v3749 = vmul.f32 %v3744, %v3748
        %v3750 = vmul.f32 %v3743, %v3749
        %vm3751 = vcmp.eq.f32.partialorder %v3743, inf
        %v3752 = vsel %vm3751, %v3743, %v3750
        %vm3753 = vcmp.eq.f32.partialorder %v3743, 0.0
        %v3754 = vand.u32 %v3743, 2147483648
        %v3755 = vsel %vm3753, %v3754, %v3752
        %3757 = vrot.lane.b32.xlu0 %v3755, 48
        %v3758 = vpop.permute.xlu0 %3757
        %v3760 = vsel %vm3541, %v3729, %v3758
        %v3761 = vld [vmem:[#allocation8 + $0x128] sm:$0x3]
        %v3762 = vmul.f32 %v3760, %v3761
        %v3764 = vrot.slane %v3761, 1
        %v3766 = vadd.f32 %v3762, %v3764
        %v3767 = vld [vmem:[#allocation6 + $0x1a0] sm:$0xf]
        %v3768 = vld [vmem:[#allocation6 + $0x1a4] sm:$0xf]
        %v3769 = vld [vmem:[#allocation6 + $0x1a8] sm:$0xf]
        %v3770 = vld [vmem:[#allocation6 + $0x1ac] sm:$0xf]
        %v3771 = vld [vmem:[#allocation6 + $0x1b0] sm:$0xf]
        %v3772 = vld [vmem:[#allocation6 + $0x1b4] sm:$0xf]
        %v3773 = vld [vmem:[#allocation6 + $0x1b8] sm:$0xf]
        %v3774 = vld [vmem:[#allocation6 + $0x1bc] sm:$0xf]
        %v3775 = vld [vmem:[#allocation6 + $0x1c0] sm:$0xf]
        %v3776 = vld [vmem:[#allocation6 + $0x1c4] sm:$0xf]
        %v3777 = vld [vmem:[#allocation6 + $0x1c8] sm:$0xf]
        %v3778 = vld [vmem:[#allocation6 + $0x1cc] sm:$0xf]
        %v3779 = vpack.c.bf16 %v3766, %v3766
        %v3780 = vld [vmem:[#allocation8 + $0x130] sm:$0x1]
        %v3793 = vunpack.c.l.b16 %v3767
        %v3794 = vunpack.c.l.b16 %v3768
        %v3795 = vunpack.c.l.b16 %v3769
        %v3796 = vunpack.c.l.b16 %v3770
        %v3797 = vunpack.c.l.b16 %v3771
        %v3798 = vunpack.c.l.b16 %v3772
        %v3799 = vunpack.c.l.b16 %v3773
        %v3800 = vunpack.c.l.b16 %v3774
        %v3801 = vunpack.c.l.b16 %v3775
        %v3802 = vunpack.c.l.b16 %v3776
        %v3803 = vunpack.c.l.b16 %v3777
        %v3804 = vunpack.c.l.b16 %v3778
        %v3805 = vpack.c.b16 %v3794, %v3793
        %v3806 = vpack.c.b16 %v3796, %v3795
        %v3807 = vpack.c.b16 %v3798, %v3797
        %v3808 = vpack.c.b16 %v3800, %v3799
        %v3809 = vpack.c.b16 %v3802, %v3801
        %v3810 = vpack.c.b16 %v3804, %v3803
        %vm3817 = vcmask 785408
        %v3819 = vsel %vm3817, %v3779, 0
        %3821 = vmatpush.bf16.msra.mxu0 0
        %3822 = vmatpush.bf16.msra.mxu0 0
        %3823 = vmatpush.bf16.msra.mxu0 %v3810
        %3824 = vmatpush.bf16.msra.mxu0 %v3809
        %3825 = vmatpush.bf16.msra.mxu0 %v3808
        %3826 = vmatpush.bf16.msra.mxu0 %v3807
        %3827 = vmatpush.bf16.msra.mxu0 %v3806
        %3828 = vmatpush.bf16.msra.mxu0 %v3805
        %3829 = vmatmul.bf16.gmra.mxu0 %v3819
        %v3830 = vpop.f32.mrf.mxu0
        %v3831 = vadd.f32 %v3780, %v3830
        %v3832 = vpop.f32.mrf.mxu0
        %3833 = vdwg.mxu0
        %v3834 = vld [vmem:[#allocation8 + $0x138] sm:$0x3]
        %v3835 = vmul.f32 %v3831, %v3834
        %v3837 = vrot.slane %v3834, 1
        %v3839 = vadd.f32 %v3835, %v3837
        %vm3840 = vcmask 57344
        %3841 = vst.msk [vmem:[%s222] sm:$0x1] %vm3840, %v3839
        %s3842 = sand.u32 %s97, 1
        %s3843 = scalar_lea.sflag [#allocation5], %s3842
        %s3844 = sand.u32 %s97, 1
        %s3845 = scalar_lea.vmem [#allocation9], %s3844
        // Predicated region
        $region45: #{tpu_custom_call.1} parent=31 // pred_check
          %p3846 = pneg %p107
        $region46: #{tpu_custom_call.1} parent=31 // pred_check_branch
          %3848 = sbr.rel (%p3846) target = $region48
        $region47: #{tpu_custom_call.1} parent=31 // pred_region
          %3850 = vsyncadd %s3843, 0
          %s3851 = scalar_lea.hbm %s3, %s21
          %s3853 = sshll.u32 %s3845, 4
          %s3854 = int_to_ptr.vmem [resolvable:$true] %s3853
          %s3855 = sshll.u32 %s3851, 4
          %s3856 = int_to_ptr.hbm [resolvable:$true] %s3855
          %3858 = dma.vmem_to_hbm [thread:$0]  %s3854, 16, %s3856, %s3843
        $region48: #{tpu_custom_call.1} parent=31 // pred_fallthru
          _
      $region32: #{tpu_custom_call.1} parent=5 // pred_fallthru
        _
      %p3859 = scmp.le.s32.totalorder 2, %s16
      // Predicated region
      $region49: #{tpu_custom_call.1} parent=5 // pred_check
        %p3860 = pneg %p3859
      $region50: #{tpu_custom_call.1} parent=5 // pred_check_branch
        %3862 = sbr.rel (%p3860) target = $region52
      $region51: #{tpu_custom_call.1} parent=5 // pred_region
        %s3863 = ssub.s32 %s16, 2
        // Predicated region
        $region53: #{tpu_custom_call.1} parent=51 // pred_check
          %p3864 = pneg %p113
        $region54: #{tpu_custom_call.1} parent=51 // pred_check_branch
          %3866 = sbr.rel (%p3864) target = $region56
        $region55: #{tpu_custom_call.1} parent=51 // pred_region
          %s3867 = sand.u32 %s98, 1
          %s3868 = scalar_lea.sflag [#allocation5], %s3867
          %s3869 = sand.u32 %s98, 1
          %s3870 = scalar_lea.vmem [#allocation9], %s3869
          %3872 = dma.done %s3868, 16
        $region56: #{tpu_custom_call.1} parent=51 // pred_fallthru
          _
      $region52: #{tpu_custom_call.1} parent=5 // pred_fallthru
        _
    $region6: #{tpu_custom_call.1} parent=1 // loop_footer
      %s20 = sadd.s32 1, %s16
    $region7: #{tpu_custom_call.1} parent=1 // loop_footer_branch
      %15 = sbr.rel target = $region3
    $region8: #{tpu_custom_call.1} parent=1 // loop_exit
      _
    %3873 = vsyncpa [#allocation4], 1
    %s3874 = scalar_lea.sflag [#allocation4], 1
    %3875 = vsyncpa %s3874, 1
    %3876 = vsyncpa [#allocation7], 1
    %3877 = vsyncpa [#allocation5], 1
    %s3878 = scalar_lea.sflag [#allocation5], 1
    %3879 = vsyncpa %s3878, 1

</llo_original>
